<compile_context>
chip_gen: v7x
topology: tpu7x:2x2x1
jax: 0.10.0
libtpu: 0.0.40
codegen_flags: <defaults>
</compile_context>

<pallas_src>
import jax
import jax.numpy as jnp
from jax.experimental import pallas as pl
from jax.experimental.pallas import tpu as pltpu

LANE = 128  # TPU vreg lane width


def _round_up(x, m):
    return ((x + m - 1) // m) * m


def _largest_divisor_tile(n, target, step):
    """Largest multiple-of-`step` divisor of n that is <= target (None if none)."""
    t = min(target, n)
    t -= t % step
    while t >= step:
        if n % t == 0:
            return t
        t -= step
    return None


def conv3x3_bnstats_kernel(xp_ref, w_ref, o_ref, sum_ref, ssq_ref, acc_ref):
    """3x3 'same' conv for one (batch, out-channel-tile) + BN partial sums.

    xp_ref : (1, H+2, W+2, Cp)  zero-padded input (channels zero-padded to Cp)
    w_ref  : (3, 3, Cp, TKp)    conv weight, HWIO, channels zero-padded
    o_ref  : (1, H, W, TKp)     conv output (lane-dense TKp)
    sum_ref: (1, 1, TKp)        per-batch sum over H*W   (for BN mean)
    ssq_ref: (1, 1, TKp)        per-batch sum of squares (for BN variance)
    acc_ref: (H*W, TKp) f32     VMEM accumulator scratch
    """
    H, W = o_ref.shape[1], o_ref.shape[2]
    Cp = xp_ref.shape[3]

    # 9-tap shifted-matmul accumulation; each tap is a full-lane-width matmul
    # accumulated into the VMEM scratch (bounded vreg pressure).  The first
    # tap initializes the accumulator (saves a zero-fill pass of H*W*TKp).
    # NOTE: conv bias is intentionally omitted - it cancels in train-mode BN.
    for ky in range(3):
        slab = xp_ref[0, ky:ky + H, :, :]                 # (H, W+2, Cp)
        for kx in range(3):
            patch = slab[:, kx:kx + W, :].reshape(H * W, Cp)
            tap = jnp.dot(patch, w_ref[ky, kx],
                          preferred_element_type=jnp.float32)
            if ky == 0 and kx == 0:
                acc_ref[...] = tap
            else:
                acc_ref[...] += tap

    acc = acc_ref[...]
    o_ref[0] = acc.reshape(H, W, o_ref.shape[3]).astype(o_ref.dtype)
    # Fused BN batch-statistics partials (avoids a second HBM read of conv_out).
    sum_ref[0] = jnp.sum(acc, axis=0, keepdims=True)
    ssq_ref[0] = jnp.sum(acc * acc, axis=0, keepdims=True)


def bn_relu_kernel(y_ref, scale_ref, shift_ref, o_ref):
    """Per-channel affine (folded BN) + ReLU on a lane-dense row tile.

    y_ref    : (TILE_R, Kp)
    scale_ref: (1, Kp)   gamma * rsqrt(var + eps)
    shift_ref: (1, Kp)   beta - mean * scale
    o_ref    : (TILE_R, Kp)   (aliased onto y's buffer)
    """
    out = y_ref[...] * scale_ref[...] + shift_ref[...]
    o_ref[...] = jnp.maximum(out, 0.0)


def conv_batch_norm(x_nchw, w_oihw, bias, gamma, beta, eps=1e-5):
    """Forward pass equivalent to the PyTorch ConvBatchNorm module (train mode)."""
    del bias  # conv bias cancels exactly in train-mode BatchNorm (see header).
    N, Cin, H, W = x_nchw.shape
    Cout = w_oihw.shape[0]
    Cp = _round_up(Cin, LANE)   # lane-dense input channels
    Kp = _round_up(Cout, LANE)  # lane-dense output channels
    f32 = jnp.float32

    # --- glue: NCHW -> NHWC, single pad op adds 1-px halo AND channel padding.
    x_nhwc = jnp.transpose(x_nchw, (0, 2, 3, 1)).astype(f32)
    xp = jnp.pad(x_nhwc, ((0, 0), (1, 1), (1, 1), (0, Cp - Cin)))

    # OIHW -> HWIO, zero-padded channels (padded taps contribute exact zeros).
    w_hwio = jnp.transpose(w_oihw, (2, 3, 1, 0)).astype(f32)
    w_pad = jnp.pad(w_hwio, ((0, 0), (0, 0), (0, Cp - Cin), (0, Kp - Cout)))

    # Output-channel tile: full Kp when small; split when Cout is large so the
    # weight / output / accumulator blocks stay VMEM-friendly.
    tkp = _largest_divisor_tile(Kp, 512, LANE) or LANE
    n_kt = Kp // tkp

    # --- kernel 1: 3x3 conv + fused BN partial sums, grid over (batch, Kp tile).
    # TODO(synk): for very large H*W*Cp (esp. v7x 64 MiB VMEM) add an H-row tile
    # grid axis with halo handling and a Cin-tile reduction axis; unnecessary at
    # these block sizes.
    conv_out, sum_part, ssq_part = pl.pallas_call(
        conv3x3_bnstats_kernel,
        out_shape=(
            jax.ShapeDtypeStruct((N, H, W, Kp), f32),
            jax.ShapeDtypeStruct((N, 1, Kp), f32),
            jax.ShapeDtypeStruct((N, 1, Kp), f32),
        ),
        grid=(N, n_kt),
        in_specs=[
            # input block ignores the channel-tile axis -> stays resident.
            pl.BlockSpec((1, H + 2, W + 2, Cp), lambda n, j: (n, 0, 0, 0)),
            pl.BlockSpec((3, 3, Cp, tkp), lambda n, j: (0, 0, 0, j)),
        ],
        out_specs=(
            pl.BlockSpec((1, H, W, tkp), lambda n, j: (n, 0, 0, j)),
            pl.BlockSpec((1, 1, tkp), lambda n, j: (n, 0, j)),
            pl.BlockSpec((1, 1, tkp), lambda n, j: (n, 0, j)),
        ),
        scratch_shapes=[pltpu.VMEM((H * W, tkp), f32)],
        compiler_params=pltpu.CompilerParams(
            dimension_semantics=("parallel", "parallel")),
    )(xp, w_pad)

    # --- BN statistics finalize (tiny: N x Kp partials) + fold into scale/shift.
    # Single-pass sum/sumsq is fine in f32 at these magnitudes/counts.
    count = N * H * W
    tot = jnp.sum(sum_part, axis=0).reshape(Kp)
    tot_sq = jnp.sum(ssq_part, axis=0).reshape(Kp)
    mean = tot / count
    var = jnp.maximum(tot_sq / count - mean * mean, 0.0)   # biased variance
    inv = jax.lax.rsqrt(var + eps)
    gamma_p = jnp.pad(gamma.astype(f32), (0, Kp - Cout))
    beta_p = jnp.pad(beta.astype(f32), (0, Kp - Cout))
    scale = (gamma_p * inv).reshape(1, Kp)
    shift = (beta_p - mean * gamma_p * inv).reshape(1, Kp)
    # TODO(synk): BatchNorm running_mean/running_var momentum updates are
    # training-side buffer state with no effect on the forward output; not
    # reproduced here.

    # --- kernel 2: normalize + ReLU, lane-dense row tiles, in place over conv_out.
    rows = N * H * W
    # Aim for ~1 MiB per block (mem-bound roofline sweet spot), capped at 1024 rows.
    row_target = max(8, min(1024, (1 << 20) // (Kp * 4)))
    tile_r = _largest_divisor_tile(rows, row_target, 8)
    if tile_r is None:
        tile_r = rows  # block equals full dim -> still legal; rows is small here.
    y2d = conv_out.reshape(rows, Kp)
    out2d = pl.pallas_call(
        bn_relu_kernel,
        out_shape=jax.ShapeDtypeStruct((rows, Kp), f32),
        grid=(rows // tile_r,),
        in_specs=[
            pl.BlockSpec((tile_r, Kp), lambda i: (i, 0)),
            pl.BlockSpec((1, Kp), lambda i: (0, 0)),
            pl.BlockSpec((1, Kp), lambda i: (0, 0)),
        ],
        out_specs=pl.BlockSpec((tile_r, Kp), lambda i: (i, 0)),
        input_output_aliases={0: 0},  # conv_out is dead after this; reuse its buffer
        compiler_params=pltpu.CompilerParams(
            dimension_semantics=("parallel",)),
    )(y2d, scale, shift)

    out = out2d.reshape(N, H, W, Kp)[..., :Cout]   # drop channel padding
    return jnp.transpose(out, (0, 3, 1, 2))        # back to NCHW


def reference(x_nchw, w_oihw, bias, gamma, beta, eps=1e-5):
    """Pure-JAX reference (mirrors PyTorch Conv2d + train-mode BatchNorm2d + ReLU)."""
    conv = jax.lax.conv_general_dilated(
        x_nchw.astype(jnp.float32), w_oihw.astype(jnp.float32),
        window_strides=(1, 1), padding=((1, 1), (1, 1)),
        dimension_numbers=("NCHW", "OIHW", "NCHW"))
    conv = conv + bias.reshape(1, -1, 1, 1)
    mean = jnp.mean(conv, axis=(0, 2, 3), keepdims=True)
    var = jnp.mean((conv - mean) ** 2, axis=(0, 2, 3), keepdims=True)
    yn = (conv - mean) * jax.lax.rsqrt(var + eps)
    out = yn * gamma.reshape(1, -1, 1, 1) + beta.reshape(1, -1, 1, 1)
    return jnp.maximum(out, 0.0)


if __name__ == "__main__":
    # Small deterministic example: N=2, in_channels=4, out_channels=8, 16x16.
    N, Cin, Cout, H, W = 2, 4, 8, 16, 16
    key = jax.random.PRNGKey(0)
    kx, kw, kb, kg, kbeta = jax.random.split(key, 5)

    x = jax.random.normal(kx, (N, Cin, H, W), dtype=jnp.float32)
    w = 0.1 * jax.random.normal(kw, (Cout, Cin, 3, 3), dtype=jnp.float32)
    b = 0.1 * jax.random.normal(kb, (Cout,), dtype=jnp.float32)
    gamma = 0.5 + jax.random.uniform(kg, (Cout,), dtype=jnp.float32)
    beta = 0.1 * jax.random.normal(kbeta, (Cout,), dtype=jnp.float32)

    conv_bn = jax.jit(conv_batch_norm)
    out = jax.block_until_ready(conv_bn(x, w, b, gamma, beta))

    ref = jax.block_until_ready(reference(x, w, b, gamma, beta))
    assert out.shape == (N, Cout, H, W)
    assert jnp.allclose(out, ref, atol=1e-4, rtol=1e-4), (
        f"max abs err {jnp.max(jnp.abs(out - ref))}")

    print("KERNEL_OK")
</pallas_src>

<mosaic_0001>
module attributes {stable_mosaic.version = 11 : i64} {
  func.func @conv3x3_bnstats_kernel(%arg0: i32, %arg1: i32, %arg2: memref<1x18x18x128xf32, #tpu.memory_space<vmem>>, %arg3: memref<3x3x128x128xf32, #tpu.memory_space<vmem>>, %arg4: memref<1x16x16x128xf32, #tpu.memory_space<vmem>>, %arg5: memref<1x1x128xf32, #tpu.memory_space<vmem>>, %arg6: memref<1x1x128xf32, #tpu.memory_space<vmem>>, %arg7: memref<256x128xf32, #tpu.memory_space<vmem>>) attributes {dimension_semantics = [#tpu.dimension_semantics<parallel>, #tpu.dimension_semantics<parallel>], iteration_bounds = array<i64: 2, 1>, scalar_prefetch = 0 : i64, scratch_operands = 1 : i64, tpu.core_type = #tpu.core_type<tc>, window_params = [{transform_indices = @transform_0, window_bounds = array<i64: 1, 18, 18, 128>}, {transform_indices = @transform_1, window_bounds = array<i64: 3, 3, 128, 128>}, {transform_indices = @transform_2, window_bounds = array<i64: 1, 16, 16, 128>}, {transform_indices = @transform_3, window_bounds = array<i64: 1, 1, 128>}, {transform_indices = @transform_4, window_bounds = array<i64: 1, 1, 128>}]} {
    %c0 = arith.constant 0 : index
    %c0_0 = arith.constant 0 : index
    %c0_1 = arith.constant 0 : index
    %c0_2 = arith.constant 0 : index
    %0 = vector.load %arg2[%c0, %c0_0, %c0_1, %c0_2] : memref<1x18x18x128xf32, #tpu.memory_space<vmem>>, vector<1x16x18x128xf32>
    %1 = vector.shape_cast %0 : vector<1x16x18x128xf32> to vector<16x18x128xf32>
    %2 = vector.extract_strided_slice %1 {offsets = [0, 0, 0], sizes = [16, 16, 128], strides = [1, 1, 1]} : vector<16x18x128xf32> to vector<16x16x128xf32>
    %3 = vector.shape_cast %2 : vector<16x16x128xf32> to vector<256x128xf32>
    %c0_3 = arith.constant 0 : index
    %c0_4 = arith.constant 0 : index
    %c0_5 = arith.constant 0 : index
    %c0_6 = arith.constant 0 : index
    %4 = vector.load %arg3[%c0_3, %c0_4, %c0_5, %c0_6] : memref<3x3x128x128xf32, #tpu.memory_space<vmem>>, vector<1x1x128x128xf32>
    %5 = vector.shape_cast %4 : vector<1x1x128x128xf32> to vector<128x128xf32>
    %cst = arith.constant dense<0.000000e+00> : vector<256x128xf32>
    %6 = tpu.matmul %3, %5, %cst {dimension_numbers = #tpu.dot_dimension_numbers<[1], [0], [0], [1], [0, 0, 1, 1], [], []>} : vector<256x128xf32>, vector<128x128xf32>, vector<256x128xf32> -> vector<256x128xf32>
    %c0_7 = arith.constant 0 : index
    %c0_8 = arith.constant 0 : index
    %7 = vector.load %arg7[%c0_7, %c0_8] : memref<256x128xf32, #tpu.memory_space<vmem>>, vector<256x128xf32>
    tpu.vector_store %arg7[%c0_7, %c0_8], %6 {strides = array<i32>} : memref<256x128xf32, #tpu.memory_space<vmem>>, vector<256x128xf32>,
    %8 = vector.extract_strided_slice %1 {offsets = [0, 1, 0], sizes = [16, 16, 128], strides = [1, 1, 1]} : vector<16x18x128xf32> to vector<16x16x128xf32>
    %9 = vector.shape_cast %8 : vector<16x16x128xf32> to vector<256x128xf32>
    %c0_9 = arith.constant 0 : index
    %c1 = arith.constant 1 : index
    %c0_10 = arith.constant 0 : index
    %c0_11 = arith.constant 0 : index
    %10 = vector.load %arg3[%c0_9, %c1, %c0_10, %c0_11] : memref<3x3x128x128xf32, #tpu.memory_space<vmem>>, vector<1x1x128x128xf32>
    %11 = vector.shape_cast %10 : vector<1x1x128x128xf32> to vector<128x128xf32>
    %cst_12 = arith.constant dense<0.000000e+00> : vector<256x128xf32>
    %12 = tpu.matmul %9, %11, %cst_12 {dimension_numbers = #tpu.dot_dimension_numbers<[1], [0], [0], [1], [0, 0, 1, 1], [], []>} : vector<256x128xf32>, vector<128x128xf32>, vector<256x128xf32> -> vector<256x128xf32>
    %c0_13 = arith.constant 0 : index
    %c0_14 = arith.constant 0 : index
    %13 = vector.load %arg7[%c0_13, %c0_14] : memref<256x128xf32, #tpu.memory_space<vmem>>, vector<256x128xf32>
    %14 = arith.addf %13, %12 : vector<256x128xf32>
    %c0_15 = arith.constant 0 : index
    %c0_16 = arith.constant 0 : index
    %15 = vector.load %arg7[%c0_15, %c0_16] : memref<256x128xf32, #tpu.memory_space<vmem>>, vector<256x128xf32>
    tpu.vector_store %arg7[%c0_15, %c0_16], %14 {strides = array<i32>} : memref<256x128xf32, #tpu.memory_space<vmem>>, vector<256x128xf32>,
    %16 = vector.extract_strided_slice %1 {offsets = [0, 2, 0], sizes = [16, 16, 128], strides = [1, 1, 1]} : vector<16x18x128xf32> to vector<16x16x128xf32>
    %17 = vector.shape_cast %16 : vector<16x16x128xf32> to vector<256x128xf32>
    %c0_17 = arith.constant 0 : index
    %c2 = arith.constant 2 : index
    %c0_18 = arith.constant 0 : index
    %c0_19 = arith.constant 0 : index
    %18 = vector.load %arg3[%c0_17, %c2, %c0_18, %c0_19] : memref<3x3x128x128xf32, #tpu.memory_space<vmem>>, vector<1x1x128x128xf32>
    %19 = vector.shape_cast %18 : vector<1x1x128x128xf32> to vector<128x128xf32>
    %cst_20 = arith.constant dense<0.000000e+00> : vector<256x128xf32>
    %20 = tpu.matmul %17, %19, %cst_20 {dimension_numbers = #tpu.dot_dimension_numbers<[1], [0], [0], [1], [0, 0, 1, 1], [], []>} : vector<256x128xf32>, vector<128x128xf32>, vector<256x128xf32> -> vector<256x128xf32>
    %c0_21 = arith.constant 0 : index
    %c0_22 = arith.constant 0 : index
    %21 = vector.load %arg7[%c0_21, %c0_22] : memref<256x128xf32, #tpu.memory_space<vmem>>, vector<256x128xf32>
    %22 = arith.addf %21, %20 : vector<256x128xf32>
    %c0_23 = arith.constant 0 : index
    %c0_24 = arith.constant 0 : index
    %23 = vector.load %arg7[%c0_23, %c0_24] : memref<256x128xf32, #tpu.memory_space<vmem>>, vector<256x128xf32>
    tpu.vector_store %arg7[%c0_23, %c0_24], %22 {strides = array<i32>} : memref<256x128xf32, #tpu.memory_space<vmem>>, vector<256x128xf32>,
    %c0_25 = arith.constant 0 : index
    %c1_26 = arith.constant 1 : index
    %c0_27 = arith.constant 0 : index
    %c0_28 = arith.constant 0 : index
    %24 = vector.load %arg2[%c0_25, %c1_26, %c0_27, %c0_28] : memref<1x18x18x128xf32, #tpu.memory_space<vmem>>, vector<1x16x18x128xf32>
    %25 = vector.shape_cast %24 : vector<1x16x18x128xf32> to vector<16x18x128xf32>
    %26 = vector.extract_strided_slice %25 {offsets = [0, 0, 0], sizes = [16, 16, 128], strides = [1, 1, 1]} : vector<16x18x128xf32> to vector<16x16x128xf32>
    %27 = vector.shape_cast %26 : vector<16x16x128xf32> to vector<256x128xf32>
    %c1_29 = arith.constant 1 : index
    %c0_30 = arith.constant 0 : index
    %c0_31 = arith.constant 0 : index
    %c0_32 = arith.constant 0 : index
    %28 = vector.load %arg3[%c1_29, %c0_30, %c0_31, %c0_32] : memref<3x3x128x128xf32, #tpu.memory_space<vmem>>, vector<1x1x128x128xf32>
    %29 = vector.shape_cast %28 : vector<1x1x128x128xf32> to vector<128x128xf32>
    %cst_33 = arith.constant dense<0.000000e+00> : vector<256x128xf32>
    %30 = tpu.matmul %27, %29, %cst_33 {dimension_numbers = #tpu.dot_dimension_numbers<[1], [0], [0], [1], [0, 0, 1, 1], [], []>} : vector<256x128xf32>, vector<128x128xf32>, vector<256x128xf32> -> vector<256x128xf32>
    %c0_34 = arith.constant 0 : index
    %c0_35 = arith.constant 0 : index
    %31 = vector.load %arg7[%c0_34, %c0_35] : memref<256x128xf32, #tpu.memory_space<vmem>>, vector<256x128xf32>
    %32 = arith.addf %31, %30 : vector<256x128xf32>
    %c0_36 = arith.constant 0 : index
    %c0_37 = arith.constant 0 : index
    %33 = vector.load %arg7[%c0_36, %c0_37] : memref<256x128xf32, #tpu.memory_space<vmem>>, vector<256x128xf32>
    tpu.vector_store %arg7[%c0_36, %c0_37], %32 {strides = array<i32>} : memref<256x128xf32, #tpu.memory_space<vmem>>, vector<256x128xf32>,
    %34 = vector.extract_strided_slice %25 {offsets = [0, 1, 0], sizes = [16, 16, 128], strides = [1, 1, 1]} : vector<16x18x128xf32> to vector<16x16x128xf32>
    %35 = vector.shape_cast %34 : vector<16x16x128xf32> to vector<256x128xf32>
    %c1_38 = arith.constant 1 : index
    %c1_39 = arith.constant 1 : index
    %c0_40 = arith.constant 0 : index
    %c0_41 = arith.constant 0 : index
    %36 = vector.load %arg3[%c1_38, %c1_39, %c0_40, %c0_41] : memref<3x3x128x128xf32, #tpu.memory_space<vmem>>, vector<1x1x128x128xf32>
    %37 = vector.shape_cast %36 : vector<1x1x128x128xf32> to vector<128x128xf32>
    %cst_42 = arith.constant dense<0.000000e+00> : vector<256x128xf32>
    %38 = tpu.matmul %35, %37, %cst_42 {dimension_numbers = #tpu.dot_dimension_numbers<[1], [0], [0], [1], [0, 0, 1, 1], [], []>} : vector<256x128xf32>, vector<128x128xf32>, vector<256x128xf32> -> vector<256x128xf32>
    %c0_43 = arith.constant 0 : index
    %c0_44 = arith.constant 0 : index
    %39 = vector.load %arg7[%c0_43, %c0_44] : memref<256x128xf32, #tpu.memory_space<vmem>>, vector<256x128xf32>
    %40 = arith.addf %39, %38 : vector<256x128xf32>
    %c0_45 = arith.constant 0 : index
    %c0_46 = arith.constant 0 : index
    %41 = vector.load %arg7[%c0_45, %c0_46] : memref<256x128xf32, #tpu.memory_space<vmem>>, vector<256x128xf32>
    tpu.vector_store %arg7[%c0_45, %c0_46], %40 {strides = array<i32>} : memref<256x128xf32, #tpu.memory_space<vmem>>, vector<256x128xf32>,
    %42 = vector.extract_strided_slice %25 {offsets = [0, 2, 0], sizes = [16, 16, 128], strides = [1, 1, 1]} : vector<16x18x128xf32> to vector<16x16x128xf32>
    %43 = vector.shape_cast %42 : vector<16x16x128xf32> to vector<256x128xf32>
    %c1_47 = arith.constant 1 : index
    %c2_48 = arith.constant 2 : index
    %c0_49 = arith.constant 0 : index
    %c0_50 = arith.constant 0 : index
    %44 = vector.load %arg3[%c1_47, %c2_48, %c0_49, %c0_50] : memref<3x3x128x128xf32, #tpu.memory_space<vmem>>, vector<1x1x128x128xf32>
    %45 = vector.shape_cast %44 : vector<1x1x128x128xf32> to vector<128x128xf32>
    %cst_51 = arith.constant dense<0.000000e+00> : vector<256x128xf32>
    %46 = tpu.matmul %43, %45, %cst_51 {dimension_numbers = #tpu.dot_dimension_numbers<[1], [0], [0], [1], [0, 0, 1, 1], [], []>} : vector<256x128xf32>, vector<128x128xf32>, vector<256x128xf32> -> vector<256x128xf32>
    %c0_52 = arith.constant 0 : index
    %c0_53 = arith.constant 0 : index
    %47 = vector.load %arg7[%c0_52, %c0_53] : memref<256x128xf32, #tpu.memory_space<vmem>>, vector<256x128xf32>
    %48 = arith.addf %47, %46 : vector<256x128xf32>
    %c0_54 = arith.constant 0 : index
    %c0_55 = arith.constant 0 : index
    %49 = vector.load %arg7[%c0_54, %c0_55] : memref<256x128xf32, #tpu.memory_space<vmem>>, vector<256x128xf32>
    tpu.vector_store %arg7[%c0_54, %c0_55], %48 {strides = array<i32>} : memref<256x128xf32, #tpu.memory_space<vmem>>, vector<256x128xf32>,
    %c0_56 = arith.constant 0 : index
    %c2_57 = arith.constant 2 : index
    %c0_58 = arith.constant 0 : index
    %c0_59 = arith.constant 0 : index
    %50 = vector.load %arg2[%c0_56, %c2_57, %c0_58, %c0_59] : memref<1x18x18x128xf32, #tpu.memory_space<vmem>>, vector<1x16x18x128xf32>
    %51 = vector.shape_cast %50 : vector<1x16x18x128xf32> to vector<16x18x128xf32>
    %52 = vector.extract_strided_slice %51 {offsets = [0, 0, 0], sizes = [16, 16, 128], strides = [1, 1, 1]} : vector<16x18x128xf32> to vector<16x16x128xf32>
    %53 = vector.shape_cast %52 : vector<16x16x128xf32> to vector<256x128xf32>
    %c2_60 = arith.constant 2 : index
    %c0_61 = arith.constant 0 : index
    %c0_62 = arith.constant 0 : index
    %c0_63 = arith.constant 0 : index
    %54 = vector.load %arg3[%c2_60, %c0_61, %c0_62, %c0_63] : memref<3x3x128x128xf32, #tpu.memory_space<vmem>>, vector<1x1x128x128xf32>
    %55 = vector.shape_cast %54 : vector<1x1x128x128xf32> to vector<128x128xf32>
    %cst_64 = arith.constant dense<0.000000e+00> : vector<256x128xf32>
    %56 = tpu.matmul %53, %55, %cst_64 {dimension_numbers = #tpu.dot_dimension_numbers<[1], [0], [0], [1], [0, 0, 1, 1], [], []>} : vector<256x128xf32>, vector<128x128xf32>, vector<256x128xf32> -> vector<256x128xf32>
    %c0_65 = arith.constant 0 : index
    %c0_66 = arith.constant 0 : index
    %57 = vector.load %arg7[%c0_65, %c0_66] : memref<256x128xf32, #tpu.memory_space<vmem>>, vector<256x128xf32>
    %58 = arith.addf %57, %56 : vector<256x128xf32>
    %c0_67 = arith.constant 0 : index
    %c0_68 = arith.constant 0 : index
    %59 = vector.load %arg7[%c0_67, %c0_68] : memref<256x128xf32, #tpu.memory_space<vmem>>, vector<256x128xf32>
    tpu.vector_store %arg7[%c0_67, %c0_68], %58 {strides = array<i32>} : memref<256x128xf32, #tpu.memory_space<vmem>>, vector<256x128xf32>,
    %60 = vector.extract_strided_slice %51 {offsets = [0, 1, 0], sizes = [16, 16, 128], strides = [1, 1, 1]} : vector<16x18x128xf32> to vector<16x16x128xf32>
    %61 = vector.shape_cast %60 : vector<16x16x128xf32> to vector<256x128xf32>
    %c2_69 = arith.constant 2 : index
    %c1_70 = arith.constant 1 : index
    %c0_71 = arith.constant 0 : index
    %c0_72 = arith.constant 0 : index
    %62 = vector.load %arg3[%c2_69, %c1_70, %c0_71, %c0_72] : memref<3x3x128x128xf32, #tpu.memory_space<vmem>>, vector<1x1x128x128xf32>
    %63 = vector.shape_cast %62 : vector<1x1x128x128xf32> to vector<128x128xf32>
    %cst_73 = arith.constant dense<0.000000e+00> : vector<256x128xf32>
    %64 = tpu.matmul %61, %63, %cst_73 {dimension_numbers = #tpu.dot_dimension_numbers<[1], [0], [0], [1], [0, 0, 1, 1], [], []>} : vector<256x128xf32>, vector<128x128xf32>, vector<256x128xf32> -> vector<256x128xf32>
    %c0_74 = arith.constant 0 : index
    %c0_75 = arith.constant 0 : index
    %65 = vector.load %arg7[%c0_74, %c0_75] : memref<256x128xf32, #tpu.memory_space<vmem>>, vector<256x128xf32>
    %66 = arith.addf %65, %64 : vector<256x128xf32>
    %c0_76 = arith.constant 0 : index
    %c0_77 = arith.constant 0 : index
    %67 = vector.load %arg7[%c0_76, %c0_77] : memref<256x128xf32, #tpu.memory_space<vmem>>, vector<256x128xf32>
    tpu.vector_store %arg7[%c0_76, %c0_77], %66 {strides = array<i32>} : memref<256x128xf32, #tpu.memory_space<vmem>>, vector<256x128xf32>,
    %68 = vector.extract_strided_slice %51 {offsets = [0, 2, 0], sizes = [16, 16, 128], strides = [1, 1, 1]} : vector<16x18x128xf32> to vector<16x16x128xf32>
    %69 = vector.shape_cast %68 : vector<16x16x128xf32> to vector<256x128xf32>
    %c2_78 = arith.constant 2 : index
    %c2_79 = arith.constant 2 : index
    %c0_80 = arith.constant 0 : index
    %c0_81 = arith.constant 0 : index
    %70 = vector.load %arg3[%c2_78, %c2_79, %c0_80, %c0_81] : memref<3x3x128x128xf32, #tpu.memory_space<vmem>>, vector<1x1x128x128xf32>
    %71 = vector.shape_cast %70 : vector<1x1x128x128xf32> to vector<128x128xf32>
    %cst_82 = arith.constant dense<0.000000e+00> : vector<256x128xf32>
    %72 = tpu.matmul %69, %71, %cst_82 {dimension_numbers = #tpu.dot_dimension_numbers<[1], [0], [0], [1], [0, 0, 1, 1], [], []>} : vector<256x128xf32>, vector<128x128xf32>, vector<256x128xf32> -> vector<256x128xf32>
    %c0_83 = arith.constant 0 : index
    %c0_84 = arith.constant 0 : index
    %73 = vector.load %arg7[%c0_83, %c0_84] : memref<256x128xf32, #tpu.memory_space<vmem>>, vector<256x128xf32>
    %74 = arith.addf %73, %72 : vector<256x128xf32>
    %c0_85 = arith.constant 0 : index
    %c0_86 = arith.constant 0 : index
    %75 = vector.load %arg7[%c0_85, %c0_86] : memref<256x128xf32, #tpu.memory_space<vmem>>, vector<256x128xf32>
    tpu.vector_store %arg7[%c0_85, %c0_86], %74 {strides = array<i32>} : memref<256x128xf32, #tpu.memory_space<vmem>>, vector<256x128xf32>,
    %c0_87 = arith.constant 0 : index
    %c0_88 = arith.constant 0 : index
    %76 = vector.load %arg7[%c0_87, %c0_88] : memref<256x128xf32, #tpu.memory_space<vmem>>, vector<256x128xf32>
    %77 = vector.shape_cast %76 : vector<256x128xf32> to vector<16x16x128xf32>
    %c0_89 = arith.constant 0 : index
    %c0_90 = arith.constant 0 : index
    %c0_91 = arith.constant 0 : index
    %c0_92 = arith.constant 0 : index
    %78 = vector.load %arg4[%c0_89, %c0_90, %c0_91, %c0_92] : memref<1x16x16x128xf32, #tpu.memory_space<vmem>>, vector<1x16x16x128xf32>
    %79 = vector.shape_cast %78 : vector<1x16x16x128xf32> to vector<16x16x128xf32>
    %80 = vector.shape_cast %77 : vector<16x16x128xf32> to vector<1x16x16x128xf32>
    tpu.vector_store %arg4[%c0_89, %c0_90, %c0_91, %c0_92], %80 {strides = array<i32>} : memref<1x16x16x128xf32, #tpu.memory_space<vmem>>, vector<1x16x16x128xf32>,
    %cst_93 = arith.constant dense<0.000000e+00> : vector<128xf32>
    %81 = vector.multi_reduction <add>, %76, %cst_93 [0] : vector<256x128xf32> to vector<128xf32>
    %82 = vector.shape_cast %81 : vector<128xf32> to vector<1x128xf32>
    %c0_94 = arith.constant 0 : index
    %c0_95 = arith.constant 0 : index
    %c0_96 = arith.constant 0 : index
    %83 = vector.load %arg5[%c0_94, %c0_95, %c0_96] : memref<1x1x128xf32, #tpu.memory_space<vmem>>, vector<1x1x128xf32>
    %84 = vector.shape_cast %83 : vector<1x1x128xf32> to vector<1x128xf32>
    %85 = vector.shape_cast %82 : vector<1x128xf32> to vector<1x1x128xf32>
    tpu.vector_store %arg5[%c0_94, %c0_95, %c0_96], %85 {strides = array<i32>} : memref<1x1x128xf32, #tpu.memory_space<vmem>>, vector<1x1x128xf32>,
    %86 = arith.mulf %76, %76 : vector<256x128xf32>
    %cst_97 = arith.constant dense<0.000000e+00> : vector<128xf32>
    %87 = vector.multi_reduction <add>, %86, %cst_97 [0] : vector<256x128xf32> to vector<128xf32>
    %88 = vector.shape_cast %87 : vector<128xf32> to vector<1x128xf32>
    %c0_98 = arith.constant 0 : index
    %c0_99 = arith.constant 0 : index
    %c0_100 = arith.constant 0 : index
    %89 = vector.load %arg6[%c0_98, %c0_99, %c0_100] : memref<1x1x128xf32, #tpu.memory_space<vmem>>, vector<1x1x128xf32>
    %90 = vector.shape_cast %89 : vector<1x1x128xf32> to vector<1x128xf32>
    %91 = vector.shape_cast %88 : vector<1x128xf32> to vector<1x1x128xf32>
    tpu.vector_store %arg6[%c0_98, %c0_99, %c0_100], %91 {strides = array<i32>} : memref<1x1x128xf32, #tpu.memory_space<vmem>>, vector<1x1x128xf32>,
    return
  }
  func.func @transform_0(%arg0: i32, %arg1: i32) -> (i32, i32, i32, i32) {
    %c0_i32 = arith.constant 0 : i32
    %c0_i32_0 = arith.constant 0 : i32
    %c0_i32_1 = arith.constant 0 : i32
    %c0_i32_2 = arith.constant 0 : i32
    return %arg0, %c0_i32, %c0_i32_0, %c0_i32_1 : i32, i32, i32, i32
  }
  func.func @transform_1(%arg0: i32, %arg1: i32) -> (i32, i32, i32, i32) {
    %c0_i32 = arith.constant 0 : i32
    %c0_i32_0 = arith.constant 0 : i32
    %c0_i32_1 = arith.constant 0 : i32
    %c0_i32_2 = arith.constant 0 : i32
    return %c0_i32, %c0_i32_0, %c0_i32_1, %arg1 : i32, i32, i32, i32
  }
  func.func @transform_2(%arg0: i32, %arg1: i32) -> (i32, i32, i32, i32) {
    %c0_i32 = arith.constant 0 : i32
    %c0_i32_0 = arith.constant 0 : i32
    %c0_i32_1 = arith.constant 0 : i32
    return %arg0, %c0_i32, %c0_i32_0, %arg1 : i32, i32, i32, i32
  }
  func.func @transform_3(%arg0: i32, %arg1: i32) -> (i32, i32, i32) {
    %c0_i32 = arith.constant 0 : i32
    %c0_i32_0 = arith.constant 0 : i32
    return %arg0, %c0_i32, %arg1 : i32, i32, i32
  }
  func.func @transform_4(%arg0: i32, %arg1: i32) -> (i32, i32, i32) {
    %c0_i32 = arith.constant 0 : i32
    %c0_i32_0 = arith.constant 0 : i32
    return %arg0, %c0_i32, %arg1 : i32, i32, i32
  }
}

module attributes {stable_mosaic.version = 11 : i64} {
  func.func @bn_relu_kernel(%arg0: i32, %arg1: memref<512x128xf32, #tpu.memory_space<vmem>>, %arg2: memref<1x128xf32, #tpu.memory_space<vmem>>, %arg3: memref<1x128xf32, #tpu.memory_space<vmem>>, %arg4: memref<512x128xf32, #tpu.memory_space<vmem>>) attributes {dimension_semantics = [#tpu.dimension_semantics<parallel>], iteration_bounds = array<i64: 1>, scalar_prefetch = 0 : i64, scratch_operands = 0 : i64, tpu.core_type = #tpu.core_type<tc>, window_params = [{transform_indices = @transform_0, window_bounds = array<i64: 512, 128>}, {pipeline_mode = #tpu.pipeline_mode<synchronous>, transform_indices = @transform_1, window_bounds = array<i64: 1, 128>}, {pipeline_mode = #tpu.pipeline_mode<synchronous>, transform_indices = @transform_2, window_bounds = array<i64: 1, 128>}, {transform_indices = @transform_3, window_bounds = array<i64: 512, 128>}]} {
    %c0 = arith.constant 0 : index
    %c0_0 = arith.constant 0 : index
    %0 = vector.load %arg1[%c0, %c0_0] : memref<512x128xf32, #tpu.memory_space<vmem>>, vector<512x128xf32>
    %c0_1 = arith.constant 0 : index
    %c0_2 = arith.constant 0 : index
    %1 = vector.load %arg2[%c0_1, %c0_2] : memref<1x128xf32, #tpu.memory_space<vmem>>, vector<1x128xf32>
    %2 = vector.broadcast %1 : vector<1x128xf32> to vector<512x128xf32>
    %3 = arith.mulf %0, %2 : vector<512x128xf32>
    %c0_3 = arith.constant 0 : index
    %c0_4 = arith.constant 0 : index
    %4 = vector.load %arg3[%c0_3, %c0_4] : memref<1x128xf32, #tpu.memory_space<vmem>>, vector<1x128xf32>
    %5 = vector.broadcast %4 : vector<1x128xf32> to vector<512x128xf32>
    %6 = arith.addf %3, %5 : vector<512x128xf32>
    %cst = arith.constant 0.000000e+00 : f32
    %7 = vector.broadcast %cst : f32 to vector<512x128xf32>
    %8 = arith.maximumf %6, %7 : vector<512x128xf32>
    %c0_5 = arith.constant 0 : index
    %c0_6 = arith.constant 0 : index
    %9 = vector.load %arg4[%c0_5, %c0_6] : memref<512x128xf32, #tpu.memory_space<vmem>>, vector<512x128xf32>
    tpu.vector_store %arg4[%c0_5, %c0_6], %8 {strides = array<i32>} : memref<512x128xf32, #tpu.memory_space<vmem>>, vector<512x128xf32>,
    return
  }
  func.func @transform_0(%arg0: i32) -> (i32, i32) {
    %c0_i32 = arith.constant 0 : i32
    %c0_i32_0 = arith.constant 0 : i32
    return %arg0, %c0_i32 : i32, i32
  }
  func.func @transform_1(%arg0: i32) -> (i32, i32) {
    %c0_i32 = arith.constant 0 : i32
    %c0_i32_0 = arith.constant 0 : i32
    %c0_i32_1 = arith.constant 0 : i32
    return %c0_i32, %c0_i32_0 : i32, i32
  }
  func.func @transform_2(%arg0: i32) -> (i32, i32) {
    %c0_i32 = arith.constant 0 : i32
    %c0_i32_0 = arith.constant 0 : i32
    %c0_i32_1 = arith.constant 0 : i32
    return %c0_i32, %c0_i32_0 : i32, i32
  }
  func.func @transform_3(%arg0: i32) -> (i32, i32) {
    %c0_i32 = arith.constant 0 : i32
    %c0_i32_0 = arith.constant 0 : i32
    return %arg0, %c0_i32 : i32, i32
  }
}

</mosaic_0001>

<llo_original>
// kernel: conv_batch_norm.3
$region0: #{conv_batch_norm.3}
  #allocation0 [shape = 'u32[]', space=smem, size = 0x4, offset = 0x4, fixed_abs, tag = 'smem constant byte address 0x4 - core index']
  #allocation1 [shape = 'u32[144,128]{1,0:T(1,128)}', space=vmem, size = 0x12000, scoped, tag = 'internal scratch']
  %s0 = inlined_call_operand.vmem [shape: f32[512,128], index: 0, kind: input, shape index: {}, may-alias: {0,3}]
  %s1 = inlined_call_operand.vmem [shape: f32[1,128], index: 1, kind: input, shape index: {}]
  %s2 = inlined_call_operand.vmem [shape: f32[1,128], index: 2, kind: input, shape index: {}]
  %s3 = inlined_call_operand.vmem [shape: f32[512,128], index: 3, kind: output, shape index: {}, may-alias: {0,3}]
  %s4 = sld [smem:[#allocation0]]
  $region22: #{conv_batch_norm.3} parent=0
    _
  %s6 = ssub.s32 1, %s4
  %s7 = scalar_select 0, %s6, %s4
  // Predicated region
  $region2: #{conv_batch_norm.3} parent=0 // pred_check
    _
  $region3: #{conv_batch_norm.3} parent=0 // pred_check_branch
    %9 = sbr.rel (0) target = $region5
  $region4: #{conv_batch_norm.3} parent=0 // pred_region
    _
  $region5: #{conv_batch_norm.3} parent=0 // pred_fallthru
    _
  // Predicated region
  $region6: #{conv_batch_norm.3} parent=0 // pred_check
    _
  $region7: #{conv_batch_norm.3} parent=0 // pred_check_branch
    %11 = sbr.rel (0) target = $region9
  $region8: #{conv_batch_norm.3} parent=0 // pred_region
    _
  $region9: #{conv_batch_norm.3} parent=0 // pred_fallthru
    _
  // Predicated region
  $region10: #{conv_batch_norm.3} parent=0 // pred_check
    _
  $region11: #{conv_batch_norm.3} parent=0 // pred_check_branch
    %13 = sbr.rel (0) target = $region13
  $region12: #{conv_batch_norm.3} parent=0 // pred_region
    _
  $region13: #{conv_batch_norm.3} parent=0 // pred_fallthru
    _
  %v14 = vld [vmem:[%s0] sm:$0xff]
  %v15 = vld [vmem:[%s0 + $0x8] sm:$0xff]
  %v16 = vld [vmem:[%s0 + $0x10] sm:$0xff]
  %v17 = vld [vmem:[%s0 + $0x18] sm:$0xff]
  %v18 = vld [vmem:[%s0 + $0x20] sm:$0xff]
  %v19 = vld [vmem:[%s0 + $0x28] sm:$0xff]
  %v20 = vld [vmem:[%s0 + $0x30] sm:$0xff]
  %v21 = vld [vmem:[%s0 + $0x38] sm:$0xff]
  %v22 = vld [vmem:[%s0 + $0x40] sm:$0xff]
  %v23 = vld [vmem:[%s0 + $0x48] sm:$0xff]
  %v24 = vld [vmem:[%s0 + $0x50] sm:$0xff]
  %v25 = vld [vmem:[%s0 + $0x58] sm:$0xff]
  %v26 = vld [vmem:[%s0 + $0x60] sm:$0xff]
  %v27 = vld [vmem:[%s0 + $0x68] sm:$0xff]
  %v28 = vld [vmem:[%s0 + $0x70] sm:$0xff]
  %v29 = vld [vmem:[%s0 + $0x78] sm:$0xff]
  %v30 = vld [vmem:[%s0 + $0x80] sm:$0xff]
  %v31 = vld [vmem:[%s0 + $0x88] sm:$0xff]
  %v32 = vld [vmem:[%s0 + $0x90] sm:$0xff]
  %v33 = vld [vmem:[%s0 + $0x98] sm:$0xff]
  %v34 = vld [vmem:[%s0 + $0xa0] sm:$0xff]
  %v35 = vld [vmem:[%s0 + $0xa8] sm:$0xff]
  %v36 = vld [vmem:[%s0 + $0xb0] sm:$0xff]
  %v37 = vld [vmem:[%s0 + $0xb8] sm:$0xff]
  %v38 = vld [vmem:[%s0 + $0xc0] sm:$0xff]
  %v39 = vld [vmem:[%s0 + $0xc8] sm:$0xff]
  %v40 = vld [vmem:[%s0 + $0xd0] sm:$0xff]
  %v41 = vld [vmem:[%s0 + $0xd8] sm:$0xff]
  %v42 = vld [vmem:[%s0 + $0xe0] sm:$0xff]
  %v43 = vld [vmem:[%s0 + $0xe8] sm:$0xff]
  %v44 = vld [vmem:[%s0 + $0xf0] sm:$0xff]
  %v45 = vld [vmem:[%s0 + $0xf8] sm:$0xff]
  %v46 = vld [vmem:[%s0 + $0x100] sm:$0xff]
  %v47 = vld [vmem:[%s0 + $0x108] sm:$0xff]
  %v48 = vld [vmem:[%s0 + $0x110] sm:$0xff]
  %v49 = vld [vmem:[%s0 + $0x118] sm:$0xff]
  %v50 = vld [vmem:[%s0 + $0x120] sm:$0xff]
  %v51 = vld [vmem:[%s0 + $0x128] sm:$0xff]
  %v52 = vld [vmem:[%s0 + $0x130] sm:$0xff]
  %v53 = vld [vmem:[%s0 + $0x138] sm:$0xff]
  %v54 = vld [vmem:[%s0 + $0x140] sm:$0xff]
  %v55 = vld [vmem:[%s0 + $0x148] sm:$0xff]
  %v56 = vld [vmem:[%s0 + $0x150] sm:$0xff]
  %v57 = vld [vmem:[%s0 + $0x158] sm:$0xff]
  %v58 = vld [vmem:[%s0 + $0x160] sm:$0xff]
  %v59 = vld [vmem:[%s0 + $0x168] sm:$0xff]
  %v60 = vld [vmem:[%s0 + $0x170] sm:$0xff]
  %v61 = vld [vmem:[%s0 + $0x178] sm:$0xff]
  %v62 = vld [vmem:[%s0 + $0x180] sm:$0xff]
  %v63 = vld [vmem:[%s0 + $0x188] sm:$0xff]
  %v64 = vld [vmem:[%s0 + $0x190] sm:$0xff]
  %v65 = vld [vmem:[%s0 + $0x198] sm:$0xff]
  %v66 = vld [vmem:[%s0 + $0x1a0] sm:$0xff]
  %v67 = vld [vmem:[%s0 + $0x1a8] sm:$0xff]
  %v68 = vld [vmem:[%s0 + $0x1b0] sm:$0xff]
  %v69 = vld [vmem:[%s0 + $0x1b8] sm:$0xff]
  %v70 = vld [vmem:[%s0 + $0x1c0] sm:$0xff]
  %v71 = vld [vmem:[%s0 + $0x1c8] sm:$0xff]
  %v72 = vld [vmem:[%s0 + $0x1d0] sm:$0xff]
  %v73 = vld [vmem:[%s0 + $0x1d8] sm:$0xff]
  %v74 = vld [vmem:[%s0 + $0x1e0] sm:$0xff]
  %v75 = vld [vmem:[%s0 + $0x1e8] sm:$0xff]
  %v76 = vld [vmem:[%s0 + $0x1f0] sm:$0xff]
  %v77 = vld [vmem:[%s0 + $0x1f8] sm:$0xff]
  %v78 = vld [vmem:[%s1] sm:$0x1]
  %v80 = vlaneseq
  %v81 = vshrl.u32 %v80, 7
  %v82 = vsub.s32 0, %v81
  %v83 = vrot.slane %v78, %v82
  %v85 = vmul.f32 %v14, %v83
  %v86 = vmul.f32 %v15, %v83
  %v87 = vmul.f32 %v16, %v83
  %v88 = vmul.f32 %v17, %v83
  %v89 = vmul.f32 %v18, %v83
  %v90 = vmul.f32 %v19, %v83
  %v91 = vmul.f32 %v20, %v83
  %v92 = vmul.f32 %v21, %v83
  %v93 = vmul.f32 %v22, %v83
  %v94 = vmul.f32 %v23, %v83
  %v95 = vmul.f32 %v24, %v83
  %v96 = vmul.f32 %v25, %v83
  %v97 = vmul.f32 %v26, %v83
  %v98 = vmul.f32 %v27, %v83
  %v99 = vmul.f32 %v28, %v83
  %v100 = vmul.f32 %v29, %v83
  %v101 = vmul.f32 %v30, %v83
  %v102 = vmul.f32 %v31, %v83
  %v103 = vmul.f32 %v32, %v83
  %v104 = vmul.f32 %v33, %v83
  %v105 = vmul.f32 %v34, %v83
  %v106 = vmul.f32 %v35, %v83
  %v107 = vmul.f32 %v36, %v83
  %v108 = vmul.f32 %v37, %v83
  %v109 = vmul.f32 %v38, %v83
  %v110 = vmul.f32 %v39, %v83
  %v111 = vmul.f32 %v40, %v83
  %v112 = vmul.f32 %v41, %v83
  %v113 = vmul.f32 %v42, %v83
  %v114 = vmul.f32 %v43, %v83
  %v115 = vmul.f32 %v44, %v83
  %v116 = vmul.f32 %v45, %v83
  %v117 = vmul.f32 %v46, %v83
  %v118 = vmul.f32 %v47, %v83
  %v119 = vmul.f32 %v48, %v83
  %v120 = vmul.f32 %v49, %v83
  %v121 = vmul.f32 %v50, %v83
  %v122 = vmul.f32 %v51, %v83
  %v123 = vmul.f32 %v52, %v83
  %v124 = vmul.f32 %v53, %v83
  %v125 = vmul.f32 %v54, %v83
  %v126 = vmul.f32 %v55, %v83
  %v127 = vmul.f32 %v56, %v83
  %v128 = vmul.f32 %v57, %v83
  %v129 = vmul.f32 %v58, %v83
  %v130 = vmul.f32 %v59, %v83
  %v131 = vmul.f32 %v60, %v83
  %v132 = vmul.f32 %v61, %v83
  %v133 = vmul.f32 %v62, %v83
  %v134 = vmul.f32 %v63, %v83
  %v135 = vmul.f32 %v64, %v83
  %v136 = vmul.f32 %v65, %v83
  %v137 = vmul.f32 %v66, %v83
  %v138 = vmul.f32 %v67, %v83
  %v139 = vmul.f32 %v68, %v83
  %v140 = vmul.f32 %v69, %v83
  %v141 = vmul.f32 %v70, %v83
  %v142 = vmul.f32 %v71, %v83
  %v143 = vmul.f32 %v72, %v83
  %v144 = vmul.f32 %v73, %v83
  %v145 = vmul.f32 %v74, %v83
  %v146 = vmul.f32 %v75, %v83
  %v147 = vmul.f32 %v76, %v83
  %v148 = vmul.f32 %v77, %v83
  %v149 = vld [vmem:[%s2] sm:$0x1]
  %v151 = vlaneseq
  %v152 = vshrl.u32 %v151, 7
  %v153 = vsub.s32 0, %v152
  %v154 = vrot.slane %v149, %v153
  %v156 = vadd.f32 %v85, %v154
  %v157 = vadd.f32 %v86, %v154
  %v158 = vadd.f32 %v87, %v154
  %v159 = vadd.f32 %v88, %v154
  %v160 = vadd.f32 %v89, %v154
  %v161 = vadd.f32 %v90, %v154
  %v162 = vadd.f32 %v91, %v154
  %v163 = vadd.f32 %v92, %v154
  %v164 = vadd.f32 %v93, %v154
  %v165 = vadd.f32 %v94, %v154
  %v166 = vadd.f32 %v95, %v154
  %v167 = vadd.f32 %v96, %v154
  %v168 = vadd.f32 %v97, %v154
  %v169 = vadd.f32 %v98, %v154
  %v170 = vadd.f32 %v99, %v154
  %v171 = vadd.f32 %v100, %v154
  %v172 = vadd.f32 %v101, %v154
  %v173 = vadd.f32 %v102, %v154
  %v174 = vadd.f32 %v103, %v154
  %v175 = vadd.f32 %v104, %v154
  %v176 = vadd.f32 %v105, %v154
  %v177 = vadd.f32 %v106, %v154
  %v178 = vadd.f32 %v107, %v154
  %v179 = vadd.f32 %v108, %v154
  %v180 = vadd.f32 %v109, %v154
  %v181 = vadd.f32 %v110, %v154
  %v182 = vadd.f32 %v111, %v154
  %v183 = vadd.f32 %v112, %v154
  %v184 = vadd.f32 %v113, %v154
  %v185 = vadd.f32 %v114, %v154
  %v186 = vadd.f32 %v115, %v154
  %v187 = vadd.f32 %v116, %v154
  %v188 = vadd.f32 %v117, %v154
  %v189 = vadd.f32 %v118, %v154
  %v190 = vadd.f32 %v119, %v154
  %v191 = vadd.f32 %v120, %v154
  %v192 = vadd.f32 %v121, %v154
  %v193 = vadd.f32 %v122, %v154
  %v194 = vadd.f32 %v123, %v154
  %v195 = vadd.f32 %v124, %v154
  %v196 = vadd.f32 %v125, %v154
  %v197 = vadd.f32 %v126, %v154
  %v198 = vadd.f32 %v127, %v154
  %v199 = vadd.f32 %v128, %v154
  %v200 = vadd.f32 %v129, %v154
  %v201 = vadd.f32 %v130, %v154
  %v202 = vadd.f32 %v131, %v154
  %v203 = vadd.f32 %v132, %v154
  %v204 = vadd.f32 %v133, %v154
  %v205 = vadd.f32 %v134, %v154
  %v206 = vadd.f32 %v135, %v154
  %v207 = vadd.f32 %v136, %v154
  %v208 = vadd.f32 %v137, %v154
  %v209 = vadd.f32 %v138, %v154
  %v210 = vadd.f32 %v139, %v154
  %v211 = vadd.f32 %v140, %v154
  %v212 = vadd.f32 %v141, %v154
  %v213 = vadd.f32 %v142, %v154
  %v214 = vadd.f32 %v143, %v154
  %v215 = vadd.f32 %v144, %v154
  %v216 = vadd.f32 %v145, %v154
  %v217 = vadd.f32 %v146, %v154
  %v218 = vadd.f32 %v147, %v154
  %v219 = vadd.f32 %v148, %v154
  %v220 = vmax.f32 %v156, 0.0
  %v221 = vmax.f32 %v157, 0.0
  %v222 = vmax.f32 %v158, 0.0
  %v223 = vmax.f32 %v159, 0.0
  %v224 = vmax.f32 %v160, 0.0
  %v225 = vmax.f32 %v161, 0.0
  %v226 = vmax.f32 %v162, 0.0
  %v227 = vmax.f32 %v163, 0.0
  %v228 = vmax.f32 %v164, 0.0
  %v229 = vmax.f32 %v165, 0.0
  %v230 = vmax.f32 %v166, 0.0
  %v231 = vmax.f32 %v167, 0.0
  %v232 = vmax.f32 %v168, 0.0
  %v233 = vmax.f32 %v169, 0.0
  %v234 = vmax.f32 %v170, 0.0
  %v235 = vmax.f32 %v171, 0.0
  %v236 = vmax.f32 %v172, 0.0
  %v237 = vmax.f32 %v173, 0.0
  %v238 = vmax.f32 %v174, 0.0
  %v239 = vmax.f32 %v175, 0.0
  %v240 = vmax.f32 %v176, 0.0
  %v241 = vmax.f32 %v177, 0.0
  %v242 = vmax.f32 %v178, 0.0
  %v243 = vmax.f32 %v179, 0.0
  %v244 = vmax.f32 %v180, 0.0
  %v245 = vmax.f32 %v181, 0.0
  %v246 = vmax.f32 %v182, 0.0
  %v247 = vmax.f32 %v183, 0.0
  %v248 = vmax.f32 %v184, 0.0
  %v249 = vmax.f32 %v185, 0.0
  %v250 = vmax.f32 %v186, 0.0
  %v251 = vmax.f32 %v187, 0.0
  %v252 = vmax.f32 %v188, 0.0
  %v253 = vmax.f32 %v189, 0.0
  %v254 = vmax.f32 %v190, 0.0
  %v255 = vmax.f32 %v191, 0.0
  %v256 = vmax.f32 %v192, 0.0
  %v257 = vmax.f32 %v193, 0.0
  %v258 = vmax.f32 %v194, 0.0
  %v259 = vmax.f32 %v195, 0.0
  %v260 = vmax.f32 %v196, 0.0
  %v261 = vmax.f32 %v197, 0.0
  %v262 = vmax.f32 %v198, 0.0
  %v263 = vmax.f32 %v199, 0.0
  %v264 = vmax.f32 %v200, 0.0
  %v265 = vmax.f32 %v201, 0.0
  %v266 = vmax.f32 %v202, 0.0
  %v267 = vmax.f32 %v203, 0.0
  %v268 = vmax.f32 %v204, 0.0
  %v269 = vmax.f32 %v205, 0.0
  %v270 = vmax.f32 %v206, 0.0
  %v271 = vmax.f32 %v207, 0.0
  %v272 = vmax.f32 %v208, 0.0
  %v273 = vmax.f32 %v209, 0.0
  %v274 = vmax.f32 %v210, 0.0
  %v275 = vmax.f32 %v211, 0.0
  %v276 = vmax.f32 %v212, 0.0
  %v277 = vmax.f32 %v213, 0.0
  %v278 = vmax.f32 %v214, 0.0
  %v279 = vmax.f32 %v215, 0.0
  %v280 = vmax.f32 %v216, 0.0
  %v281 = vmax.f32 %v217, 0.0
  %v282 = vmax.f32 %v218, 0.0
  %v283 = vmax.f32 %v219, 0.0
  %284 = vst [vmem:[%s3] sm:$0xff] %v220
  %285 = vst [vmem:[%s3 + $0x8] sm:$0xff] %v221
  %286 = vst [vmem:[%s3 + $0x10] sm:$0xff] %v222
  %287 = vst [vmem:[%s3 + $0x18] sm:$0xff] %v223
  %288 = vst [vmem:[%s3 + $0x20] sm:$0xff] %v224
  %289 = vst [vmem:[%s3 + $0x28] sm:$0xff] %v225
  %290 = vst [vmem:[%s3 + $0x30] sm:$0xff] %v226
  %291 = vst [vmem:[%s3 + $0x38] sm:$0xff] %v227
  %292 = vst [vmem:[%s3 + $0x40] sm:$0xff] %v228
  %293 = vst [vmem:[%s3 + $0x48] sm:$0xff] %v229
  %294 = vst [vmem:[%s3 + $0x50] sm:$0xff] %v230
  %295 = vst [vmem:[%s3 + $0x58] sm:$0xff] %v231
  %296 = vst [vmem:[%s3 + $0x60] sm:$0xff] %v232
  %297 = vst [vmem:[%s3 + $0x68] sm:$0xff] %v233
  %298 = vst [vmem:[%s3 + $0x70] sm:$0xff] %v234
  %299 = vst [vmem:[%s3 + $0x78] sm:$0xff] %v235
  %300 = vst [vmem:[%s3 + $0x80] sm:$0xff] %v236
  %301 = vst [vmem:[%s3 + $0x88] sm:$0xff] %v237
  %302 = vst [vmem:[%s3 + $0x90] sm:$0xff] %v238
  %303 = vst [vmem:[%s3 + $0x98] sm:$0xff] %v239
  %304 = vst [vmem:[%s3 + $0xa0] sm:$0xff] %v240
  %305 = vst [vmem:[%s3 + $0xa8] sm:$0xff] %v241
  %306 = vst [vmem:[%s3 + $0xb0] sm:$0xff] %v242
  %307 = vst [vmem:[%s3 + $0xb8] sm:$0xff] %v243
  %308 = vst [vmem:[%s3 + $0xc0] sm:$0xff] %v244
  %309 = vst [vmem:[%s3 + $0xc8] sm:$0xff] %v245
  %310 = vst [vmem:[%s3 + $0xd0] sm:$0xff] %v246
  %311 = vst [vmem:[%s3 + $0xd8] sm:$0xff] %v247
  %312 = vst [vmem:[%s3 + $0xe0] sm:$0xff] %v248
  %313 = vst [vmem:[%s3 + $0xe8] sm:$0xff] %v249
  %314 = vst [vmem:[%s3 + $0xf0] sm:$0xff] %v250
  %315 = vst [vmem:[%s3 + $0xf8] sm:$0xff] %v251
  %316 = vst [vmem:[%s3 + $0x100] sm:$0xff] %v252
  %317 = vst [vmem:[%s3 + $0x108] sm:$0xff] %v253
  %318 = vst [vmem:[%s3 + $0x110] sm:$0xff] %v254
  %319 = vst [vmem:[%s3 + $0x118] sm:$0xff] %v255
  %320 = vst [vmem:[%s3 + $0x120] sm:$0xff] %v256
  %321 = vst [vmem:[%s3 + $0x128] sm:$0xff] %v257
  %322 = vst [vmem:[%s3 + $0x130] sm:$0xff] %v258
  %323 = vst [vmem:[%s3 + $0x138] sm:$0xff] %v259
  %324 = vst [vmem:[%s3 + $0x140] sm:$0xff] %v260
  %325 = vst [vmem:[%s3 + $0x148] sm:$0xff] %v261
  %326 = vst [vmem:[%s3 + $0x150] sm:$0xff] %v262
  %327 = vst [vmem:[%s3 + $0x158] sm:$0xff] %v263
  %328 = vst [vmem:[%s3 + $0x160] sm:$0xff] %v264
  %329 = vst [vmem:[%s3 + $0x168] sm:$0xff] %v265
  %330 = vst [vmem:[%s3 + $0x170] sm:$0xff] %v266
  %331 = vst [vmem:[%s3 + $0x178] sm:$0xff] %v267
  %332 = vst [vmem:[%s3 + $0x180] sm:$0xff] %v268
  %333 = vst [vmem:[%s3 + $0x188] sm:$0xff] %v269
  %334 = vst [vmem:[%s3 + $0x190] sm:$0xff] %v270
  %335 = vst [vmem:[%s3 + $0x198] sm:$0xff] %v271
  %336 = vst [vmem:[%s3 + $0x1a0] sm:$0xff] %v272
  %337 = vst [vmem:[%s3 + $0x1a8] sm:$0xff] %v273
  %338 = vst [vmem:[%s3 + $0x1b0] sm:$0xff] %v274
  %339 = vst [vmem:[%s3 + $0x1b8] sm:$0xff] %v275
  %340 = vst [vmem:[%s3 + $0x1c0] sm:$0xff] %v276
  %341 = vst [vmem:[%s3 + $0x1c8] sm:$0xff] %v277
  %342 = vst [vmem:[%s3 + $0x1d0] sm:$0xff] %v278
  %343 = vst [vmem:[%s3 + $0x1d8] sm:$0xff] %v279
  %344 = vst [vmem:[%s3 + $0x1e0] sm:$0xff] %v280
  %345 = vst [vmem:[%s3 + $0x1e8] sm:$0xff] %v281
  %346 = vst [vmem:[%s3 + $0x1f0] sm:$0xff] %v282
  %347 = vst [vmem:[%s3 + $0x1f8] sm:$0xff] %v283
  // Predicated region
  $region14: #{conv_batch_norm.3} parent=0 // pred_check
    _
  $region15: #{conv_batch_norm.3} parent=0 // pred_check_branch
    %349 = sbr.rel (0) target = $region17
  $region16: #{conv_batch_norm.3} parent=0 // pred_region
    _
  $region17: #{conv_batch_norm.3} parent=0 // pred_fallthru
    _
  // Predicated region
  $region18: #{conv_batch_norm.3} parent=0 // pred_check
    _
  $region19: #{conv_batch_norm.3} parent=0 // pred_check_branch
    %351 = sbr.rel (0) target = $region21
  $region20: #{conv_batch_norm.3} parent=0 // pred_region
    _
  $region21: #{conv_batch_norm.3} parent=0 // pred_fallthru
    _

// kernel: conv_batch_norm.2
$region0: #{conv_batch_norm.2}
  #allocation0 [shape = 'u32[]', space=smem, size = 0x4, offset = 0x4, fixed_abs, tag = 'smem constant byte address 0x4 - core index']
  #allocation1 [shape = 'u32[144,128]{1,0:T(1,128)}', space=vmem, size = 0x12000, scoped, tag = 'internal scratch']
  #allocation2 [shape = 'f32[256,128]{1,0:T(8,128)}', space=vmem, size = 0x20000, scoped, tag = 'scratch operand']
  %s0 = inlined_call_operand.vmem [shape: f32[2,18,18,128], index: 0, kind: input, shape index: {}]
  %s1 = inlined_call_operand.vmem [shape: f32[3,3,128,128], index: 1, kind: input, shape index: {}]
  %s2 = inlined_call_operand.vmem [shape: f32[2,16,16,128], index: 2, kind: output, shape index: {0}]
  %s3 = inlined_call_operand.vmem [shape: f32[2,1,128], index: 3, kind: output, shape index: {1}]
  %s4 = inlined_call_operand.vmem [shape: f32[2,1,128], index: 4, kind: output, shape index: {2}]
  %5 = xla_tuple %s2, %s3, %s4
  %s6 = sld [smem:[#allocation0]]
  $region57: #{conv_batch_norm.2} parent=0
    _
  %s8 = ssub.s32 1, %s6
  %s9 = scalar_select 0, %s8, %s6
  loop: start=0, step=1, limit=4
  $region2: #{conv_batch_norm.2} parent=0 // loop_pre_header
    _
  $region3: #{conv_batch_norm.2} parent=0 // loop_header
    %s11 = sphi 0, %s15
    %p12 = scmp.ge.s32.totalorder %s11, 4
    %s18 = sphi 0, %s30
    %s19 = sphi 0, %s26
    %s20 = sphi 0, %s18
    %s21 = sphi 0, %s19
    %s22 = sphi 0, %s20
    %s23 = sphi 0, %s21
    %s33 = sphi 0, %s35
    %s36 = sphi 0, %s33
    %s37 = sphi 0, %s36
    %s53 = sphi 0, %s37
    %s59 = sphi 0, %s61
    %s62 = sphi 0, %s59
    %s63 = sphi 0, %s62
    %s79 = sphi 0, %s63
    %s87 = sphi 0, %s89
    %s90 = sphi 0, %s87
    %s91 = sphi 0, %s90
    %s107 = sphi 0, %s91
    %s115 = sphi 0, %s117
    %s118 = sphi 0, %s115
    %s119 = sphi 0, %s118
    %s135 = sphi 0, %s119
    %s143 = sphi 0, %s145
    %s146 = sphi 0, %s143
    %s147 = sphi 0, %s146
    %s163 = sphi 0, %s147
  $region4: #{conv_batch_norm.2} parent=0 // loop_header_branch
    %14 = sbr.rel (%p12) target = $region8
  $region5: #{conv_batch_norm.2} parent=0 // loop_body
    %s16 = ssub.s32 %s11, 1
    %s17 = ssub.s32 %s11, 2
    %s24 = sadd.s32 1, %s19
    %p25 = scmp.ge.s32.totalorder %s24, 1
    %s26 = scalar_select %p25, 0, %s24
    %s27 = sadd.s32 1, %s18
    %s28 = scalar_select %p25, %s27, %s18
    %p29 = scmp.ge.s32.totalorder %s28, 2
    %s30 = scalar_select %p29, 0, %s28
    %s31 = ssub.s32 %s18, %s30
    %p32 = scmp.eq.s32.totalorder %s31, 0
    %s34 = sadd.s32 %s33, 1
    %s35 = scalar_select %p32, %s33, %s34
    %p38 = pneg %p32
    %p39 = scmp.eq.s32.totalorder %s11, 1
    %p40 = por %p38, %p39
    %p41 = scmp.ne.s32.totalorder %s33, %s36
    %p42 = scmp.eq.s32.totalorder %s11, 0
    %p43 = por %p41, %p42
    %p44 = scmp.ne.s32.totalorder %s33, %s36
    %p45 = scmp.eq.s32.totalorder %s16, 1
    %p46 = por %p44, %p45
    %p47 = scmp.ne.s32.totalorder %s36, %s37
    %p48 = scmp.eq.s32.totalorder %s16, 0
    %p49 = por %p47, %p48
    %p50 = scmp.ne.s32.totalorder %s36, %s37
    %p51 = scmp.eq.s32.totalorder %s17, 1
    %p52 = por %p50, %p51
    %p54 = scmp.ne.s32.totalorder %s37, %s53
    %p55 = scmp.eq.s32.totalorder %s17, 0
    %p56 = por %p54, %p55
    %s57 = ssub.s32 %s19, %s26
    %p58 = scmp.eq.s32.totalorder %s57, 0
    %s60 = sadd.s32 %s59, 1
    %s61 = scalar_select %p58, %s59, %s60
    %p64 = pneg %p58
    %p65 = scmp.eq.s32.totalorder %s11, 1
    %p66 = por %p64, %p65
    %p67 = scmp.ne.s32.totalorder %s59, %s62
    %p68 = scmp.eq.s32.totalorder %s11, 0
    %p69 = por %p67, %p68
    %p70 = scmp.ne.s32.totalorder %s59, %s62
    %p71 = scmp.eq.s32.totalorder %s16, 1
    %p72 = por %p70, %p71
    %p73 = scmp.ne.s32.totalorder %s62, %s63
    %p74 = scmp.eq.s32.totalorder %s16, 0
    %p75 = por %p73, %p74
    %p76 = scmp.ne.s32.totalorder %s62, %s63
    %p77 = scmp.eq.s32.totalorder %s17, 1
    %p78 = por %p76, %p77
    %p80 = scmp.ne.s32.totalorder %s63, %s79
    %p81 = scmp.eq.s32.totalorder %s17, 0
    %p82 = por %p80, %p81
    %s83 = ssub.s32 %s18, %s30
    %s84 = ssub.s32 %s19, %s26
    %s85 = sor.u32 %s83, %s84
    %p86 = scmp.eq.s32.totalorder %s85, 0
    %s88 = sadd.s32 %s87, 1
    %s89 = scalar_select %p86, %s87, %s88
    %p92 = pneg %p86
    %p93 = scmp.eq.s32.totalorder %s11, 1
    %p94 = por %p92, %p93
    %p95 = scmp.ne.s32.totalorder %s87, %s90
    %p96 = scmp.eq.s32.totalorder %s11, 0
    %p97 = por %p95, %p96
    %p98 = scmp.ne.s32.totalorder %s87, %s90
    %p99 = scmp.eq.s32.totalorder %s16, 1
    %p100 = por %p98, %p99
    %p101 = scmp.ne.s32.totalorder %s90, %s91
    %p102 = scmp.eq.s32.totalorder %s16, 0
    %p103 = por %p101, %p102
    %p104 = scmp.ne.s32.totalorder %s90, %s91
    %p105 = scmp.eq.s32.totalorder %s17, 1
    %p106 = por %p104, %p105
    %p108 = scmp.ne.s32.totalorder %s91, %s107
    %p109 = scmp.eq.s32.totalorder %s17, 0
    %p110 = por %p108, %p109
    %s111 = ssub.s32 %s18, %s30
    %s112 = ssub.s32 %s19, %s26
    %s113 = sor.u32 %s111, %s112
    %p114 = scmp.eq.s32.totalorder %s113, 0
    %s116 = sadd.s32 %s115, 1
    %s117 = scalar_select %p114, %s115, %s116
    %p120 = pneg %p114
    %p121 = scmp.eq.s32.totalorder %s11, 1
    %p122 = por %p120, %p121
    %p123 = scmp.ne.s32.totalorder %s115, %s118
    %p124 = scmp.eq.s32.totalorder %s11, 0
    %p125 = por %p123, %p124
    %p126 = scmp.ne.s32.totalorder %s115, %s118
    %p127 = scmp.eq.s32.totalorder %s16, 1
    %p128 = por %p126, %p127
    %p129 = scmp.ne.s32.totalorder %s118, %s119
    %p130 = scmp.eq.s32.totalorder %s16, 0
    %p131 = por %p129, %p130
    %p132 = scmp.ne.s32.totalorder %s118, %s119
    %p133 = scmp.eq.s32.totalorder %s17, 1
    %p134 = por %p132, %p133
    %p136 = scmp.ne.s32.totalorder %s119, %s135
    %p137 = scmp.eq.s32.totalorder %s17, 0
    %p138 = por %p136, %p137
    %s139 = ssub.s32 %s18, %s30
    %s140 = ssub.s32 %s19, %s26
    %s141 = sor.u32 %s139, %s140
    %p142 = scmp.eq.s32.totalorder %s141, 0
    %s144 = sadd.s32 %s143, 1
    %s145 = scalar_select %p142, %s143, %s144
    %p148 = pneg %p142
    %p149 = scmp.eq.s32.totalorder %s11, 1
    %p150 = por %p148, %p149
    %p151 = scmp.ne.s32.totalorder %s143, %s146
    %p152 = scmp.eq.s32.totalorder %s11, 0
    %p153 = por %p151, %p152
    %p154 = scmp.ne.s32.totalorder %s143, %s146
    %p155 = scmp.eq.s32.totalorder %s16, 1
    %p156 = por %p154, %p155
    %p157 = scmp.ne.s32.totalorder %s146, %s147
    %p158 = scmp.eq.s32.totalorder %s16, 0
    %p159 = por %p157, %p158
    %p160 = scmp.ne.s32.totalorder %s146, %s147
    %p161 = scmp.eq.s32.totalorder %s17, 1
    %p162 = por %p160, %p161
    %p164 = scmp.ne.s32.totalorder %s147, %s163
    %p165 = scmp.eq.s32.totalorder %s17, 0
    %p166 = por %p164, %p165
    %p167 = scmp.le.s32.totalorder 1, %s11
    %p168 = scmp.lt.s32.totalorder %s11, 3
    %p169 = pnand %p167, %p168
    %p170 = pneg %p169
    // Predicated region
    $region9: #{conv_batch_norm.2} parent=5 // pred_check
      _
    $region10: #{conv_batch_norm.2} parent=5 // pred_check_branch
      %172 = sbr.rel (%p169) target = $region12
    $region11: #{conv_batch_norm.2} parent=5 // pred_region
      %s173 = ssub.s32 %s11, 1
      // Predicated region
      $region13: #{conv_batch_norm.2} parent=11 // pred_check
        %p174 = pneg %p75
      $region14: #{conv_batch_norm.2} parent=11 // pred_check_branch
        %176 = sbr.rel (%p174) target = $region16
      $region15: #{conv_batch_norm.2} parent=11 // pred_region
        %p177 = scmp.lt.s32.totalorder %s21, 0
        %s178 = scalar_select %p177, %s21, 0
        %s179 = smul.addr %s178, 8
        %s180 = scalar_lea.vmem %s1, %s179
      $region16: #{conv_batch_norm.2} parent=11 // pred_fallthru
        _
    $region12: #{conv_batch_norm.2} parent=5 // pred_fallthru
      _
    %p181 = scmp.lt.s32.totalorder %s11, 2
    // Predicated region
    $region17: #{conv_batch_norm.2} parent=5 // pred_check
      %p182 = pneg %p181
    $region18: #{conv_batch_norm.2} parent=5 // pred_check_branch
      %184 = sbr.rel (%p182) target = $region20
    $region19: #{conv_batch_norm.2} parent=5 // pred_region
      // Predicated region
      $region21: #{conv_batch_norm.2} parent=19 // pred_check
        %p185 = pneg %p43
      $region22: #{conv_batch_norm.2} parent=19 // pred_check_branch
        %187 = sbr.rel (%p185) target = $region24
      $region23: #{conv_batch_norm.2} parent=19 // pred_region
        %p188 = scmp.lt.s32.totalorder %s18, 1
        %s189 = scalar_select %p188, %s18, 1
        %s190 = smul.addr %s189, 54
        %s191 = smul.addr %s190, 8
        %s192 = scalar_lea.vmem %s0, %s191
      $region24: #{conv_batch_norm.2} parent=19 // pred_fallthru
        _
    $region20: #{conv_batch_norm.2} parent=5 // pred_fallthru
      _
    %p193 = scmp.le.s32.totalorder 1, %s11
    %p194 = scmp.lt.s32.totalorder %s11, 3
    %p195 = pnand %p193, %p194
    %p196 = pneg %p195
    // Predicated region
    $region25: #{conv_batch_norm.2} parent=5 // pred_check
      _
    $region26: #{conv_batch_norm.2} parent=5 // pred_check_branch
      %198 = sbr.rel (%p195) target = $region28
    $region27: #{conv_batch_norm.2} parent=5 // pred_region
      %s199 = ssub.s32 %s11, 1
      %p200 = scmp.lt.s32.totalorder %s20, 1
      %s201 = scalar_select %p200, %s20, 1
      %s202 = smul.addr %s201, 54
      %s203 = smul.addr %s202, 8
      %s204 = scalar_lea.vmem %s0, %s203
      %p205 = pneg %p49
      %p206 = pneg %p46
      %p207 = scmp.lt.s32.totalorder %s21, 0
      %s208 = scalar_select %p207, %s21, 0
      %s209 = smul.addr %s208, 8
      %s210 = scalar_lea.vmem %s1, %s209
      %p211 = pneg %p75
      %p212 = pneg %p72
      %p213 = pneg %p103
      %p214 = pneg %p100
      %p215 = scmp.lt.s32.totalorder %s20, 1
      %s216 = scalar_select %p215, %s20, 1
      %p217 = scmp.lt.s32.totalorder %s21, 0
      %s218 = scalar_select %p217, %s21, 0
      %s219 = smul.addr %s216, 32
      %s220 = sadd.s32 %s218, %s219
      %s221 = smul.addr %s220, 8
      %s222 = scalar_lea.vmem %s2, %s221
      %p223 = pneg %p131
      %p224 = pneg %p128
      %p225 = scmp.lt.s32.totalorder %s20, 1
      %s226 = scalar_select %p225, %s20, 1
      %p227 = scmp.lt.s32.totalorder %s21, 0
      %s228 = scalar_select %p227, %s21, 0
      %s229 = sadd.s32 %s228, %s226
      %s230 = scalar_lea.vmem %s3, %s229
      %p231 = pneg %p159
      %p232 = pneg %p156
      %p233 = scmp.lt.s32.totalorder %s20, 1
      %s234 = scalar_select %p233, %s20, 1
      %p235 = scmp.lt.s32.totalorder %s21, 0
      %s236 = scalar_select %p235, %s21, 0
      %s237 = sadd.s32 %s236, %s234
      %s238 = scalar_lea.vmem %s4, %s237
      %p239 = scmp.lt.s32.totalorder %s20, 1
      %s240 = scalar_select %p239, %s20, 1
      %s241 = smul.addr %s240, 54
      %s242 = smul.addr %s241, 8
      %s243 = scalar_lea.vmem %s0, %s242
      %p244 = scmp.lt.s32.totalorder %s21, 0
      %s245 = scalar_select %p244, %s21, 0
      %s246 = smul.addr %s245, 8
      %s247 = scalar_lea.vmem %s1, %s246
      %p248 = scmp.lt.s32.totalorder %s20, 1
      %s249 = scalar_select %p248, %s20, 1
      %p250 = scmp.lt.s32.totalorder %s21, 0
      %s251 = scalar_select %p250, %s21, 0
      %s252 = smul.addr %s249, 32
      %s253 = sadd.s32 %s251, %s252
      %s254 = smul.addr %s253, 8
      %s255 = scalar_lea.vmem %s2, %s254
      %p256 = scmp.lt.s32.totalorder %s20, 1
      %s257 = scalar_select %p256, %s20, 1
      %p258 = scmp.lt.s32.totalorder %s21, 0
      %s259 = scalar_select %p258, %s21, 0
      %s260 = sadd.s32 %s259, %s257
      %s261 = scalar_lea.vmem %s3, %s260
      %p262 = scmp.lt.s32.totalorder %s20, 1
      %s263 = scalar_select %p262, %s20, 1
      %p264 = scmp.lt.s32.totalorder %s21, 0
      %s265 = scalar_select %p264, %s21, 0
      %s266 = sadd.s32 %s265, %s263
      %s267 = scalar_lea.vmem %s4, %s266
      %v268 = vld [vmem:[%s243] sm:$0xff]
      %v269 = vld [vmem:[%s243 + $0x8] sm:$0xff]
      %v270 = vld [vmem:[%s243 + $0x10] sm:$0x3]
      %v271 = vld [vmem:[%s243 + $0x18] sm:$0xff]
      %v272 = vld [vmem:[%s243 + $0x20] sm:$0xff]
      %v273 = vld [vmem:[%s243 + $0x28] sm:$0x3]
      %v274 = vld [vmem:[%s243 + $0x30] sm:$0xff]
      %v275 = vld [vmem:[%s243 + $0x38] sm:$0xff]
      %v276 = vld [vmem:[%s243 + $0x40] sm:$0x3]
      %v277 = vld [vmem:[%s243 + $0x48] sm:$0xff]
      %v278 = vld [vmem:[%s243 + $0x50] sm:$0xff]
      %v279 = vld [vmem:[%s243 + $0x58] sm:$0x3]
      %v280 = vld [vmem:[%s243 + $0x60] sm:$0xff]
      %v281 = vld [vmem:[%s243 + $0x68] sm:$0xff]
      %v282 = vld [vmem:[%s243 + $0x70] sm:$0x3]
      %v283 = vld [vmem:[%s243 + $0x78] sm:$0xff]
      %v284 = vld [vmem:[%s243 + $0x80] sm:$0xff]
      %v285 = vld [vmem:[%s243 + $0x88] sm:$0x3]
      %v286 = vld [vmem:[%s243 + $0x90] sm:$0xff]
      %v287 = vld [vmem:[%s243 + $0x98] sm:$0xff]
      %v288 = vld [vmem:[%s243 + $0xa0] sm:$0x3]
      %v289 = vld [vmem:[%s243 + $0xa8] sm:$0xff]
      %v290 = vld [vmem:[%s243 + $0xb0] sm:$0xff]
      %v291 = vld [vmem:[%s243 + $0xb8] sm:$0x3]
      %v292 = vld [vmem:[%s243 + $0xc0] sm:$0xff]
      %v293 = vld [vmem:[%s243 + $0xc8] sm:$0xff]
      %v294 = vld [vmem:[%s243 + $0xd0] sm:$0x3]
      %v295 = vld [vmem:[%s243 + $0xd8] sm:$0xff]
      %v296 = vld [vmem:[%s243 + $0xe0] sm:$0xff]
      %v297 = vld [vmem:[%s243 + $0xe8] sm:$0x3]
      %v298 = vld [vmem:[%s243 + $0xf0] sm:$0xff]
      %v299 = vld [vmem:[%s243 + $0xf8] sm:$0xff]
      %v300 = vld [vmem:[%s243 + $0x100] sm:$0x3]
      %v301 = vld [vmem:[%s243 + $0x108] sm:$0xff]
      %v302 = vld [vmem:[%s243 + $0x110] sm:$0xff]
      %v303 = vld [vmem:[%s243 + $0x118] sm:$0x3]
      %v304 = vld [vmem:[%s243 + $0x120] sm:$0xff]
      %v305 = vld [vmem:[%s243 + $0x128] sm:$0xff]
      %v306 = vld [vmem:[%s243 + $0x130] sm:$0x3]
      %v307 = vld [vmem:[%s243 + $0x138] sm:$0xff]
      %v308 = vld [vmem:[%s243 + $0x140] sm:$0xff]
      %v309 = vld [vmem:[%s243 + $0x148] sm:$0x3]
      %v310 = vld [vmem:[%s243 + $0x150] sm:$0xff]
      %v311 = vld [vmem:[%s243 + $0x158] sm:$0xff]
      %v312 = vld [vmem:[%s243 + $0x160] sm:$0x3]
      %v313 = vld [vmem:[%s243 + $0x168] sm:$0xff]
      %v314 = vld [vmem:[%s243 + $0x170] sm:$0xff]
      %v315 = vld [vmem:[%s243 + $0x178] sm:$0x3]
      %v316 = vld [vmem:[%s247] sm:$0xff]
      %v317 = vld [vmem:[%s247 + $0x8] sm:$0xff]
      %v318 = vld [vmem:[%s247 + $0x10] sm:$0xff]
      %v319 = vld [vmem:[%s247 + $0x18] sm:$0xff]
      %v320 = vld [vmem:[%s247 + $0x20] sm:$0xff]
      %v321 = vld [vmem:[%s247 + $0x28] sm:$0xff]
      %v322 = vld [vmem:[%s247 + $0x30] sm:$0xff]
      %v323 = vld [vmem:[%s247 + $0x38] sm:$0xff]
      %v324 = vld [vmem:[%s247 + $0x40] sm:$0xff]
      %v325 = vld [vmem:[%s247 + $0x48] sm:$0xff]
      %v326 = vld [vmem:[%s247 + $0x50] sm:$0xff]
      %v327 = vld [vmem:[%s247 + $0x58] sm:$0xff]
      %v328 = vld [vmem:[%s247 + $0x60] sm:$0xff]
      %v329 = vld [vmem:[%s247 + $0x68] sm:$0xff]
      %v330 = vld [vmem:[%s247 + $0x70] sm:$0xff]
      %v331 = vld [vmem:[%s247 + $0x78] sm:$0xff]
      %332 = vmatprep.subr.mxu0 0.0
      %333 = vmatpush1.msra.mxu0 %v316
      %334 = vmatprep.subr.mxu0 0.0
      %335 = vmatpush1.msra.mxu0 %v317
      %336 = vmatprep.subr.mxu0 0.0
      %337 = vmatpush1.msra.mxu0 %v318
      %338 = vmatprep.subr.mxu0 0.0
      %339 = vmatpush1.msra.mxu0 %v319
      %340 = vmatprep.subr.mxu0 0.0
      %341 = vmatpush1.msra.mxu0 %v320
      %342 = vmatprep.subr.mxu0 0.0
      %343 = vmatpush1.msra.mxu0 %v321
      %344 = vmatprep.subr.mxu0 0.0
      %345 = vmatpush1.msra.mxu0 %v322
      %346 = vmatprep.subr.mxu0 0.0
      %347 = vmatpush1.msra.mxu0 %v323
      %348 = vmatprep.subr.mxu0 0.0
      %349 = vmatpush1.msra.mxu0 %v324
      %350 = vmatprep.subr.mxu0 0.0
      %351 = vmatpush1.msra.mxu0 %v325
      %352 = vmatprep.subr.mxu0 0.0
      %353 = vmatpush1.msra.mxu0 %v326
      %354 = vmatprep.subr.mxu0 0.0
      %355 = vmatpush1.msra.mxu0 %v327
      %356 = vmatprep.subr.mxu0 0.0
      %357 = vmatpush1.msra.mxu0 %v328
      %358 = vmatprep.subr.mxu0 0.0
      %359 = vmatpush1.msra.mxu0 %v329
      %360 = vmatprep.subr.mxu0 0.0
      %361 = vmatpush1.msra.mxu0 %v330
      %362 = vmatprep.subr.mxu0 0.0
      %363 = vmatpush1.msra.mxu0 %v331
      %364 = vmatprep.subr.mxu0 0.0
      %365 = vmatpush1.msra.mxu0 0.0
      %366 = vmatprep.subr.mxu0 0.0
      %367 = vmatpush1.msra.mxu0 0.0
      %368 = vmatprep.subr.mxu0 0.0
      %369 = vmatpush1.msra.mxu0 0.0
      %370 = vmatprep.subr.mxu0 0.0
      %371 = vmatpush1.msra.mxu0 0.0
      %372 = vmatprep.subr.mxu0 0.0
      %373 = vmatpush1.msra.mxu0 0.0
      %374 = vmatprep.subr.mxu0 0.0
      %375 = vmatpush1.msra.mxu0 0.0
      %376 = vmatprep.subr.mxu0 0.0
      %377 = vmatpush1.msra.mxu0 0.0
      %378 = vmatprep.subr.mxu0 0.0
      %379 = vmatpush1.msra.mxu0 0.0
      %380 = vmatprep.subr.mxu0 0.0
      %381 = vmatpush1.msra.mxu0 0.0
      %382 = vmatprep.subr.mxu0 0.0
      %383 = vmatpush1.msra.mxu0 0.0
      %384 = vmatprep.subr.mxu0 0.0
      %385 = vmatpush1.msra.mxu0 0.0
      %386 = vmatprep.subr.mxu0 0.0
      %387 = vmatpush1.msra.mxu0 0.0
      %388 = vmatprep.subr.mxu0 0.0
      %389 = vmatpush1.msra.mxu0 0.0
      %390 = vmatprep.subr.mxu0 0.0
      %391 = vmatpush1.msra.mxu0 0.0
      %392 = vmatprep.subr.mxu0 0.0
      %393 = vmatpush1.msra.mxu0 0.0
      %394 = vmatprep.subr.mxu0 0.0
      %395 = vmatpush1.msra.mxu0 0.0
      %396 = vmatprep.mubr.f32.mxu0 0.0
      %397 = vmatmul.mubr.f32.gmra.mrb[0].mxu0 %v268
      %v398 = vpop.f32.mrb[0].mxu0
      %v399 = vadd.f32 0.0, %v398
      %v400 = vpop.f32.mrb[0].mxu0
      %401 = vmatprep.mubr.f32.mxu0 0.0
      %402 = vmatmul.mubr.f32.gmra.mrb[0].mxu0 %v269
      %v403 = vpop.f32.mrb[0].mxu0
      %v404 = vadd.f32 0.0, %v403
      %v405 = vpop.f32.mrb[0].mxu0
      %406 = vmatprep.mubr.f32.mxu0 0.0
      %407 = vmatmul.mubr.f32.gmra.mrb[0].mxu0 %v271
      %v408 = vpop.f32.mrb[0].mxu0
      %v409 = vadd.f32 0.0, %v408
      %v410 = vpop.f32.mrb[0].mxu0
      %411 = vmatprep.mubr.f32.mxu0 0.0
      %412 = vmatmul.mubr.f32.gmra.mrb[0].mxu0 %v272
      %v413 = vpop.f32.mrb[0].mxu0
      %v414 = vadd.f32 0.0, %v413
      %v415 = vpop.f32.mrb[0].mxu0
      %416 = vmatprep.mubr.f32.mxu0 0.0
      %417 = vmatmul.mubr.f32.gmra.mrb[0].mxu0 %v274
      %v418 = vpop.f32.mrb[0].mxu0
      %v419 = vadd.f32 0.0, %v418
      %v420 = vpop.f32.mrb[0].mxu0
      %421 = vmatprep.mubr.f32.mxu0 0.0
      %422 = vmatmul.mubr.f32.gmra.mrb[0].mxu0 %v275
      %v423 = vpop.f32.mrb[0].mxu0
      %v424 = vadd.f32 0.0, %v423
      %v425 = vpop.f32.mrb[0].mxu0
      %426 = vmatprep.mubr.f32.mxu0 0.0
      %427 = vmatmul.mubr.f32.gmra.mrb[0].mxu0 %v277
      %v428 = vpop.f32.mrb[0].mxu0
      %v429 = vadd.f32 0.0, %v428
      %v430 = vpop.f32.mrb[0].mxu0
      %431 = vmatprep.mubr.f32.mxu0 0.0
      %432 = vmatmul.mubr.f32.gmra.mrb[0].mxu0 %v278
      %v433 = vpop.f32.mrb[0].mxu0
      %v434 = vadd.f32 0.0, %v433
      %v435 = vpop.f32.mrb[0].mxu0
      %436 = vmatprep.mubr.f32.mxu0 0.0
      %437 = vmatmul.mubr.f32.gmra.mrb[0].mxu0 %v280
      %v438 = vpop.f32.mrb[0].mxu0
      %v439 = vadd.f32 0.0, %v438
      %v440 = vpop.f32.mrb[0].mxu0
      %441 = vmatprep.mubr.f32.mxu0 0.0
      %442 = vmatmul.mubr.f32.gmra.mrb[0].mxu0 %v281
      %v443 = vpop.f32.mrb[0].mxu0
      %v444 = vadd.f32 0.0, %v443
      %v445 = vpop.f32.mrb[0].mxu0
      %446 = vmatprep.mubr.f32.mxu0 0.0
      %447 = vmatmul.mubr.f32.gmra.mrb[0].mxu0 %v283
      %v448 = vpop.f32.mrb[0].mxu0
      %v449 = vadd.f32 0.0, %v448
      %v450 = vpop.f32.mrb[0].mxu0
      %451 = vmatprep.mubr.f32.mxu0 0.0
      %452 = vmatmul.mubr.f32.gmra.mrb[0].mxu0 %v284
      %v453 = vpop.f32.mrb[0].mxu0
      %v454 = vadd.f32 0.0, %v453
      %v455 = vpop.f32.mrb[0].mxu0
      %456 = vmatprep.mubr.f32.mxu0 0.0
      %457 = vmatmul.mubr.f32.gmra.mrb[0].mxu0 %v286
      %v458 = vpop.f32.mrb[0].mxu0
      %v459 = vadd.f32 0.0, %v458
      %v460 = vpop.f32.mrb[0].mxu0
      %461 = vmatprep.mubr.f32.mxu0 0.0
      %462 = vmatmul.mubr.f32.gmra.mrb[0].mxu0 %v287
      %v463 = vpop.f32.mrb[0].mxu0
      %v464 = vadd.f32 0.0, %v463
      %v465 = vpop.f32.mrb[0].mxu0
      %466 = vmatprep.mubr.f32.mxu0 0.0
      %467 = vmatmul.mubr.f32.gmra.mrb[0].mxu0 %v289
      %v468 = vpop.f32.mrb[0].mxu0
      %v469 = vadd.f32 0.0, %v468
      %v470 = vpop.f32.mrb[0].mxu0
      %471 = vmatprep.mubr.f32.mxu0 0.0
      %472 = vmatmul.mubr.f32.gmra.mrb[0].mxu0 %v290
      %v473 = vpop.f32.mrb[0].mxu0
      %v474 = vadd.f32 0.0, %v473
      %v475 = vpop.f32.mrb[0].mxu0
      %476 = vmatprep.mubr.f32.mxu0 0.0
      %477 = vmatmul.mubr.f32.gmra.mrb[0].mxu0 %v292
      %v478 = vpop.f32.mrb[0].mxu0
      %v479 = vadd.f32 0.0, %v478
      %v480 = vpop.f32.mrb[0].mxu0
      %481 = vmatprep.mubr.f32.mxu0 0.0
      %482 = vmatmul.mubr.f32.gmra.mrb[0].mxu0 %v293
      %v483 = vpop.f32.mrb[0].mxu0
      %v484 = vadd.f32 0.0, %v483
      %v485 = vpop.f32.mrb[0].mxu0
      %486 = vmatprep.mubr.f32.mxu0 0.0
      %487 = vmatmul.mubr.f32.gmra.mrb[0].mxu0 %v295
      %v488 = vpop.f32.mrb[0].mxu0
      %v489 = vadd.f32 0.0, %v488
      %v490 = vpop.f32.mrb[0].mxu0
      %491 = vmatprep.mubr.f32.mxu0 0.0
      %492 = vmatmul.mubr.f32.gmra.mrb[0].mxu0 %v296
      %v493 = vpop.f32.mrb[0].mxu0
      %v494 = vadd.f32 0.0, %v493
      %v495 = vpop.f32.mrb[0].mxu0
      %496 = vmatprep.mubr.f32.mxu0 0.0
      %497 = vmatmul.mubr.f32.gmra.mrb[0].mxu0 %v298
      %v498 = vpop.f32.mrb[0].mxu0
      %v499 = vadd.f32 0.0, %v498
      %v500 = vpop.f32.mrb[0].mxu0
      %501 = vmatprep.mubr.f32.mxu0 0.0
      %502 = vmatmul.mubr.f32.gmra.mrb[0].mxu0 %v299
      %v503 = vpop.f32.mrb[0].mxu0
      %v504 = vadd.f32 0.0, %v503
      %v505 = vpop.f32.mrb[0].mxu0
      %506 = vmatprep.mubr.f32.mxu0 0.0
      %507 = vmatmul.mubr.f32.gmra.mrb[0].mxu0 %v301
      %v508 = vpop.f32.mrb[0].mxu0
      %v509 = vadd.f32 0.0, %v508
      %v510 = vpop.f32.mrb[0].mxu0
      %511 = vmatprep.mubr.f32.mxu0 0.0
      %512 = vmatmul.mubr.f32.gmra.mrb[0].mxu0 %v302
      %v513 = vpop.f32.mrb[0].mxu0
      %v514 = vadd.f32 0.0, %v513
      %v515 = vpop.f32.mrb[0].mxu0
      %516 = vmatprep.mubr.f32.mxu0 0.0
      %517 = vmatmul.mubr.f32.gmra.mrb[0].mxu0 %v304
      %v518 = vpop.f32.mrb[0].mxu0
      %v519 = vadd.f32 0.0, %v518
      %v520 = vpop.f32.mrb[0].mxu0
      %521 = vmatprep.mubr.f32.mxu0 0.0
      %522 = vmatmul.mubr.f32.gmra.mrb[0].mxu0 %v305
      %v523 = vpop.f32.mrb[0].mxu0
      %v524 = vadd.f32 0.0, %v523
      %v525 = vpop.f32.mrb[0].mxu0
      %526 = vmatprep.mubr.f32.mxu0 0.0
      %527 = vmatmul.mubr.f32.gmra.mrb[0].mxu0 %v307
      %v528 = vpop.f32.mrb[0].mxu0
      %v529 = vadd.f32 0.0, %v528
      %v530 = vpop.f32.mrb[0].mxu0
      %531 = vmatprep.mubr.f32.mxu0 0.0
      %532 = vmatmul.mubr.f32.gmra.mrb[0].mxu0 %v308
      %v533 = vpop.f32.mrb[0].mxu0
      %v534 = vadd.f32 0.0, %v533
      %v535 = vpop.f32.mrb[0].mxu0
      %536 = vmatprep.mubr.f32.mxu0 0.0
      %537 = vmatmul.mubr.f32.gmra.mrb[0].mxu0 %v310
      %v538 = vpop.f32.mrb[0].mxu0
      %v539 = vadd.f32 0.0, %v538
      %v540 = vpop.f32.mrb[0].mxu0
      %541 = vmatprep.mubr.f32.mxu0 0.0
      %542 = vmatmul.mubr.f32.gmra.mrb[0].mxu0 %v311
      %v543 = vpop.f32.mrb[0].mxu0
      %v544 = vadd.f32 0.0, %v543
      %v545 = vpop.f32.mrb[0].mxu0
      %546 = vmatprep.mubr.f32.mxu0 0.0
      %547 = vmatmul.mubr.f32.gmra.mrb[0].mxu0 %v313
      %v548 = vpop.f32.mrb[0].mxu0
      %v549 = vadd.f32 0.0, %v548
      %v550 = vpop.f32.mrb[0].mxu0
      %551 = vmatprep.mubr.f32.mxu0 0.0
      %552 = vmatmul.mubr.f32.gmra.mrb[0].mxu0 %v314
      %v553 = vpop.f32.mrb[0].mxu0
      %v554 = vadd.f32 0.0, %v553
      %v555 = vpop.f32.mrb[0].mxu0
      %556 = vdwg.mxu0
      %557 = vst [vmem:[#allocation2] sm:$0xff] %v399
      %558 = vst [vmem:[#allocation2 + $0x8] sm:$0xff] %v404
      %559 = vst [vmem:[#allocation2 + $0x10] sm:$0xff] %v409
      %560 = vst [vmem:[#allocation2 + $0x18] sm:$0xff] %v414
      %561 = vst [vmem:[#allocation2 + $0x20] sm:$0xff] %v419
      %562 = vst [vmem:[#allocation2 + $0x28] sm:$0xff] %v424
      %563 = vst [vmem:[#allocation2 + $0x30] sm:$0xff] %v429
      %564 = vst [vmem:[#allocation2 + $0x38] sm:$0xff] %v434
      %565 = vst [vmem:[#allocation2 + $0x40] sm:$0xff] %v439
      %566 = vst [vmem:[#allocation2 + $0x48] sm:$0xff] %v444
      %567 = vst [vmem:[#allocation2 + $0x50] sm:$0xff] %v449
      %568 = vst [vmem:[#allocation2 + $0x58] sm:$0xff] %v454
      %569 = vst [vmem:[#allocation2 + $0x60] sm:$0xff] %v459
      %570 = vst [vmem:[#allocation2 + $0x68] sm:$0xff] %v464
      %571 = vst [vmem:[#allocation2 + $0x70] sm:$0xff] %v469
      %572 = vst [vmem:[#allocation2 + $0x78] sm:$0xff] %v474
      %573 = vst [vmem:[#allocation2 + $0x80] sm:$0xff] %v479
      %574 = vst [vmem:[#allocation2 + $0x88] sm:$0xff] %v484
      %575 = vst [vmem:[#allocation2 + $0x90] sm:$0xff] %v489
      %576 = vst [vmem:[#allocation2 + $0x98] sm:$0xff] %v494
      %577 = vst [vmem:[#allocation2 + $0xa0] sm:$0xff] %v499
      %578 = vst [vmem:[#allocation2 + $0xa8] sm:$0xff] %v504
      %579 = vst [vmem:[#allocation2 + $0xb0] sm:$0xff] %v509
      %580 = vst [vmem:[#allocation2 + $0xb8] sm:$0xff] %v514
      %581 = vst [vmem:[#allocation2 + $0xc0] sm:$0xff] %v519
      %582 = vst [vmem:[#allocation2 + $0xc8] sm:$0xff] %v524
      %583 = vst [vmem:[#allocation2 + $0xd0] sm:$0xff] %v529
      %584 = vst [vmem:[#allocation2 + $0xd8] sm:$0xff] %v534
      %585 = vst [vmem:[#allocation2 + $0xe0] sm:$0xff] %v539
      %586 = vst [vmem:[#allocation2 + $0xe8] sm:$0xff] %v544
      %587 = vst [vmem:[#allocation2 + $0xf0] sm:$0xff] %v549
      %588 = vst [vmem:[#allocation2 + $0xf8] sm:$0xff] %v554
      %vm637 = vcmask 1046528
      %v638 = vrot.slane %v268, 1
      %v639 = vrot.slane %v269, 1
      %v640 = vsel %vm637, %v638, %v639
      %v641 = vrot.slane %v270, 1
      %v642 = vsel %vm637, %v639, %v641
      %v643 = vrot.slane %v271, 1
      %v644 = vrot.slane %v272, 1
      %v645 = vsel %vm637, %v643, %v644
      %v646 = vrot.slane %v273, 1
      %v647 = vsel %vm637, %v644, %v646
      %v648 = vrot.slane %v274, 1
      %v649 = vrot.slane %v275, 1
      %v650 = vsel %vm637, %v648, %v649
      %v651 = vrot.slane %v276, 1
      %v652 = vsel %vm637, %v649, %v651
      %v653 = vrot.slane %v277, 1
      %v654 = vrot.slane %v278, 1
      %v655 = vsel %vm637, %v653, %v654
      %v656 = vrot.slane %v279, 1
      %v657 = vsel %vm637, %v654, %v656
      %v658 = vrot.slane %v280, 1
      %v659 = vrot.slane %v281, 1
      %v660 = vsel %vm637, %v658, %v659
      %v661 = vrot.slane %v282, 1
      %v662 = vsel %vm637, %v659, %v661
      %v663 = vrot.slane %v283, 1
      %v664 = vrot.slane %v284, 1
      %v665 = vsel %vm637, %v663, %v664
      %v666 = vrot.slane %v285, 1
      %v667 = vsel %vm637, %v664, %v666
      %v668 = vrot.slane %v286, 1
      %v669 = vrot.slane %v287, 1
      %v670 = vsel %vm637, %v668, %v669
      %v671 = vrot.slane %v288, 1
      %v672 = vsel %vm637, %v669, %v671
      %v673 = vrot.slane %v289, 1
      %v674 = vrot.slane %v290, 1
      %v675 = vsel %vm637, %v673, %v674
      %v676 = vrot.slane %v291, 1
      %v677 = vsel %vm637, %v674, %v676
      %v678 = vrot.slane %v292, 1
      %v679 = vrot.slane %v293, 1
      %v680 = vsel %vm637, %v678, %v679
      %v681 = vrot.slane %v294, 1
      %v682 = vsel %vm637, %v679, %v681
      %v683 = vrot.slane %v295, 1
      %v684 = vrot.slane %v296, 1
      %v685 = vsel %vm637, %v683, %v684
      %v686 = vrot.slane %v297, 1
      %v687 = vsel %vm637, %v684, %v686
      %v688 = vrot.slane %v298, 1
      %v689 = vrot.slane %v299, 1
      %v690 = vsel %vm637, %v688, %v689
      %v691 = vrot.slane %v300, 1
      %v692 = vsel %vm637, %v689, %v691
      %v693 = vrot.slane %v301, 1
      %v694 = vrot.slane %v302, 1
      %v695 = vsel %vm637, %v693, %v694
      %v696 = vrot.slane %v303, 1
      %v697 = vsel %vm637, %v694, %v696
      %v698 = vrot.slane %v304, 1
      %v699 = vrot.slane %v305, 1
      %v700 = vsel %vm637, %v698, %v699
      %v701 = vrot.slane %v306, 1
      %v702 = vsel %vm637, %v699, %v701
      %v703 = vrot.slane %v307, 1
      %v704 = vrot.slane %v308, 1
      %v705 = vsel %vm637, %v703, %v704
      %v706 = vrot.slane %v309, 1
      %v707 = vsel %vm637, %v704, %v706
      %v708 = vrot.slane %v310, 1
      %v709 = vrot.slane %v311, 1
      %v710 = vsel %vm637, %v708, %v709
      %v711 = vrot.slane %v312, 1
      %v712 = vsel %vm637, %v709, %v711
      %v713 = vrot.slane %v313, 1
      %v714 = vrot.slane %v314, 1
      %v715 = vsel %vm637, %v713, %v714
      %v716 = vrot.slane %v315, 1
      %v717 = vsel %vm637, %v714, %v716
      %s750 = scalar_lea.vmem %s247, 128
      %v751 = vld [vmem:[%s750] sm:$0xff]
      %v752 = vld [vmem:[%s750 + $0x8] sm:$0xff]
      %v753 = vld [vmem:[%s750 + $0x10] sm:$0xff]
      %v754 = vld [vmem:[%s750 + $0x18] sm:$0xff]
      %v755 = vld [vmem:[%s750 + $0x20] sm:$0xff]
      %v756 = vld [vmem:[%s750 + $0x28] sm:$0xff]
      %v757 = vld [vmem:[%s750 + $0x30] sm:$0xff]
      %v758 = vld [vmem:[%s750 + $0x38] sm:$0xff]
      %v759 = vld [vmem:[%s750 + $0x40] sm:$0xff]
      %v760 = vld [vmem:[%s750 + $0x48] sm:$0xff]
      %v761 = vld [vmem:[%s750 + $0x50] sm:$0xff]
      %v762 = vld [vmem:[%s750 + $0x58] sm:$0xff]
      %v763 = vld [vmem:[%s750 + $0x60] sm:$0xff]
      %v764 = vld [vmem:[%s750 + $0x68] sm:$0xff]
      %v765 = vld [vmem:[%s750 + $0x70] sm:$0xff]
      %v766 = vld [vmem:[%s750 + $0x78] sm:$0xff]
      %767 = vmatprep.subr.mxu0 0.0
      %768 = vmatpush1.msra.mxu0 %v751
      %769 = vmatprep.subr.mxu0 0.0
      %770 = vmatpush1.msra.mxu0 %v752
      %771 = vmatprep.subr.mxu0 0.0
      %772 = vmatpush1.msra.mxu0 %v753
      %773 = vmatprep.subr.mxu0 0.0
      %774 = vmatpush1.msra.mxu0 %v754
      %775 = vmatprep.subr.mxu0 0.0
      %776 = vmatpush1.msra.mxu0 %v755
      %777 = vmatprep.subr.mxu0 0.0
      %778 = vmatpush1.msra.mxu0 %v756
      %779 = vmatprep.subr.mxu0 0.0
      %780 = vmatpush1.msra.mxu0 %v757
      %781 = vmatprep.subr.mxu0 0.0
      %782 = vmatpush1.msra.mxu0 %v758
      %783 = vmatprep.subr.mxu0 0.0
      %784 = vmatpush1.msra.mxu0 %v759
      %785 = vmatprep.subr.mxu0 0.0
      %786 = vmatpush1.msra.mxu0 %v760
      %787 = vmatprep.subr.mxu0 0.0
      %788 = vmatpush1.msra.mxu0 %v761
      %789 = vmatprep.subr.mxu0 0.0
      %790 = vmatpush1.msra.mxu0 %v762
      %791 = vmatprep.subr.mxu0 0.0
      %792 = vmatpush1.msra.mxu0 %v763
      %793 = vmatprep.subr.mxu0 0.0
      %794 = vmatpush1.msra.mxu0 %v764
      %795 = vmatprep.subr.mxu0 0.0
      %796 = vmatpush1.msra.mxu0 %v765
      %797 = vmatprep.subr.mxu0 0.0
      %798 = vmatpush1.msra.mxu0 %v766
      %799 = vmatprep.subr.mxu0 0.0
      %800 = vmatpush1.msra.mxu0 0.0
      %801 = vmatprep.subr.mxu0 0.0
      %802 = vmatpush1.msra.mxu0 0.0
      %803 = vmatprep.subr.mxu0 0.0
      %804 = vmatpush1.msra.mxu0 0.0
      %805 = vmatprep.subr.mxu0 0.0
      %806 = vmatpush1.msra.mxu0 0.0
      %807 = vmatprep.subr.mxu0 0.0
      %808 = vmatpush1.msra.mxu0 0.0
      %809 = vmatprep.subr.mxu0 0.0
      %810 = vmatpush1.msra.mxu0 0.0
      %811 = vmatprep.subr.mxu0 0.0
      %812 = vmatpush1.msra.mxu0 0.0
      %813 = vmatprep.subr.mxu0 0.0
      %814 = vmatpush1.msra.mxu0 0.0
      %815 = vmatprep.subr.mxu0 0.0
      %816 = vmatpush1.msra.mxu0 0.0
      %817 = vmatprep.subr.mxu0 0.0
      %818 = vmatpush1.msra.mxu0 0.0
      %819 = vmatprep.subr.mxu0 0.0
      %820 = vmatpush1.msra.mxu0 0.0
      %821 = vmatprep.subr.mxu0 0.0
      %822 = vmatpush1.msra.mxu0 0.0
      %823 = vmatprep.subr.mxu0 0.0
      %824 = vmatpush1.msra.mxu0 0.0
      %825 = vmatprep.subr.mxu0 0.0
      %826 = vmatpush1.msra.mxu0 0.0
      %827 = vmatprep.subr.mxu0 0.0
      %828 = vmatpush1.msra.mxu0 0.0
      %829 = vmatprep.subr.mxu0 0.0
      %830 = vmatpush1.msra.mxu0 0.0
      %831 = vmatprep.mubr.f32.mxu0 0.0
      %832 = vmatmul.mubr.f32.gmra.mrb[0].mxu0 %v640
      %v833 = vpop.f32.mrb[0].mxu0
      %v834 = vadd.f32 0.0, %v833
      %v835 = vpop.f32.mrb[0].mxu0
      %836 = vmatprep.mubr.f32.mxu0 0.0
      %837 = vmatmul.mubr.f32.gmra.mrb[0].mxu0 %v642
      %v838 = vpop.f32.mrb[0].mxu0
      %v839 = vadd.f32 0.0, %v838
      %v840 = vpop.f32.mrb[0].mxu0
      %841 = vmatprep.mubr.f32.mxu0 0.0
      %842 = vmatmul.mubr.f32.gmra.mrb[0].mxu0 %v645
      %v843 = vpop.f32.mrb[0].mxu0
      %v844 = vadd.f32 0.0, %v843
      %v845 = vpop.f32.mrb[0].mxu0
      %846 = vmatprep.mubr.f32.mxu0 0.0
      %847 = vmatmul.mubr.f32.gmra.mrb[0].mxu0 %v647
      %v848 = vpop.f32.mrb[0].mxu0
      %v849 = vadd.f32 0.0, %v848
      %v850 = vpop.f32.mrb[0].mxu0
      %851 = vmatprep.mubr.f32.mxu0 0.0
      %852 = vmatmul.mubr.f32.gmra.mrb[0].mxu0 %v650
      %v853 = vpop.f32.mrb[0].mxu0
      %v854 = vadd.f32 0.0, %v853
      %v855 = vpop.f32.mrb[0].mxu0
      %856 = vmatprep.mubr.f32.mxu0 0.0
      %857 = vmatmul.mubr.f32.gmra.mrb[0].mxu0 %v652
      %v858 = vpop.f32.mrb[0].mxu0
      %v859 = vadd.f32 0.0, %v858
      %v860 = vpop.f32.mrb[0].mxu0
      %861 = vmatprep.mubr.f32.mxu0 0.0
      %862 = vmatmul.mubr.f32.gmra.mrb[0].mxu0 %v655
      %v863 = vpop.f32.mrb[0].mxu0
      %v864 = vadd.f32 0.0, %v863
      %v865 = vpop.f32.mrb[0].mxu0
      %866 = vmatprep.mubr.f32.mxu0 0.0
      %867 = vmatmul.mubr.f32.gmra.mrb[0].mxu0 %v657
      %v868 = vpop.f32.mrb[0].mxu0
      %v869 = vadd.f32 0.0, %v868
      %v870 = vpop.f32.mrb[0].mxu0
      %871 = vmatprep.mubr.f32.mxu0 0.0
      %872 = vmatmul.mubr.f32.gmra.mrb[0].mxu0 %v660
      %v873 = vpop.f32.mrb[0].mxu0
      %v874 = vadd.f32 0.0, %v873
      %v875 = vpop.f32.mrb[0].mxu0
      %876 = vmatprep.mubr.f32.mxu0 0.0
      %877 = vmatmul.mubr.f32.gmra.mrb[0].mxu0 %v662
      %v878 = vpop.f32.mrb[0].mxu0
      %v879 = vadd.f32 0.0, %v878
      %v880 = vpop.f32.mrb[0].mxu0
      %881 = vmatprep.mubr.f32.mxu0 0.0
      %882 = vmatmul.mubr.f32.gmra.mrb[0].mxu0 %v665
      %v883 = vpop.f32.mrb[0].mxu0
      %v884 = vadd.f32 0.0, %v883
      %v885 = vpop.f32.mrb[0].mxu0
      %886 = vmatprep.mubr.f32.mxu0 0.0
      %887 = vmatmul.mubr.f32.gmra.mrb[0].mxu0 %v667
      %v888 = vpop.f32.mrb[0].mxu0
      %v889 = vadd.f32 0.0, %v888
      %v890 = vpop.f32.mrb[0].mxu0
      %891 = vmatprep.mubr.f32.mxu0 0.0
      %892 = vmatmul.mubr.f32.gmra.mrb[0].mxu0 %v670
      %v893 = vpop.f32.mrb[0].mxu0
      %v894 = vadd.f32 0.0, %v893
      %v895 = vpop.f32.mrb[0].mxu0
      %896 = vmatprep.mubr.f32.mxu0 0.0
      %897 = vmatmul.mubr.f32.gmra.mrb[0].mxu0 %v672
      %v898 = vpop.f32.mrb[0].mxu0
      %v899 = vadd.f32 0.0, %v898
      %v900 = vpop.f32.mrb[0].mxu0
      %901 = vmatprep.mubr.f32.mxu0 0.0
      %902 = vmatmul.mubr.f32.gmra.mrb[0].mxu0 %v675
      %v903 = vpop.f32.mrb[0].mxu0
      %v904 = vadd.f32 0.0, %v903
      %v905 = vpop.f32.mrb[0].mxu0
      %906 = vmatprep.mubr.f32.mxu0 0.0
      %907 = vmatmul.mubr.f32.gmra.mrb[0].mxu0 %v677
      %v908 = vpop.f32.mrb[0].mxu0
      %v909 = vadd.f32 0.0, %v908
      %v910 = vpop.f32.mrb[0].mxu0
      %911 = vmatprep.mubr.f32.mxu0 0.0
      %912 = vmatmul.mubr.f32.gmra.mrb[0].mxu0 %v680
      %v913 = vpop.f32.mrb[0].mxu0
      %v914 = vadd.f32 0.0, %v913
      %v915 = vpop.f32.mrb[0].mxu0
      %916 = vmatprep.mubr.f32.mxu0 0.0
      %917 = vmatmul.mubr.f32.gmra.mrb[0].mxu0 %v682
      %v918 = vpop.f32.mrb[0].mxu0
      %v919 = vadd.f32 0.0, %v918
      %v920 = vpop.f32.mrb[0].mxu0
      %921 = vmatprep.mubr.f32.mxu0 0.0
      %922 = vmatmul.mubr.f32.gmra.mrb[0].mxu0 %v685
      %v923 = vpop.f32.mrb[0].mxu0
      %v924 = vadd.f32 0.0, %v923
      %v925 = vpop.f32.mrb[0].mxu0
      %926 = vmatprep.mubr.f32.mxu0 0.0
      %927 = vmatmul.mubr.f32.gmra.mrb[0].mxu0 %v687
      %v928 = vpop.f32.mrb[0].mxu0
      %v929 = vadd.f32 0.0, %v928
      %v930 = vpop.f32.mrb[0].mxu0
      %931 = vmatprep.mubr.f32.mxu0 0.0
      %932 = vmatmul.mubr.f32.gmra.mrb[0].mxu0 %v690
      %v933 = vpop.f32.mrb[0].mxu0
      %v934 = vadd.f32 0.0, %v933
      %v935 = vpop.f32.mrb[0].mxu0
      %936 = vmatprep.mubr.f32.mxu0 0.0
      %937 = vmatmul.mubr.f32.gmra.mrb[0].mxu0 %v692
      %v938 = vpop.f32.mrb[0].mxu0
      %v939 = vadd.f32 0.0, %v938
      %v940 = vpop.f32.mrb[0].mxu0
      %941 = vmatprep.mubr.f32.mxu0 0.0
      %942 = vmatmul.mubr.f32.gmra.mrb[0].mxu0 %v695
      %v943 = vpop.f32.mrb[0].mxu0
      %v944 = vadd.f32 0.0, %v943
      %v945 = vpop.f32.mrb[0].mxu0
      %946 = vmatprep.mubr.f32.mxu0 0.0
      %947 = vmatmul.mubr.f32.gmra.mrb[0].mxu0 %v697
      %v948 = vpop.f32.mrb[0].mxu0
      %v949 = vadd.f32 0.0, %v948
      %v950 = vpop.f32.mrb[0].mxu0
      %951 = vmatprep.mubr.f32.mxu0 0.0
      %952 = vmatmul.mubr.f32.gmra.mrb[0].mxu0 %v700
      %v953 = vpop.f32.mrb[0].mxu0
      %v954 = vadd.f32 0.0, %v953
      %v955 = vpop.f32.mrb[0].mxu0
      %956 = vmatprep.mubr.f32.mxu0 0.0
      %957 = vmatmul.mubr.f32.gmra.mrb[0].mxu0 %v702
      %v958 = vpop.f32.mrb[0].mxu0
      %v959 = vadd.f32 0.0, %v958
      %v960 = vpop.f32.mrb[0].mxu0
      %961 = vmatprep.mubr.f32.mxu0 0.0
      %962 = vmatmul.mubr.f32.gmra.mrb[0].mxu0 %v705
      %v963 = vpop.f32.mrb[0].mxu0
      %v964 = vadd.f32 0.0, %v963
      %v965 = vpop.f32.mrb[0].mxu0
      %966 = vmatprep.mubr.f32.mxu0 0.0
      %967 = vmatmul.mubr.f32.gmra.mrb[0].mxu0 %v707
      %v968 = vpop.f32.mrb[0].mxu0
      %v969 = vadd.f32 0.0, %v968
      %v970 = vpop.f32.mrb[0].mxu0
      %971 = vmatprep.mubr.f32.mxu0 0.0
      %972 = vmatmul.mubr.f32.gmra.mrb[0].mxu0 %v710
      %v973 = vpop.f32.mrb[0].mxu0
      %v974 = vadd.f32 0.0, %v973
      %v975 = vpop.f32.mrb[0].mxu0
      %976 = vmatprep.mubr.f32.mxu0 0.0
      %977 = vmatmul.mubr.f32.gmra.mrb[0].mxu0 %v712
      %v978 = vpop.f32.mrb[0].mxu0
      %v979 = vadd.f32 0.0, %v978
      %v980 = vpop.f32.mrb[0].mxu0
      %981 = vmatprep.mubr.f32.mxu0 0.0
      %982 = vmatmul.mubr.f32.gmra.mrb[0].mxu0 %v715
      %v983 = vpop.f32.mrb[0].mxu0
      %v984 = vadd.f32 0.0, %v983
      %v985 = vpop.f32.mrb[0].mxu0
      %986 = vmatprep.mubr.f32.mxu0 0.0
      %987 = vmatmul.mubr.f32.gmra.mrb[0].mxu0 %v717
      %v988 = vpop.f32.mrb[0].mxu0
      %v989 = vadd.f32 0.0, %v988
      %v990 = vpop.f32.mrb[0].mxu0
      %991 = vdwg.mxu0
      %v992 = vld [vmem:[#allocation2] sm:$0xff]
      %v993 = vld [vmem:[#allocation2 + $0x8] sm:$0xff]
      %v994 = vld [vmem:[#allocation2 + $0x10] sm:$0xff]
      %v995 = vld [vmem:[#allocation2 + $0x18] sm:$0xff]
      %v996 = vld [vmem:[#allocation2 + $0x20] sm:$0xff]
      %v997 = vld [vmem:[#allocation2 + $0x28] sm:$0xff]
      %v998 = vld [vmem:[#allocation2 + $0x30] sm:$0xff]
      %v999 = vld [vmem:[#allocation2 + $0x38] sm:$0xff]
      %v1000 = vld [vmem:[#allocation2 + $0x40] sm:$0xff]
      %v1001 = vld [vmem:[#allocation2 + $0x48] sm:$0xff]
      %v1002 = vld [vmem:[#allocation2 + $0x50] sm:$0xff]
      %v1003 = vld [vmem:[#allocation2 + $0x58] sm:$0xff]
      %v1004 = vld [vmem:[#allocation2 + $0x60] sm:$0xff]
      %v1005 = vld [vmem:[#allocation2 + $0x68] sm:$0xff]
      %v1006 = vld [vmem:[#allocation2 + $0x70] sm:$0xff]
      %v1007 = vld [vmem:[#allocation2 + $0x78] sm:$0xff]
      %v1008 = vld [vmem:[#allocation2 + $0x80] sm:$0xff]
      %v1009 = vld [vmem:[#allocation2 + $0x88] sm:$0xff]
      %v1010 = vld [vmem:[#allocation2 + $0x90] sm:$0xff]
      %v1011 = vld [vmem:[#allocation2 + $0x98] sm:$0xff]
      %v1012 = vld [vmem:[#allocation2 + $0xa0] sm:$0xff]
      %v1013 = vld [vmem:[#allocation2 + $0xa8] sm:$0xff]
      %v1014 = vld [vmem:[#allocation2 + $0xb0] sm:$0xff]
      %v1015 = vld [vmem:[#allocation2 + $0xb8] sm:$0xff]
      %v1016 = vld [vmem:[#allocation2 + $0xc0] sm:$0xff]
      %v1017 = vld [vmem:[#allocation2 + $0xc8] sm:$0xff]
      %v1018 = vld [vmem:[#allocation2 + $0xd0] sm:$0xff]
      %v1019 = vld [vmem:[#allocation2 + $0xd8] sm:$0xff]
      %v1020 = vld [vmem:[#allocation2 + $0xe0] sm:$0xff]
      %v1021 = vld [vmem:[#allocation2 + $0xe8] sm:$0xff]
      %v1022 = vld [vmem:[#allocation2 + $0xf0] sm:$0xff]
      %v1023 = vld [vmem:[#allocation2 + $0xf8] sm:$0xff]
      %v1024 = vadd.f32 %v992, %v834
      %v1025 = vadd.f32 %v993, %v839
      %v1026 = vadd.f32 %v994, %v844
      %v1027 = vadd.f32 %v995, %v849
      %v1028 = vadd.f32 %v996, %v854
      %v1029 = vadd.f32 %v997, %v859
      %v1030 = vadd.f32 %v998, %v864
      %v1031 = vadd.f32 %v999, %v869
      %v1032 = vadd.f32 %v1000, %v874
      %v1033 = vadd.f32 %v1001, %v879
      %v1034 = vadd.f32 %v1002, %v884
      %v1035 = vadd.f32 %v1003, %v889
      %v1036 = vadd.f32 %v1004, %v894
      %v1037 = vadd.f32 %v1005, %v899
      %v1038 = vadd.f32 %v1006, %v904
      %v1039 = vadd.f32 %v1007, %v909
      %v1040 = vadd.f32 %v1008, %v914
      %v1041 = vadd.f32 %v1009, %v919
      %v1042 = vadd.f32 %v1010, %v924
      %v1043 = vadd.f32 %v1011, %v929
      %v1044 = vadd.f32 %v1012, %v934
      %v1045 = vadd.f32 %v1013, %v939
      %v1046 = vadd.f32 %v1014, %v944
      %v1047 = vadd.f32 %v1015, %v949
      %v1048 = vadd.f32 %v1016, %v954
      %v1049 = vadd.f32 %v1017, %v959
      %v1050 = vadd.f32 %v1018, %v964
      %v1051 = vadd.f32 %v1019, %v969
      %v1052 = vadd.f32 %v1020, %v974
      %v1053 = vadd.f32 %v1021, %v979
      %v1054 = vadd.f32 %v1022, %v984
      %v1055 = vadd.f32 %v1023, %v989
      %1056 = vst [vmem:[#allocation2] sm:$0xff] %v1024
      %1057 = vst [vmem:[#allocation2 + $0x8] sm:$0xff] %v1025
      %1058 = vst [vmem:[#allocation2 + $0x10] sm:$0xff] %v1026
      %1059 = vst [vmem:[#allocation2 + $0x18] sm:$0xff] %v1027
      %1060 = vst [vmem:[#allocation2 + $0x20] sm:$0xff] %v1028
      %1061 = vst [vmem:[#allocation2 + $0x28] sm:$0xff] %v1029
      %1062 = vst [vmem:[#allocation2 + $0x30] sm:$0xff] %v1030
      %1063 = vst [vmem:[#allocation2 + $0x38] sm:$0xff] %v1031
      %1064 = vst [vmem:[#allocation2 + $0x40] sm:$0xff] %v1032
      %1065 = vst [vmem:[#allocation2 + $0x48] sm:$0xff] %v1033
      %1066 = vst [vmem:[#allocation2 + $0x50] sm:$0xff] %v1034
      %1067 = vst [vmem:[#allocation2 + $0x58] sm:$0xff] %v1035
      %1068 = vst [vmem:[#allocation2 + $0x60] sm:$0xff] %v1036
      %1069 = vst [vmem:[#allocation2 + $0x68] sm:$0xff] %v1037
      %1070 = vst [vmem:[#allocation2 + $0x70] sm:$0xff] %v1038
      %1071 = vst [vmem:[#allocation2 + $0x78] sm:$0xff] %v1039
      %1072 = vst [vmem:[#allocation2 + $0x80] sm:$0xff] %v1040
      %1073 = vst [vmem:[#allocation2 + $0x88] sm:$0xff] %v1041
      %1074 = vst [vmem:[#allocation2 + $0x90] sm:$0xff] %v1042
      %1075 = vst [vmem:[#allocation2 + $0x98] sm:$0xff] %v1043
      %1076 = vst [vmem:[#allocation2 + $0xa0] sm:$0xff] %v1044
      %1077 = vst [vmem:[#allocation2 + $0xa8] sm:$0xff] %v1045
      %1078 = vst [vmem:[#allocation2 + $0xb0] sm:$0xff] %v1046
      %1079 = vst [vmem:[#allocation2 + $0xb8] sm:$0xff] %v1047
      %1080 = vst [vmem:[#allocation2 + $0xc0] sm:$0xff] %v1048
      %1081 = vst [vmem:[#allocation2 + $0xc8] sm:$0xff] %v1049
      %1082 = vst [vmem:[#allocation2 + $0xd0] sm:$0xff] %v1050
      %1083 = vst [vmem:[#allocation2 + $0xd8] sm:$0xff] %v1051
      %1084 = vst [vmem:[#allocation2 + $0xe0] sm:$0xff] %v1052
      %1085 = vst [vmem:[#allocation2 + $0xe8] sm:$0xff] %v1053
      %1086 = vst [vmem:[#allocation2 + $0xf0] sm:$0xff] %v1054
      %1087 = vst [vmem:[#allocation2 + $0xf8] sm:$0xff] %v1055
      %vm1088 = vcmask 1045504
      %v1089 = vrot.slane %v268, 2
      %v1090 = vrot.slane %v269, 2
      %v1091 = vsel %vm1088, %v1089, %v1090
      %v1092 = vrot.slane %v270, 2
      %v1093 = vsel %vm1088, %v1090, %v1092
      %v1094 = vrot.slane %v271, 2
      %v1095 = vrot.slane %v272, 2
      %v1096 = vsel %vm1088, %v1094, %v1095
      %v1097 = vrot.slane %v273, 2
      %v1098 = vsel %vm1088, %v1095, %v1097
      %v1099 = vrot.slane %v274, 2
      %v1100 = vrot.slane %v275, 2
      %v1101 = vsel %vm1088, %v1099, %v1100
      %v1102 = vrot.slane %v276, 2
      %v1103 = vsel %vm1088, %v1100, %v1102
      %v1104 = vrot.slane %v277, 2
      %v1105 = vrot.slane %v278, 2
      %v1106 = vsel %vm1088, %v1104, %v1105
      %v1107 = vrot.slane %v279, 2
      %v1108 = vsel %vm1088, %v1105, %v1107
      %v1109 = vrot.slane %v280, 2
      %v1110 = vrot.slane %v281, 2
      %v1111 = vsel %vm1088, %v1109, %v1110
      %v1112 = vrot.slane %v282, 2
      %v1113 = vsel %vm1088, %v1110, %v1112
      %v1114 = vrot.slane %v283, 2
      %v1115 = vrot.slane %v284, 2
      %v1116 = vsel %vm1088, %v1114, %v1115
      %v1117 = vrot.slane %v285, 2
      %v1118 = vsel %vm1088, %v1115, %v1117
      %v1119 = vrot.slane %v286, 2
      %v1120 = vrot.slane %v287, 2
      %v1121 = vsel %vm1088, %v1119, %v1120
      %v1122 = vrot.slane %v288, 2
      %v1123 = vsel %vm1088, %v1120, %v1122
      %v1124 = vrot.slane %v289, 2
      %v1125 = vrot.slane %v290, 2
      %v1126 = vsel %vm1088, %v1124, %v1125
      %v1127 = vrot.slane %v291, 2
      %v1128 = vsel %vm1088, %v1125, %v1127
      %v1129 = vrot.slane %v292, 2
      %v1130 = vrot.slane %v293, 2
      %v1131 = vsel %vm1088, %v1129, %v1130
      %v1132 = vrot.slane %v294, 2
      %v1133 = vsel %vm1088, %v1130, %v1132
      %v1134 = vrot.slane %v295, 2
      %v1135 = vrot.slane %v296, 2
      %v1136 = vsel %vm1088, %v1134, %v1135
      %v1137 = vrot.slane %v297, 2
      %v1138 = vsel %vm1088, %v1135, %v1137
      %v1139 = vrot.slane %v298, 2
      %v1140 = vrot.slane %v299, 2
      %v1141 = vsel %vm1088, %v1139, %v1140
      %v1142 = vrot.slane %v300, 2
      %v1143 = vsel %vm1088, %v1140, %v1142
      %v1144 = vrot.slane %v301, 2
      %v1145 = vrot.slane %v302, 2
      %v1146 = vsel %vm1088, %v1144, %v1145
      %v1147 = vrot.slane %v303, 2
      %v1148 = vsel %vm1088, %v1145, %v1147
      %v1149 = vrot.slane %v304, 2
      %v1150 = vrot.slane %v305, 2
      %v1151 = vsel %vm1088, %v1149, %v1150
      %v1152 = vrot.slane %v306, 2
      %v1153 = vsel %vm1088, %v1150, %v1152
      %v1154 = vrot.slane %v307, 2
      %v1155 = vrot.slane %v308, 2
      %v1156 = vsel %vm1088, %v1154, %v1155
      %v1157 = vrot.slane %v309, 2
      %v1158 = vsel %vm1088, %v1155, %v1157
      %v1159 = vrot.slane %v310, 2
      %v1160 = vrot.slane %v311, 2
      %v1161 = vsel %vm1088, %v1159, %v1160
      %v1162 = vrot.slane %v312, 2
      %v1163 = vsel %vm1088, %v1160, %v1162
      %v1164 = vrot.slane %v313, 2
      %v1165 = vrot.slane %v314, 2
      %v1166 = vsel %vm1088, %v1164, %v1165
      %v1167 = vrot.slane %v315, 2
      %v1168 = vsel %vm1088, %v1165, %v1167
      %s1201 = scalar_lea.vmem %s247, 256
      %v1202 = vld [vmem:[%s1201] sm:$0xff]
      %v1203 = vld [vmem:[%s1201 + $0x8] sm:$0xff]
      %v1204 = vld [vmem:[%s1201 + $0x10] sm:$0xff]
      %v1205 = vld [vmem:[%s1201 + $0x18] sm:$0xff]
      %v1206 = vld [vmem:[%s1201 + $0x20] sm:$0xff]
      %v1207 = vld [vmem:[%s1201 + $0x28] sm:$0xff]
      %v1208 = vld [vmem:[%s1201 + $0x30] sm:$0xff]
      %v1209 = vld [vmem:[%s1201 + $0x38] sm:$0xff]
      %v1210 = vld [vmem:[%s1201 + $0x40] sm:$0xff]
      %v1211 = vld [vmem:[%s1201 + $0x48] sm:$0xff]
      %v1212 = vld [vmem:[%s1201 + $0x50] sm:$0xff]
      %v1213 = vld [vmem:[%s1201 + $0x58] sm:$0xff]
      %v1214 = vld [vmem:[%s1201 + $0x60] sm:$0xff]
      %v1215 = vld [vmem:[%s1201 + $0x68] sm:$0xff]
      %v1216 = vld [vmem:[%s1201 + $0x70] sm:$0xff]
      %v1217 = vld [vmem:[%s1201 + $0x78] sm:$0xff]
      %1218 = vmatprep.subr.mxu0 0.0
      %1219 = vmatpush1.msra.mxu0 %v1202
      %1220 = vmatprep.subr.mxu0 0.0
      %1221 = vmatpush1.msra.mxu0 %v1203
      %1222 = vmatprep.subr.mxu0 0.0
      %1223 = vmatpush1.msra.mxu0 %v1204
      %1224 = vmatprep.subr.mxu0 0.0
      %1225 = vmatpush1.msra.mxu0 %v1205
      %1226 = vmatprep.subr.mxu0 0.0
      %1227 = vmatpush1.msra.mxu0 %v1206
      %1228 = vmatprep.subr.mxu0 0.0
      %1229 = vmatpush1.msra.mxu0 %v1207
      %1230 = vmatprep.subr.mxu0 0.0
      %1231 = vmatpush1.msra.mxu0 %v1208
      %1232 = vmatprep.subr.mxu0 0.0
      %1233 = vmatpush1.msra.mxu0 %v1209
      %1234 = vmatprep.subr.mxu0 0.0
      %1235 = vmatpush1.msra.mxu0 %v1210
      %1236 = vmatprep.subr.mxu0 0.0
      %1237 = vmatpush1.msra.mxu0 %v1211
      %1238 = vmatprep.subr.mxu0 0.0
      %1239 = vmatpush1.msra.mxu0 %v1212
      %1240 = vmatprep.subr.mxu0 0.0
      %1241 = vmatpush1.msra.mxu0 %v1213
      %1242 = vmatprep.subr.mxu0 0.0
      %1243 = vmatpush1.msra.mxu0 %v1214
      %1244 = vmatprep.subr.mxu0 0.0
      %1245 = vmatpush1.msra.mxu0 %v1215
      %1246 = vmatprep.subr.mxu0 0.0
      %1247 = vmatpush1.msra.mxu0 %v1216
      %1248 = vmatprep.subr.mxu0 0.0
      %1249 = vmatpush1.msra.mxu0 %v1217
      %1250 = vmatprep.subr.mxu0 0.0
      %1251 = vmatpush1.msra.mxu0 0.0
      %1252 = vmatprep.subr.mxu0 0.0
      %1253 = vmatpush1.msra.mxu0 0.0
      %1254 = vmatprep.subr.mxu0 0.0
      %1255 = vmatpush1.msra.mxu0 0.0
      %1256 = vmatprep.subr.mxu0 0.0
      %1257 = vmatpush1.msra.mxu0 0.0
      %1258 = vmatprep.subr.mxu0 0.0
      %1259 = vmatpush1.msra.mxu0 0.0
      %1260 = vmatprep.subr.mxu0 0.0
      %1261 = vmatpush1.msra.mxu0 0.0
      %1262 = vmatprep.subr.mxu0 0.0
      %1263 = vmatpush1.msra.mxu0 0.0
      %1264 = vmatprep.subr.mxu0 0.0
      %1265 = vmatpush1.msra.mxu0 0.0
      %1266 = vmatprep.subr.mxu0 0.0
      %1267 = vmatpush1.msra.mxu0 0.0
      %1268 = vmatprep.subr.mxu0 0.0
      %1269 = vmatpush1.msra.mxu0 0.0
      %1270 = vmatprep.subr.mxu0 0.0
      %1271 = vmatpush1.msra.mxu0 0.0
      %1272 = vmatprep.subr.mxu0 0.0
      %1273 = vmatpush1.msra.mxu0 0.0
      %1274 = vmatprep.subr.mxu0 0.0
      %1275 = vmatpush1.msra.mxu0 0.0
      %1276 = vmatprep.subr.mxu0 0.0
      %1277 = vmatpush1.msra.mxu0 0.0
      %1278 = vmatprep.subr.mxu0 0.0
      %1279 = vmatpush1.msra.mxu0 0.0
      %1280 = vmatprep.subr.mxu0 0.0
      %1281 = vmatpush1.msra.mxu0 0.0
      %1282 = vmatprep.mubr.f32.mxu0 0.0
      %1283 = vmatmul.mubr.f32.gmra.mrb[0].mxu0 %v1091
      %v1284 = vpop.f32.mrb[0].mxu0
      %v1285 = vadd.f32 0.0, %v1284
      %v1286 = vpop.f32.mrb[0].mxu0
      %1287 = vmatprep.mubr.f32.mxu0 0.0
      %1288 = vmatmul.mubr.f32.gmra.mrb[0].mxu0 %v1093
      %v1289 = vpop.f32.mrb[0].mxu0
      %v1290 = vadd.f32 0.0, %v1289
      %v1291 = vpop.f32.mrb[0].mxu0
      %1292 = vmatprep.mubr.f32.mxu0 0.0
      %1293 = vmatmul.mubr.f32.gmra.mrb[0].mxu0 %v1096
      %v1294 = vpop.f32.mrb[0].mxu0
      %v1295 = vadd.f32 0.0, %v1294
      %v1296 = vpop.f32.mrb[0].mxu0
      %1297 = vmatprep.mubr.f32.mxu0 0.0
      %1298 = vmatmul.mubr.f32.gmra.mrb[0].mxu0 %v1098
      %v1299 = vpop.f32.mrb[0].mxu0
      %v1300 = vadd.f32 0.0, %v1299
      %v1301 = vpop.f32.mrb[0].mxu0
      %1302 = vmatprep.mubr.f32.mxu0 0.0
      %1303 = vmatmul.mubr.f32.gmra.mrb[0].mxu0 %v1101
      %v1304 = vpop.f32.mrb[0].mxu0
      %v1305 = vadd.f32 0.0, %v1304
      %v1306 = vpop.f32.mrb[0].mxu0
      %1307 = vmatprep.mubr.f32.mxu0 0.0
      %1308 = vmatmul.mubr.f32.gmra.mrb[0].mxu0 %v1103
      %v1309 = vpop.f32.mrb[0].mxu0
      %v1310 = vadd.f32 0.0, %v1309
      %v1311 = vpop.f32.mrb[0].mxu0
      %1312 = vmatprep.mubr.f32.mxu0 0.0
      %1313 = vmatmul.mubr.f32.gmra.mrb[0].mxu0 %v1106
      %v1314 = vpop.f32.mrb[0].mxu0
      %v1315 = vadd.f32 0.0, %v1314
      %v1316 = vpop.f32.mrb[0].mxu0
      %1317 = vmatprep.mubr.f32.mxu0 0.0
      %1318 = vmatmul.mubr.f32.gmra.mrb[0].mxu0 %v1108
      %v1319 = vpop.f32.mrb[0].mxu0
      %v1320 = vadd.f32 0.0, %v1319
      %v1321 = vpop.f32.mrb[0].mxu0
      %1322 = vmatprep.mubr.f32.mxu0 0.0
      %1323 = vmatmul.mubr.f32.gmra.mrb[0].mxu0 %v1111
      %v1324 = vpop.f32.mrb[0].mxu0
      %v1325 = vadd.f32 0.0, %v1324
      %v1326 = vpop.f32.mrb[0].mxu0
      %1327 = vmatprep.mubr.f32.mxu0 0.0
      %1328 = vmatmul.mubr.f32.gmra.mrb[0].mxu0 %v1113
      %v1329 = vpop.f32.mrb[0].mxu0
      %v1330 = vadd.f32 0.0, %v1329
      %v1331 = vpop.f32.mrb[0].mxu0
      %1332 = vmatprep.mubr.f32.mxu0 0.0
      %1333 = vmatmul.mubr.f32.gmra.mrb[0].mxu0 %v1116
      %v1334 = vpop.f32.mrb[0].mxu0
      %v1335 = vadd.f32 0.0, %v1334
      %v1336 = vpop.f32.mrb[0].mxu0
      %1337 = vmatprep.mubr.f32.mxu0 0.0
      %1338 = vmatmul.mubr.f32.gmra.mrb[0].mxu0 %v1118
      %v1339 = vpop.f32.mrb[0].mxu0
      %v1340 = vadd.f32 0.0, %v1339
      %v1341 = vpop.f32.mrb[0].mxu0
      %1342 = vmatprep.mubr.f32.mxu0 0.0
      %1343 = vmatmul.mubr.f32.gmra.mrb[0].mxu0 %v1121
      %v1344 = vpop.f32.mrb[0].mxu0
      %v1345 = vadd.f32 0.0, %v1344
      %v1346 = vpop.f32.mrb[0].mxu0
      %1347 = vmatprep.mubr.f32.mxu0 0.0
      %1348 = vmatmul.mubr.f32.gmra.mrb[0].mxu0 %v1123
      %v1349 = vpop.f32.mrb[0].mxu0
      %v1350 = vadd.f32 0.0, %v1349
      %v1351 = vpop.f32.mrb[0].mxu0
      %1352 = vmatprep.mubr.f32.mxu0 0.0
      %1353 = vmatmul.mubr.f32.gmra.mrb[0].mxu0 %v1126
      %v1354 = vpop.f32.mrb[0].mxu0
      %v1355 = vadd.f32 0.0, %v1354
      %v1356 = vpop.f32.mrb[0].mxu0
      %1357 = vmatprep.mubr.f32.mxu0 0.0
      %1358 = vmatmul.mubr.f32.gmra.mrb[0].mxu0 %v1128
      %v1359 = vpop.f32.mrb[0].mxu0
      %v1360 = vadd.f32 0.0, %v1359
      %v1361 = vpop.f32.mrb[0].mxu0
      %1362 = vmatprep.mubr.f32.mxu0 0.0
      %1363 = vmatmul.mubr.f32.gmra.mrb[0].mxu0 %v1131
      %v1364 = vpop.f32.mrb[0].mxu0
      %v1365 = vadd.f32 0.0, %v1364
      %v1366 = vpop.f32.mrb[0].mxu0
      %1367 = vmatprep.mubr.f32.mxu0 0.0
      %1368 = vmatmul.mubr.f32.gmra.mrb[0].mxu0 %v1133
      %v1369 = vpop.f32.mrb[0].mxu0
      %v1370 = vadd.f32 0.0, %v1369
      %v1371 = vpop.f32.mrb[0].mxu0
      %1372 = vmatprep.mubr.f32.mxu0 0.0
      %1373 = vmatmul.mubr.f32.gmra.mrb[0].mxu0 %v1136
      %v1374 = vpop.f32.mrb[0].mxu0
      %v1375 = vadd.f32 0.0, %v1374
      %v1376 = vpop.f32.mrb[0].mxu0
      %1377 = vmatprep.mubr.f32.mxu0 0.0
      %1378 = vmatmul.mubr.f32.gmra.mrb[0].mxu0 %v1138
      %v1379 = vpop.f32.mrb[0].mxu0
      %v1380 = vadd.f32 0.0, %v1379
      %v1381 = vpop.f32.mrb[0].mxu0
      %1382 = vmatprep.mubr.f32.mxu0 0.0
      %1383 = vmatmul.mubr.f32.gmra.mrb[0].mxu0 %v1141
      %v1384 = vpop.f32.mrb[0].mxu0
      %v1385 = vadd.f32 0.0, %v1384
      %v1386 = vpop.f32.mrb[0].mxu0
      %1387 = vmatprep.mubr.f32.mxu0 0.0
      %1388 = vmatmul.mubr.f32.gmra.mrb[0].mxu0 %v1143
      %v1389 = vpop.f32.mrb[0].mxu0
      %v1390 = vadd.f32 0.0, %v1389
      %v1391 = vpop.f32.mrb[0].mxu0
      %1392 = vmatprep.mubr.f32.mxu0 0.0
      %1393 = vmatmul.mubr.f32.gmra.mrb[0].mxu0 %v1146
      %v1394 = vpop.f32.mrb[0].mxu0
      %v1395 = vadd.f32 0.0, %v1394
      %v1396 = vpop.f32.mrb[0].mxu0
      %1397 = vmatprep.mubr.f32.mxu0 0.0
      %1398 = vmatmul.mubr.f32.gmra.mrb[0].mxu0 %v1148
      %v1399 = vpop.f32.mrb[0].mxu0
      %v1400 = vadd.f32 0.0, %v1399
      %v1401 = vpop.f32.mrb[0].mxu0
      %1402 = vmatprep.mubr.f32.mxu0 0.0
      %1403 = vmatmul.mubr.f32.gmra.mrb[0].mxu0 %v1151
      %v1404 = vpop.f32.mrb[0].mxu0
      %v1405 = vadd.f32 0.0, %v1404
      %v1406 = vpop.f32.mrb[0].mxu0
      %1407 = vmatprep.mubr.f32.mxu0 0.0
      %1408 = vmatmul.mubr.f32.gmra.mrb[0].mxu0 %v1153
      %v1409 = vpop.f32.mrb[0].mxu0
      %v1410 = vadd.f32 0.0, %v1409
      %v1411 = vpop.f32.mrb[0].mxu0
      %1412 = vmatprep.mubr.f32.mxu0 0.0
      %1413 = vmatmul.mubr.f32.gmra.mrb[0].mxu0 %v1156
      %v1414 = vpop.f32.mrb[0].mxu0
      %v1415 = vadd.f32 0.0, %v1414
      %v1416 = vpop.f32.mrb[0].mxu0
      %1417 = vmatprep.mubr.f32.mxu0 0.0
      %1418 = vmatmul.mubr.f32.gmra.mrb[0].mxu0 %v1158
      %v1419 = vpop.f32.mrb[0].mxu0
      %v1420 = vadd.f32 0.0, %v1419
      %v1421 = vpop.f32.mrb[0].mxu0
      %1422 = vmatprep.mubr.f32.mxu0 0.0
      %1423 = vmatmul.mubr.f32.gmra.mrb[0].mxu0 %v1161
      %v1424 = vpop.f32.mrb[0].mxu0
      %v1425 = vadd.f32 0.0, %v1424
      %v1426 = vpop.f32.mrb[0].mxu0
      %1427 = vmatprep.mubr.f32.mxu0 0.0
      %1428 = vmatmul.mubr.f32.gmra.mrb[0].mxu0 %v1163
      %v1429 = vpop.f32.mrb[0].mxu0
      %v1430 = vadd.f32 0.0, %v1429
      %v1431 = vpop.f32.mrb[0].mxu0
      %1432 = vmatprep.mubr.f32.mxu0 0.0
      %1433 = vmatmul.mubr.f32.gmra.mrb[0].mxu0 %v1166
      %v1434 = vpop.f32.mrb[0].mxu0
      %v1435 = vadd.f32 0.0, %v1434
      %v1436 = vpop.f32.mrb[0].mxu0
      %1437 = vmatprep.mubr.f32.mxu0 0.0
      %1438 = vmatmul.mubr.f32.gmra.mrb[0].mxu0 %v1168
      %v1439 = vpop.f32.mrb[0].mxu0
      %v1440 = vadd.f32 0.0, %v1439
      %v1441 = vpop.f32.mrb[0].mxu0
      %1442 = vdwg.mxu0
      %v1443 = vld [vmem:[#allocation2] sm:$0xff]
      %v1444 = vld [vmem:[#allocation2 + $0x8] sm:$0xff]
      %v1445 = vld [vmem:[#allocation2 + $0x10] sm:$0xff]
      %v1446 = vld [vmem:[#allocation2 + $0x18] sm:$0xff]
      %v1447 = vld [vmem:[#allocation2 + $0x20] sm:$0xff]
      %v1448 = vld [vmem:[#allocation2 + $0x28] sm:$0xff]
      %v1449 = vld [vmem:[#allocation2 + $0x30] sm:$0xff]
      %v1450 = vld [vmem:[#allocation2 + $0x38] sm:$0xff]
      %v1451 = vld [vmem:[#allocation2 + $0x40] sm:$0xff]
      %v1452 = vld [vmem:[#allocation2 + $0x48] sm:$0xff]
      %v1453 = vld [vmem:[#allocation2 + $0x50] sm:$0xff]
      %v1454 = vld [vmem:[#allocation2 + $0x58] sm:$0xff]
      %v1455 = vld [vmem:[#allocation2 + $0x60] sm:$0xff]
      %v1456 = vld [vmem:[#allocation2 + $0x68] sm:$0xff]
      %v1457 = vld [vmem:[#allocation2 + $0x70] sm:$0xff]
      %v1458 = vld [vmem:[#allocation2 + $0x78] sm:$0xff]
      %v1459 = vld [vmem:[#allocation2 + $0x80] sm:$0xff]
      %v1460 = vld [vmem:[#allocation2 + $0x88] sm:$0xff]
      %v1461 = vld [vmem:[#allocation2 + $0x90] sm:$0xff]
      %v1462 = vld [vmem:[#allocation2 + $0x98] sm:$0xff]
      %v1463 = vld [vmem:[#allocation2 + $0xa0] sm:$0xff]
      %v1464 = vld [vmem:[#allocation2 + $0xa8] sm:$0xff]
      %v1465 = vld [vmem:[#allocation2 + $0xb0] sm:$0xff]
      %v1466 = vld [vmem:[#allocation2 + $0xb8] sm:$0xff]
      %v1467 = vld [vmem:[#allocation2 + $0xc0] sm:$0xff]
      %v1468 = vld [vmem:[#allocation2 + $0xc8] sm:$0xff]
      %v1469 = vld [vmem:[#allocation2 + $0xd0] sm:$0xff]
      %v1470 = vld [vmem:[#allocation2 + $0xd8] sm:$0xff]
      %v1471 = vld [vmem:[#allocation2 + $0xe0] sm:$0xff]
      %v1472 = vld [vmem:[#allocation2 + $0xe8] sm:$0xff]
      %v1473 = vld [vmem:[#allocation2 + $0xf0] sm:$0xff]
      %v1474 = vld [vmem:[#allocation2 + $0xf8] sm:$0xff]
      %v1475 = vadd.f32 %v1443, %v1285
      %v1476 = vadd.f32 %v1444, %v1290
      %v1477 = vadd.f32 %v1445, %v1295
      %v1478 = vadd.f32 %v1446, %v1300
      %v1479 = vadd.f32 %v1447, %v1305
      %v1480 = vadd.f32 %v1448, %v1310
      %v1481 = vadd.f32 %v1449, %v1315
      %v1482 = vadd.f32 %v1450, %v1320
      %v1483 = vadd.f32 %v1451, %v1325
      %v1484 = vadd.f32 %v1452, %v1330
      %v1485 = vadd.f32 %v1453, %v1335
      %v1486 = vadd.f32 %v1454, %v1340
      %v1487 = vadd.f32 %v1455, %v1345
      %v1488 = vadd.f32 %v1456, %v1350
      %v1489 = vadd.f32 %v1457, %v1355
      %v1490 = vadd.f32 %v1458, %v1360
      %v1491 = vadd.f32 %v1459, %v1365
      %v1492 = vadd.f32 %v1460, %v1370
      %v1493 = vadd.f32 %v1461, %v1375
      %v1494 = vadd.f32 %v1462, %v1380
      %v1495 = vadd.f32 %v1463, %v1385
      %v1496 = vadd.f32 %v1464, %v1390
      %v1497 = vadd.f32 %v1465, %v1395
      %v1498 = vadd.f32 %v1466, %v1400
      %v1499 = vadd.f32 %v1467, %v1405
      %v1500 = vadd.f32 %v1468, %v1410
      %v1501 = vadd.f32 %v1469, %v1415
      %v1502 = vadd.f32 %v1470, %v1420
      %v1503 = vadd.f32 %v1471, %v1425
      %v1504 = vadd.f32 %v1472, %v1430
      %v1505 = vadd.f32 %v1473, %v1435
      %v1506 = vadd.f32 %v1474, %v1440
      %1507 = vst [vmem:[#allocation2] sm:$0xff] %v1475
      %1508 = vst [vmem:[#allocation2 + $0x8] sm:$0xff] %v1476
      %1509 = vst [vmem:[#allocation2 + $0x10] sm:$0xff] %v1477
      %1510 = vst [vmem:[#allocation2 + $0x18] sm:$0xff] %v1478
      %1511 = vst [vmem:[#allocation2 + $0x20] sm:$0xff] %v1479
      %1512 = vst [vmem:[#allocation2 + $0x28] sm:$0xff] %v1480
      %1513 = vst [vmem:[#allocation2 + $0x30] sm:$0xff] %v1481
      %1514 = vst [vmem:[#allocation2 + $0x38] sm:$0xff] %v1482
      %1515 = vst [vmem:[#allocation2 + $0x40] sm:$0xff] %v1483
      %1516 = vst [vmem:[#allocation2 + $0x48] sm:$0xff] %v1484
      %1517 = vst [vmem:[#allocation2 + $0x50] sm:$0xff] %v1485
      %1518 = vst [vmem:[#allocation2 + $0x58] sm:$0xff] %v1486
      %1519 = vst [vmem:[#allocation2 + $0x60] sm:$0xff] %v1487
      %1520 = vst [vmem:[#allocation2 + $0x68] sm:$0xff] %v1488
      %1521 = vst [vmem:[#allocation2 + $0x70] sm:$0xff] %v1489
      %1522 = vst [vmem:[#allocation2 + $0x78] sm:$0xff] %v1490
      %1523 = vst [vmem:[#allocation2 + $0x80] sm:$0xff] %v1491
      %1524 = vst [vmem:[#allocation2 + $0x88] sm:$0xff] %v1492
      %1525 = vst [vmem:[#allocation2 + $0x90] sm:$0xff] %v1493
      %1526 = vst [vmem:[#allocation2 + $0x98] sm:$0xff] %v1494
      %1527 = vst [vmem:[#allocation2 + $0xa0] sm:$0xff] %v1495
      %1528 = vst [vmem:[#allocation2 + $0xa8] sm:$0xff] %v1496
      %1529 = vst [vmem:[#allocation2 + $0xb0] sm:$0xff] %v1497
      %1530 = vst [vmem:[#allocation2 + $0xb8] sm:$0xff] %v1498
      %1531 = vst [vmem:[#allocation2 + $0xc0] sm:$0xff] %v1499
      %1532 = vst [vmem:[#allocation2 + $0xc8] sm:$0xff] %v1500
      %1533 = vst [vmem:[#allocation2 + $0xd0] sm:$0xff] %v1501
      %1534 = vst [vmem:[#allocation2 + $0xd8] sm:$0xff] %v1502
      %1535 = vst [vmem:[#allocation2 + $0xe0] sm:$0xff] %v1503
      %1536 = vst [vmem:[#allocation2 + $0xe8] sm:$0xff] %v1504
      %1537 = vst [vmem:[#allocation2 + $0xf0] sm:$0xff] %v1505
      %1538 = vst [vmem:[#allocation2 + $0xf8] sm:$0xff] %v1506
      %s1539 = scalar_lea.vmem %s243, 24
      %v1540 = vld [vmem:[%s1539] sm:$0xff]
      %v1541 = vld [vmem:[%s1539 + $0x8] sm:$0xff]
      %v1542 = vld [vmem:[%s1539 + $0x10] sm:$0x3]
      %v1543 = vld [vmem:[%s1539 + $0x18] sm:$0xff]
      %v1544 = vld [vmem:[%s1539 + $0x20] sm:$0xff]
      %v1545 = vld [vmem:[%s1539 + $0x28] sm:$0x3]
      %v1546 = vld [vmem:[%s1539 + $0x30] sm:$0xff]
      %v1547 = vld [vmem:[%s1539 + $0x38] sm:$0xff]
      %v1548 = vld [vmem:[%s1539 + $0x40] sm:$0x3]
      %v1549 = vld [vmem:[%s1539 + $0x48] sm:$0xff]
      %v1550 = vld [vmem:[%s1539 + $0x50] sm:$0xff]
      %v1551 = vld [vmem:[%s1539 + $0x58] sm:$0x3]
      %v1552 = vld [vmem:[%s1539 + $0x60] sm:$0xff]
      %v1553 = vld [vmem:[%s1539 + $0x68] sm:$0xff]
      %v1554 = vld [vmem:[%s1539 + $0x70] sm:$0x3]
      %v1555 = vld [vmem:[%s1539 + $0x78] sm:$0xff]
      %v1556 = vld [vmem:[%s1539 + $0x80] sm:$0xff]
      %v1557 = vld [vmem:[%s1539 + $0x88] sm:$0x3]
      %v1558 = vld [vmem:[%s1539 + $0x90] sm:$0xff]
      %v1559 = vld [vmem:[%s1539 + $0x98] sm:$0xff]
      %v1560 = vld [vmem:[%s1539 + $0xa0] sm:$0x3]
      %v1561 = vld [vmem:[%s1539 + $0xa8] sm:$0xff]
      %v1562 = vld [vmem:[%s1539 + $0xb0] sm:$0xff]
      %v1563 = vld [vmem:[%s1539 + $0xb8] sm:$0x3]
      %v1564 = vld [vmem:[%s1539 + $0xc0] sm:$0xff]
      %v1565 = vld [vmem:[%s1539 + $0xc8] sm:$0xff]
      %v1566 = vld [vmem:[%s1539 + $0xd0] sm:$0x3]
      %v1567 = vld [vmem:[%s1539 + $0xd8] sm:$0xff]
      %v1568 = vld [vmem:[%s1539 + $0xe0] sm:$0xff]
      %v1569 = vld [vmem:[%s1539 + $0xe8] sm:$0x3]
      %v1570 = vld [vmem:[%s1539 + $0xf0] sm:$0xff]
      %v1571 = vld [vmem:[%s1539 + $0xf8] sm:$0xff]
      %v1572 = vld [vmem:[%s1539 + $0x100] sm:$0x3]
      %v1573 = vld [vmem:[%s1539 + $0x108] sm:$0xff]
      %v1574 = vld [vmem:[%s1539 + $0x110] sm:$0xff]
      %v1575 = vld [vmem:[%s1539 + $0x118] sm:$0x3]
      %v1576 = vld [vmem:[%s1539 + $0x120] sm:$0xff]
      %v1577 = vld [vmem:[%s1539 + $0x128] sm:$0xff]
      %v1578 = vld [vmem:[%s1539 + $0x130] sm:$0x3]
      %v1579 = vld [vmem:[%s1539 + $0x138] sm:$0xff]
      %v1580 = vld [vmem:[%s1539 + $0x140] sm:$0xff]
      %v1581 = vld [vmem:[%s1539 + $0x148] sm:$0x3]
      %v1582 = vld [vmem:[%s1539 + $0x150] sm:$0xff]
      %v1583 = vld [vmem:[%s1539 + $0x158] sm:$0xff]
      %v1584 = vld [vmem:[%s1539 + $0x160] sm:$0x3]
      %v1585 = vld [vmem:[%s1539 + $0x168] sm:$0xff]
      %v1586 = vld [vmem:[%s1539 + $0x170] sm:$0xff]
      %v1587 = vld [vmem:[%s1539 + $0x178] sm:$0x3]
      %s1588 = scalar_lea.vmem %s247, 384
      %v1589 = vld [vmem:[%s1588] sm:$0xff]
      %v1590 = vld [vmem:[%s1588 + $0x8] sm:$0xff]
      %v1591 = vld [vmem:[%s1588 + $0x10] sm:$0xff]
      %v1592 = vld [vmem:[%s1588 + $0x18] sm:$0xff]
      %v1593 = vld [vmem:[%s1588 + $0x20] sm:$0xff]
      %v1594 = vld [vmem:[%s1588 + $0x28] sm:$0xff]
      %v1595 = vld [vmem:[%s1588 + $0x30] sm:$0xff]
      %v1596 = vld [vmem:[%s1588 + $0x38] sm:$0xff]
      %v1597 = vld [vmem:[%s1588 + $0x40] sm:$0xff]
      %v1598 = vld [vmem:[%s1588 + $0x48] sm:$0xff]
      %v1599 = vld [vmem:[%s1588 + $0x50] sm:$0xff]
      %v1600 = vld [vmem:[%s1588 + $0x58] sm:$0xff]
      %v1601 = vld [vmem:[%s1588 + $0x60] sm:$0xff]
      %v1602 = vld [vmem:[%s1588 + $0x68] sm:$0xff]
      %v1603 = vld [vmem:[%s1588 + $0x70] sm:$0xff]
      %v1604 = vld [vmem:[%s1588 + $0x78] sm:$0xff]
      %1605 = vmatprep.subr.mxu0 0.0
      %1606 = vmatpush1.msra.mxu0 %v1589
      %1607 = vmatprep.subr.mxu0 0.0
      %1608 = vmatpush1.msra.mxu0 %v1590
      %1609 = vmatprep.subr.mxu0 0.0
      %1610 = vmatpush1.msra.mxu0 %v1591
      %1611 = vmatprep.subr.mxu0 0.0
      %1612 = vmatpush1.msra.mxu0 %v1592
      %1613 = vmatprep.subr.mxu0 0.0
      %1614 = vmatpush1.msra.mxu0 %v1593
      %1615 = vmatprep.subr.mxu0 0.0
      %1616 = vmatpush1.msra.mxu0 %v1594
      %1617 = vmatprep.subr.mxu0 0.0
      %1618 = vmatpush1.msra.mxu0 %v1595
      %1619 = vmatprep.subr.mxu0 0.0
      %1620 = vmatpush1.msra.mxu0 %v1596
      %1621 = vmatprep.subr.mxu0 0.0
      %1622 = vmatpush1.msra.mxu0 %v1597
      %1623 = vmatprep.subr.mxu0 0.0
      %1624 = vmatpush1.msra.mxu0 %v1598
      %1625 = vmatprep.subr.mxu0 0.0
      %1626 = vmatpush1.msra.mxu0 %v1599
      %1627 = vmatprep.subr.mxu0 0.0
      %1628 = vmatpush1.msra.mxu0 %v1600
      %1629 = vmatprep.subr.mxu0 0.0
      %1630 = vmatpush1.msra.mxu0 %v1601
      %1631 = vmatprep.subr.mxu0 0.0
      %1632 = vmatpush1.msra.mxu0 %v1602
      %1633 = vmatprep.subr.mxu0 0.0
      %1634 = vmatpush1.msra.mxu0 %v1603
      %1635 = vmatprep.subr.mxu0 0.0
      %1636 = vmatpush1.msra.mxu0 %v1604
      %1637 = vmatprep.subr.mxu0 0.0
      %1638 = vmatpush1.msra.mxu0 0.0
      %1639 = vmatprep.subr.mxu0 0.0
      %1640 = vmatpush1.msra.mxu0 0.0
      %1641 = vmatprep.subr.mxu0 0.0
      %1642 = vmatpush1.msra.mxu0 0.0
      %1643 = vmatprep.subr.mxu0 0.0
      %1644 = vmatpush1.msra.mxu0 0.0
      %1645 = vmatprep.subr.mxu0 0.0
      %1646 = vmatpush1.msra.mxu0 0.0
      %1647 = vmatprep.subr.mxu0 0.0
      %1648 = vmatpush1.msra.mxu0 0.0
      %1649 = vmatprep.subr.mxu0 0.0
      %1650 = vmatpush1.msra.mxu0 0.0
      %1651 = vmatprep.subr.mxu0 0.0
      %1652 = vmatpush1.msra.mxu0 0.0
      %1653 = vmatprep.subr.mxu0 0.0
      %1654 = vmatpush1.msra.mxu0 0.0
      %1655 = vmatprep.subr.mxu0 0.0
      %1656 = vmatpush1.msra.mxu0 0.0
      %1657 = vmatprep.subr.mxu0 0.0
      %1658 = vmatpush1.msra.mxu0 0.0
      %1659 = vmatprep.subr.mxu0 0.0
      %1660 = vmatpush1.msra.mxu0 0.0
      %1661 = vmatprep.subr.mxu0 0.0
      %1662 = vmatpush1.msra.mxu0 0.0
      %1663 = vmatprep.subr.mxu0 0.0
      %1664 = vmatpush1.msra.mxu0 0.0
      %1665 = vmatprep.subr.mxu0 0.0
      %1666 = vmatpush1.msra.mxu0 0.0
      %1667 = vmatprep.subr.mxu0 0.0
      %1668 = vmatpush1.msra.mxu0 0.0
      %1669 = vmatprep.mubr.f32.mxu0 0.0
      %1670 = vmatmul.mubr.f32.gmra.mrb[0].mxu0 %v1540
      %v1671 = vpop.f32.mrb[0].mxu0
      %v1672 = vadd.f32 0.0, %v1671
      %v1673 = vpop.f32.mrb[0].mxu0
      %1674 = vmatprep.mubr.f32.mxu0 0.0
      %1675 = vmatmul.mubr.f32.gmra.mrb[0].mxu0 %v1541
      %v1676 = vpop.f32.mrb[0].mxu0
      %v1677 = vadd.f32 0.0, %v1676
      %v1678 = vpop.f32.mrb[0].mxu0
      %1679 = vmatprep.mubr.f32.mxu0 0.0
      %1680 = vmatmul.mubr.f32.gmra.mrb[0].mxu0 %v1543
      %v1681 = vpop.f32.mrb[0].mxu0
      %v1682 = vadd.f32 0.0, %v1681
      %v1683 = vpop.f32.mrb[0].mxu0
      %1684 = vmatprep.mubr.f32.mxu0 0.0
      %1685 = vmatmul.mubr.f32.gmra.mrb[0].mxu0 %v1544
      %v1686 = vpop.f32.mrb[0].mxu0
      %v1687 = vadd.f32 0.0, %v1686
      %v1688 = vpop.f32.mrb[0].mxu0
      %1689 = vmatprep.mubr.f32.mxu0 0.0
      %1690 = vmatmul.mubr.f32.gmra.mrb[0].mxu0 %v1546
      %v1691 = vpop.f32.mrb[0].mxu0
      %v1692 = vadd.f32 0.0, %v1691
      %v1693 = vpop.f32.mrb[0].mxu0
      %1694 = vmatprep.mubr.f32.mxu0 0.0
      %1695 = vmatmul.mubr.f32.gmra.mrb[0].mxu0 %v1547
      %v1696 = vpop.f32.mrb[0].mxu0
      %v1697 = vadd.f32 0.0, %v1696
      %v1698 = vpop.f32.mrb[0].mxu0
      %1699 = vmatprep.mubr.f32.mxu0 0.0
      %1700 = vmatmul.mubr.f32.gmra.mrb[0].mxu0 %v1549
      %v1701 = vpop.f32.mrb[0].mxu0
      %v1702 = vadd.f32 0.0, %v1701
      %v1703 = vpop.f32.mrb[0].mxu0
      %1704 = vmatprep.mubr.f32.mxu0 0.0
      %1705 = vmatmul.mubr.f32.gmra.mrb[0].mxu0 %v1550
      %v1706 = vpop.f32.mrb[0].mxu0
      %v1707 = vadd.f32 0.0, %v1706
      %v1708 = vpop.f32.mrb[0].mxu0
      %1709 = vmatprep.mubr.f32.mxu0 0.0
      %1710 = vmatmul.mubr.f32.gmra.mrb[0].mxu0 %v1552
      %v1711 = vpop.f32.mrb[0].mxu0
      %v1712 = vadd.f32 0.0, %v1711
      %v1713 = vpop.f32.mrb[0].mxu0
      %1714 = vmatprep.mubr.f32.mxu0 0.0
      %1715 = vmatmul.mubr.f32.gmra.mrb[0].mxu0 %v1553
      %v1716 = vpop.f32.mrb[0].mxu0
      %v1717 = vadd.f32 0.0, %v1716
      %v1718 = vpop.f32.mrb[0].mxu0
      %1719 = vmatprep.mubr.f32.mxu0 0.0
      %1720 = vmatmul.mubr.f32.gmra.mrb[0].mxu0 %v1555
      %v1721 = vpop.f32.mrb[0].mxu0
      %v1722 = vadd.f32 0.0, %v1721
      %v1723 = vpop.f32.mrb[0].mxu0
      %1724 = vmatprep.mubr.f32.mxu0 0.0
      %1725 = vmatmul.mubr.f32.gmra.mrb[0].mxu0 %v1556
      %v1726 = vpop.f32.mrb[0].mxu0
      %v1727 = vadd.f32 0.0, %v1726
      %v1728 = vpop.f32.mrb[0].mxu0
      %1729 = vmatprep.mubr.f32.mxu0 0.0
      %1730 = vmatmul.mubr.f32.gmra.mrb[0].mxu0 %v1558
      %v1731 = vpop.f32.mrb[0].mxu0
      %v1732 = vadd.f32 0.0, %v1731
      %v1733 = vpop.f32.mrb[0].mxu0
      %1734 = vmatprep.mubr.f32.mxu0 0.0
      %1735 = vmatmul.mubr.f32.gmra.mrb[0].mxu0 %v1559
      %v1736 = vpop.f32.mrb[0].mxu0
      %v1737 = vadd.f32 0.0, %v1736
      %v1738 = vpop.f32.mrb[0].mxu0
      %1739 = vmatprep.mubr.f32.mxu0 0.0
      %1740 = vmatmul.mubr.f32.gmra.mrb[0].mxu0 %v1561
      %v1741 = vpop.f32.mrb[0].mxu0
      %v1742 = vadd.f32 0.0, %v1741
      %v1743 = vpop.f32.mrb[0].mxu0
      %1744 = vmatprep.mubr.f32.mxu0 0.0
      %1745 = vmatmul.mubr.f32.gmra.mrb[0].mxu0 %v1562
      %v1746 = vpop.f32.mrb[0].mxu0
      %v1747 = vadd.f32 0.0, %v1746
      %v1748 = vpop.f32.mrb[0].mxu0
      %1749 = vmatprep.mubr.f32.mxu0 0.0
      %1750 = vmatmul.mubr.f32.gmra.mrb[0].mxu0 %v1564
      %v1751 = vpop.f32.mrb[0].mxu0
      %v1752 = vadd.f32 0.0, %v1751
      %v1753 = vpop.f32.mrb[0].mxu0
      %1754 = vmatprep.mubr.f32.mxu0 0.0
      %1755 = vmatmul.mubr.f32.gmra.mrb[0].mxu0 %v1565
      %v1756 = vpop.f32.mrb[0].mxu0
      %v1757 = vadd.f32 0.0, %v1756
      %v1758 = vpop.f32.mrb[0].mxu0
      %1759 = vmatprep.mubr.f32.mxu0 0.0
      %1760 = vmatmul.mubr.f32.gmra.mrb[0].mxu0 %v1567
      %v1761 = vpop.f32.mrb[0].mxu0
      %v1762 = vadd.f32 0.0, %v1761
      %v1763 = vpop.f32.mrb[0].mxu0
      %1764 = vmatprep.mubr.f32.mxu0 0.0
      %1765 = vmatmul.mubr.f32.gmra.mrb[0].mxu0 %v1568
      %v1766 = vpop.f32.mrb[0].mxu0
      %v1767 = vadd.f32 0.0, %v1766
      %v1768 = vpop.f32.mrb[0].mxu0
      %1769 = vmatprep.mubr.f32.mxu0 0.0
      %1770 = vmatmul.mubr.f32.gmra.mrb[0].mxu0 %v1570
      %v1771 = vpop.f32.mrb[0].mxu0
      %v1772 = vadd.f32 0.0, %v1771
      %v1773 = vpop.f32.mrb[0].mxu0
      %1774 = vmatprep.mubr.f32.mxu0 0.0
      %1775 = vmatmul.mubr.f32.gmra.mrb[0].mxu0 %v1571
      %v1776 = vpop.f32.mrb[0].mxu0
      %v1777 = vadd.f32 0.0, %v1776
      %v1778 = vpop.f32.mrb[0].mxu0
      %1779 = vmatprep.mubr.f32.mxu0 0.0
      %1780 = vmatmul.mubr.f32.gmra.mrb[0].mxu0 %v1573
      %v1781 = vpop.f32.mrb[0].mxu0
      %v1782 = vadd.f32 0.0, %v1781
      %v1783 = vpop.f32.mrb[0].mxu0
      %1784 = vmatprep.mubr.f32.mxu0 0.0
      %1785 = vmatmul.mubr.f32.gmra.mrb[0].mxu0 %v1574
      %v1786 = vpop.f32.mrb[0].mxu0
      %v1787 = vadd.f32 0.0, %v1786
      %v1788 = vpop.f32.mrb[0].mxu0
      %1789 = vmatprep.mubr.f32.mxu0 0.0
      %1790 = vmatmul.mubr.f32.gmra.mrb[0].mxu0 %v1576
      %v1791 = vpop.f32.mrb[0].mxu0
      %v1792 = vadd.f32 0.0, %v1791
      %v1793 = vpop.f32.mrb[0].mxu0
      %1794 = vmatprep.mubr.f32.mxu0 0.0
      %1795 = vmatmul.mubr.f32.gmra.mrb[0].mxu0 %v1577
      %v1796 = vpop.f32.mrb[0].mxu0
      %v1797 = vadd.f32 0.0, %v1796
      %v1798 = vpop.f32.mrb[0].mxu0
      %1799 = vmatprep.mubr.f32.mxu0 0.0
      %1800 = vmatmul.mubr.f32.gmra.mrb[0].mxu0 %v1579
      %v1801 = vpop.f32.mrb[0].mxu0
      %v1802 = vadd.f32 0.0, %v1801
      %v1803 = vpop.f32.mrb[0].mxu0
      %1804 = vmatprep.mubr.f32.mxu0 0.0
      %1805 = vmatmul.mubr.f32.gmra.mrb[0].mxu0 %v1580
      %v1806 = vpop.f32.mrb[0].mxu0
      %v1807 = vadd.f32 0.0, %v1806
      %v1808 = vpop.f32.mrb[0].mxu0
      %1809 = vmatprep.mubr.f32.mxu0 0.0
      %1810 = vmatmul.mubr.f32.gmra.mrb[0].mxu0 %v1582
      %v1811 = vpop.f32.mrb[0].mxu0
      %v1812 = vadd.f32 0.0, %v1811
      %v1813 = vpop.f32.mrb[0].mxu0
      %1814 = vmatprep.mubr.f32.mxu0 0.0
      %1815 = vmatmul.mubr.f32.gmra.mrb[0].mxu0 %v1583
      %v1816 = vpop.f32.mrb[0].mxu0
      %v1817 = vadd.f32 0.0, %v1816
      %v1818 = vpop.f32.mrb[0].mxu0
      %1819 = vmatprep.mubr.f32.mxu0 0.0
      %1820 = vmatmul.mubr.f32.gmra.mrb[0].mxu0 %v1585
      %v1821 = vpop.f32.mrb[0].mxu0
      %v1822 = vadd.f32 0.0, %v1821
      %v1823 = vpop.f32.mrb[0].mxu0
      %1824 = vmatprep.mubr.f32.mxu0 0.0
      %1825 = vmatmul.mubr.f32.gmra.mrb[0].mxu0 %v1586
      %v1826 = vpop.f32.mrb[0].mxu0
      %v1827 = vadd.f32 0.0, %v1826
      %v1828 = vpop.f32.mrb[0].mxu0
      %1829 = vdwg.mxu0
      %v1830 = vld [vmem:[#allocation2] sm:$0xff]
      %v1831 = vld [vmem:[#allocation2 + $0x8] sm:$0xff]
      %v1832 = vld [vmem:[#allocation2 + $0x10] sm:$0xff]
      %v1833 = vld [vmem:[#allocation2 + $0x18] sm:$0xff]
      %v1834 = vld [vmem:[#allocation2 + $0x20] sm:$0xff]
      %v1835 = vld [vmem:[#allocation2 + $0x28] sm:$0xff]
      %v1836 = vld [vmem:[#allocation2 + $0x30] sm:$0xff]
      %v1837 = vld [vmem:[#allocation2 + $0x38] sm:$0xff]
      %v1838 = vld [vmem:[#allocation2 + $0x40] sm:$0xff]
      %v1839 = vld [vmem:[#allocation2 + $0x48] sm:$0xff]
      %v1840 = vld [vmem:[#allocation2 + $0x50] sm:$0xff]
      %v1841 = vld [vmem:[#allocation2 + $0x58] sm:$0xff]
      %v1842 = vld [vmem:[#allocation2 + $0x60] sm:$0xff]
      %v1843 = vld [vmem:[#allocation2 + $0x68] sm:$0xff]
      %v1844 = vld [vmem:[#allocation2 + $0x70] sm:$0xff]
      %v1845 = vld [vmem:[#allocation2 + $0x78] sm:$0xff]
      %v1846 = vld [vmem:[#allocation2 + $0x80] sm:$0xff]
      %v1847 = vld [vmem:[#allocation2 + $0x88] sm:$0xff]
      %v1848 = vld [vmem:[#allocation2 + $0x90] sm:$0xff]
      %v1849 = vld [vmem:[#allocation2 + $0x98] sm:$0xff]
      %v1850 = vld [vmem:[#allocation2 + $0xa0] sm:$0xff]
      %v1851 = vld [vmem:[#allocation2 + $0xa8] sm:$0xff]
      %v1852 = vld [vmem:[#allocation2 + $0xb0] sm:$0xff]
      %v1853 = vld [vmem:[#allocation2 + $0xb8] sm:$0xff]
      %v1854 = vld [vmem:[#allocation2 + $0xc0] sm:$0xff]
      %v1855 = vld [vmem:[#allocation2 + $0xc8] sm:$0xff]
      %v1856 = vld [vmem:[#allocation2 + $0xd0] sm:$0xff]
      %v1857 = vld [vmem:[#allocation2 + $0xd8] sm:$0xff]
      %v1858 = vld [vmem:[#allocation2 + $0xe0] sm:$0xff]
      %v1859 = vld [vmem:[#allocation2 + $0xe8] sm:$0xff]
      %v1860 = vld [vmem:[#allocation2 + $0xf0] sm:$0xff]
      %v1861 = vld [vmem:[#allocation2 + $0xf8] sm:$0xff]
      %v1862 = vadd.f32 %v1830, %v1672
      %v1863 = vadd.f32 %v1831, %v1677
      %v1864 = vadd.f32 %v1832, %v1682
      %v1865 = vadd.f32 %v1833, %v1687
      %v1866 = vadd.f32 %v1834, %v1692
      %v1867 = vadd.f32 %v1835, %v1697
      %v1868 = vadd.f32 %v1836, %v1702
      %v1869 = vadd.f32 %v1837, %v1707
      %v1870 = vadd.f32 %v1838, %v1712
      %v1871 = vadd.f32 %v1839, %v1717
      %v1872 = vadd.f32 %v1840, %v1722
      %v1873 = vadd.f32 %v1841, %v1727
      %v1874 = vadd.f32 %v1842, %v1732
      %v1875 = vadd.f32 %v1843, %v1737
      %v1876 = vadd.f32 %v1844, %v1742
      %v1877 = vadd.f32 %v1845, %v1747
      %v1878 = vadd.f32 %v1846, %v1752
      %v1879 = vadd.f32 %v1847, %v1757
      %v1880 = vadd.f32 %v1848, %v1762
      %v1881 = vadd.f32 %v1849, %v1767
      %v1882 = vadd.f32 %v1850, %v1772
      %v1883 = vadd.f32 %v1851, %v1777
      %v1884 = vadd.f32 %v1852, %v1782
      %v1885 = vadd.f32 %v1853, %v1787
      %v1886 = vadd.f32 %v1854, %v1792
      %v1887 = vadd.f32 %v1855, %v1797
      %v1888 = vadd.f32 %v1856, %v1802
      %v1889 = vadd.f32 %v1857, %v1807
      %v1890 = vadd.f32 %v1858, %v1812
      %v1891 = vadd.f32 %v1859, %v1817
      %v1892 = vadd.f32 %v1860, %v1822
      %v1893 = vadd.f32 %v1861, %v1827
      %1894 = vst [vmem:[#allocation2] sm:$0xff] %v1862
      %1895 = vst [vmem:[#allocation2 + $0x8] sm:$0xff] %v1863
      %1896 = vst [vmem:[#allocation2 + $0x10] sm:$0xff] %v1864
      %1897 = vst [vmem:[#allocation2 + $0x18] sm:$0xff] %v1865
      %1898 = vst [vmem:[#allocation2 + $0x20] sm:$0xff] %v1866
      %1899 = vst [vmem:[#allocation2 + $0x28] sm:$0xff] %v1867
      %1900 = vst [vmem:[#allocation2 + $0x30] sm:$0xff] %v1868
      %1901 = vst [vmem:[#allocation2 + $0x38] sm:$0xff] %v1869
      %1902 = vst [vmem:[#allocation2 + $0x40] sm:$0xff] %v1870
      %1903 = vst [vmem:[#allocation2 + $0x48] sm:$0xff] %v1871
      %1904 = vst [vmem:[#allocation2 + $0x50] sm:$0xff] %v1872
      %1905 = vst [vmem:[#allocation2 + $0x58] sm:$0xff] %v1873
      %1906 = vst [vmem:[#allocation2 + $0x60] sm:$0xff] %v1874
      %1907 = vst [vmem:[#allocation2 + $0x68] sm:$0xff] %v1875
      %1908 = vst [vmem:[#allocation2 + $0x70] sm:$0xff] %v1876
      %1909 = vst [vmem:[#allocation2 + $0x78] sm:$0xff] %v1877
      %1910 = vst [vmem:[#allocation2 + $0x80] sm:$0xff] %v1878
      %1911 = vst [vmem:[#allocation2 + $0x88] sm:$0xff] %v1879
      %1912 = vst [vmem:[#allocation2 + $0x90] sm:$0xff] %v1880
      %1913 = vst [vmem:[#allocation2 + $0x98] sm:$0xff] %v1881
      %1914 = vst [vmem:[#allocation2 + $0xa0] sm:$0xff] %v1882
      %1915 = vst [vmem:[#allocation2 + $0xa8] sm:$0xff] %v1883
      %1916 = vst [vmem:[#allocation2 + $0xb0] sm:$0xff] %v1884
      %1917 = vst [vmem:[#allocation2 + $0xb8] sm:$0xff] %v1885
      %1918 = vst [vmem:[#allocation2 + $0xc0] sm:$0xff] %v1886
      %1919 = vst [vmem:[#allocation2 + $0xc8] sm:$0xff] %v1887
      %1920 = vst [vmem:[#allocation2 + $0xd0] sm:$0xff] %v1888
      %1921 = vst [vmem:[#allocation2 + $0xd8] sm:$0xff] %v1889
      %1922 = vst [vmem:[#allocation2 + $0xe0] sm:$0xff] %v1890
      %1923 = vst [vmem:[#allocation2 + $0xe8] sm:$0xff] %v1891
      %1924 = vst [vmem:[#allocation2 + $0xf0] sm:$0xff] %v1892
      %1925 = vst [vmem:[#allocation2 + $0xf8] sm:$0xff] %v1893
      %v1974 = vrot.slane %v1540, 1
      %v1975 = vrot.slane %v1541, 1
      %v1976 = vsel %vm637, %v1974, %v1975
      %v1977 = vrot.slane %v1542, 1
      %v1978 = vsel %vm637, %v1975, %v1977
      %v1979 = vrot.slane %v1543, 1
      %v1980 = vrot.slane %v1544, 1
      %v1981 = vsel %vm637, %v1979, %v1980
      %v1982 = vrot.slane %v1545, 1
      %v1983 = vsel %vm637, %v1980, %v1982
      %v1984 = vrot.slane %v1546, 1
      %v1985 = vrot.slane %v1547, 1
      %v1986 = vsel %vm637, %v1984, %v1985
      %v1987 = vrot.slane %v1548, 1
      %v1988 = vsel %vm637, %v1985, %v1987
      %v1989 = vrot.slane %v1549, 1
      %v1990 = vrot.slane %v1550, 1
      %v1991 = vsel %vm637, %v1989, %v1990
      %v1992 = vrot.slane %v1551, 1
      %v1993 = vsel %vm637, %v1990, %v1992
      %v1994 = vrot.slane %v1552, 1
      %v1995 = vrot.slane %v1553, 1
      %v1996 = vsel %vm637, %v1994, %v1995
      %v1997 = vrot.slane %v1554, 1
      %v1998 = vsel %vm637, %v1995, %v1997
      %v1999 = vrot.slane %v1555, 1
      %v2000 = vrot.slane %v1556, 1
      %v2001 = vsel %vm637, %v1999, %v2000
      %v2002 = vrot.slane %v1557, 1
      %v2003 = vsel %vm637, %v2000, %v2002
      %v2004 = vrot.slane %v1558, 1
      %v2005 = vrot.slane %v1559, 1
      %v2006 = vsel %vm637, %v2004, %v2005
      %v2007 = vrot.slane %v1560, 1
      %v2008 = vsel %vm637, %v2005, %v2007
      %v2009 = vrot.slane %v1561, 1
      %v2010 = vrot.slane %v1562, 1
      %v2011 = vsel %vm637, %v2009, %v2010
      %v2012 = vrot.slane %v1563, 1
      %v2013 = vsel %vm637, %v2010, %v2012
      %v2014 = vrot.slane %v1564, 1
      %v2015 = vrot.slane %v1565, 1
      %v2016 = vsel %vm637, %v2014, %v2015
      %v2017 = vrot.slane %v1566, 1
      %v2018 = vsel %vm637, %v2015, %v2017
      %v2019 = vrot.slane %v1567, 1
      %v2020 = vrot.slane %v1568, 1
      %v2021 = vsel %vm637, %v2019, %v2020
      %v2022 = vrot.slane %v1569, 1
      %v2023 = vsel %vm637, %v2020, %v2022
      %v2024 = vrot.slane %v1570, 1
      %v2025 = vrot.slane %v1571, 1
      %v2026 = vsel %vm637, %v2024, %v2025
      %v2027 = vrot.slane %v1572, 1
      %v2028 = vsel %vm637, %v2025, %v2027
      %v2029 = vrot.slane %v1573, 1
      %v2030 = vrot.slane %v1574, 1
      %v2031 = vsel %vm637, %v2029, %v2030
      %v2032 = vrot.slane %v1575, 1
      %v2033 = vsel %vm637, %v2030, %v2032
      %v2034 = vrot.slane %v1576, 1
      %v2035 = vrot.slane %v1577, 1
      %v2036 = vsel %vm637, %v2034, %v2035
      %v2037 = vrot.slane %v1578, 1
      %v2038 = vsel %vm637, %v2035, %v2037
      %v2039 = vrot.slane %v1579, 1
      %v2040 = vrot.slane %v1580, 1
      %v2041 = vsel %vm637, %v2039, %v2040
      %v2042 = vrot.slane %v1581, 1
      %v2043 = vsel %vm637, %v2040, %v2042
      %v2044 = vrot.slane %v1582, 1
      %v2045 = vrot.slane %v1583, 1
      %v2046 = vsel %vm637, %v2044, %v2045
      %v2047 = vrot.slane %v1584, 1
      %v2048 = vsel %vm637, %v2045, %v2047
      %v2049 = vrot.slane %v1585, 1
      %v2050 = vrot.slane %v1586, 1
      %v2051 = vsel %vm637, %v2049, %v2050
      %v2052 = vrot.slane %v1587, 1
      %v2053 = vsel %vm637, %v2050, %v2052
      %s2086 = scalar_lea.vmem %s247, 512
      %v2087 = vld [vmem:[%s2086] sm:$0xff]
      %v2088 = vld [vmem:[%s2086 + $0x8] sm:$0xff]
      %v2089 = vld [vmem:[%s2086 + $0x10] sm:$0xff]
      %v2090 = vld [vmem:[%s2086 + $0x18] sm:$0xff]
      %v2091 = vld [vmem:[%s2086 + $0x20] sm:$0xff]
      %v2092 = vld [vmem:[%s2086 + $0x28] sm:$0xff]
      %v2093 = vld [vmem:[%s2086 + $0x30] sm:$0xff]
      %v2094 = vld [vmem:[%s2086 + $0x38] sm:$0xff]
      %v2095 = vld [vmem:[%s2086 + $0x40] sm:$0xff]
      %v2096 = vld [vmem:[%s2086 + $0x48] sm:$0xff]
      %v2097 = vld [vmem:[%s2086 + $0x50] sm:$0xff]
      %v2098 = vld [vmem:[%s2086 + $0x58] sm:$0xff]
      %v2099 = vld [vmem:[%s2086 + $0x60] sm:$0xff]
      %v2100 = vld [vmem:[%s2086 + $0x68] sm:$0xff]
      %v2101 = vld [vmem:[%s2086 + $0x70] sm:$0xff]
      %v2102 = vld [vmem:[%s2086 + $0x78] sm:$0xff]
      %2103 = vmatprep.subr.mxu0 0.0
      %2104 = vmatpush1.msra.mxu0 %v2087
      %2105 = vmatprep.subr.mxu0 0.0
      %2106 = vmatpush1.msra.mxu0 %v2088
      %2107 = vmatprep.subr.mxu0 0.0
      %2108 = vmatpush1.msra.mxu0 %v2089
      %2109 = vmatprep.subr.mxu0 0.0
      %2110 = vmatpush1.msra.mxu0 %v2090
      %2111 = vmatprep.subr.mxu0 0.0
      %2112 = vmatpush1.msra.mxu0 %v2091
      %2113 = vmatprep.subr.mxu0 0.0
      %2114 = vmatpush1.msra.mxu0 %v2092
      %2115 = vmatprep.subr.mxu0 0.0
      %2116 = vmatpush1.msra.mxu0 %v2093
      %2117 = vmatprep.subr.mxu0 0.0
      %2118 = vmatpush1.msra.mxu0 %v2094
      %2119 = vmatprep.subr.mxu0 0.0
      %2120 = vmatpush1.msra.mxu0 %v2095
      %2121 = vmatprep.subr.mxu0 0.0
      %2122 = vmatpush1.msra.mxu0 %v2096
      %2123 = vmatprep.subr.mxu0 0.0
      %2124 = vmatpush1.msra.mxu0 %v2097
      %2125 = vmatprep.subr.mxu0 0.0
      %2126 = vmatpush1.msra.mxu0 %v2098
      %2127 = vmatprep.subr.mxu0 0.0
      %2128 = vmatpush1.msra.mxu0 %v2099
      %2129 = vmatprep.subr.mxu0 0.0
      %2130 = vmatpush1.msra.mxu0 %v2100
      %2131 = vmatprep.subr.mxu0 0.0
      %2132 = vmatpush1.msra.mxu0 %v2101
      %2133 = vmatprep.subr.mxu0 0.0
      %2134 = vmatpush1.msra.mxu0 %v2102
      %2135 = vmatprep.subr.mxu0 0.0
      %2136 = vmatpush1.msra.mxu0 0.0
      %2137 = vmatprep.subr.mxu0 0.0
      %2138 = vmatpush1.msra.mxu0 0.0
      %2139 = vmatprep.subr.mxu0 0.0
      %2140 = vmatpush1.msra.mxu0 0.0
      %2141 = vmatprep.subr.mxu0 0.0
      %2142 = vmatpush1.msra.mxu0 0.0
      %2143 = vmatprep.subr.mxu0 0.0
      %2144 = vmatpush1.msra.mxu0 0.0
      %2145 = vmatprep.subr.mxu0 0.0
      %2146 = vmatpush1.msra.mxu0 0.0
      %2147 = vmatprep.subr.mxu0 0.0
      %2148 = vmatpush1.msra.mxu0 0.0
      %2149 = vmatprep.subr.mxu0 0.0
      %2150 = vmatpush1.msra.mxu0 0.0
      %2151 = vmatprep.subr.mxu0 0.0
      %2152 = vmatpush1.msra.mxu0 0.0
      %2153 = vmatprep.subr.mxu0 0.0
      %2154 = vmatpush1.msra.mxu0 0.0
      %2155 = vmatprep.subr.mxu0 0.0
      %2156 = vmatpush1.msra.mxu0 0.0
      %2157 = vmatprep.subr.mxu0 0.0
      %2158 = vmatpush1.msra.mxu0 0.0
      %2159 = vmatprep.subr.mxu0 0.0
      %2160 = vmatpush1.msra.mxu0 0.0
      %2161 = vmatprep.subr.mxu0 0.0
      %2162 = vmatpush1.msra.mxu0 0.0
      %2163 = vmatprep.subr.mxu0 0.0
      %2164 = vmatpush1.msra.mxu0 0.0
      %2165 = vmatprep.subr.mxu0 0.0
      %2166 = vmatpush1.msra.mxu0 0.0
      %2167 = vmatprep.mubr.f32.mxu0 0.0
      %2168 = vmatmul.mubr.f32.gmra.mrb[0].mxu0 %v1976
      %v2169 = vpop.f32.mrb[0].mxu0
      %v2170 = vadd.f32 0.0, %v2169
      %v2171 = vpop.f32.mrb[0].mxu0
      %2172 = vmatprep.mubr.f32.mxu0 0.0
      %2173 = vmatmul.mubr.f32.gmra.mrb[0].mxu0 %v1978
      %v2174 = vpop.f32.mrb[0].mxu0
      %v2175 = vadd.f32 0.0, %v2174
      %v2176 = vpop.f32.mrb[0].mxu0
      %2177 = vmatprep.mubr.f32.mxu0 0.0
      %2178 = vmatmul.mubr.f32.gmra.mrb[0].mxu0 %v1981
      %v2179 = vpop.f32.mrb[0].mxu0
      %v2180 = vadd.f32 0.0, %v2179
      %v2181 = vpop.f32.mrb[0].mxu0
      %2182 = vmatprep.mubr.f32.mxu0 0.0
      %2183 = vmatmul.mubr.f32.gmra.mrb[0].mxu0 %v1983
      %v2184 = vpop.f32.mrb[0].mxu0
      %v2185 = vadd.f32 0.0, %v2184
      %v2186 = vpop.f32.mrb[0].mxu0
      %2187 = vmatprep.mubr.f32.mxu0 0.0
      %2188 = vmatmul.mubr.f32.gmra.mrb[0].mxu0 %v1986
      %v2189 = vpop.f32.mrb[0].mxu0
      %v2190 = vadd.f32 0.0, %v2189
      %v2191 = vpop.f32.mrb[0].mxu0
      %2192 = vmatprep.mubr.f32.mxu0 0.0
      %2193 = vmatmul.mubr.f32.gmra.mrb[0].mxu0 %v1988
      %v2194 = vpop.f32.mrb[0].mxu0
      %v2195 = vadd.f32 0.0, %v2194
      %v2196 = vpop.f32.mrb[0].mxu0
      %2197 = vmatprep.mubr.f32.mxu0 0.0
      %2198 = vmatmul.mubr.f32.gmra.mrb[0].mxu0 %v1991
      %v2199 = vpop.f32.mrb[0].mxu0
      %v2200 = vadd.f32 0.0, %v2199
      %v2201 = vpop.f32.mrb[0].mxu0
      %2202 = vmatprep.mubr.f32.mxu0 0.0
      %2203 = vmatmul.mubr.f32.gmra.mrb[0].mxu0 %v1993
      %v2204 = vpop.f32.mrb[0].mxu0
      %v2205 = vadd.f32 0.0, %v2204
      %v2206 = vpop.f32.mrb[0].mxu0
      %2207 = vmatprep.mubr.f32.mxu0 0.0
      %2208 = vmatmul.mubr.f32.gmra.mrb[0].mxu0 %v1996
      %v2209 = vpop.f32.mrb[0].mxu0
      %v2210 = vadd.f32 0.0, %v2209
      %v2211 = vpop.f32.mrb[0].mxu0
      %2212 = vmatprep.mubr.f32.mxu0 0.0
      %2213 = vmatmul.mubr.f32.gmra.mrb[0].mxu0 %v1998
      %v2214 = vpop.f32.mrb[0].mxu0
      %v2215 = vadd.f32 0.0, %v2214
      %v2216 = vpop.f32.mrb[0].mxu0
      %2217 = vmatprep.mubr.f32.mxu0 0.0
      %2218 = vmatmul.mubr.f32.gmra.mrb[0].mxu0 %v2001
      %v2219 = vpop.f32.mrb[0].mxu0
      %v2220 = vadd.f32 0.0, %v2219
      %v2221 = vpop.f32.mrb[0].mxu0
      %2222 = vmatprep.mubr.f32.mxu0 0.0
      %2223 = vmatmul.mubr.f32.gmra.mrb[0].mxu0 %v2003
      %v2224 = vpop.f32.mrb[0].mxu0
      %v2225 = vadd.f32 0.0, %v2224
      %v2226 = vpop.f32.mrb[0].mxu0
      %2227 = vmatprep.mubr.f32.mxu0 0.0
      %2228 = vmatmul.mubr.f32.gmra.mrb[0].mxu0 %v2006
      %v2229 = vpop.f32.mrb[0].mxu0
      %v2230 = vadd.f32 0.0, %v2229
      %v2231 = vpop.f32.mrb[0].mxu0
      %2232 = vmatprep.mubr.f32.mxu0 0.0
      %2233 = vmatmul.mubr.f32.gmra.mrb[0].mxu0 %v2008
      %v2234 = vpop.f32.mrb[0].mxu0
      %v2235 = vadd.f32 0.0, %v2234
      %v2236 = vpop.f32.mrb[0].mxu0
      %2237 = vmatprep.mubr.f32.mxu0 0.0
      %2238 = vmatmul.mubr.f32.gmra.mrb[0].mxu0 %v2011
      %v2239 = vpop.f32.mrb[0].mxu0
      %v2240 = vadd.f32 0.0, %v2239
      %v2241 = vpop.f32.mrb[0].mxu0
      %2242 = vmatprep.mubr.f32.mxu0 0.0
      %2243 = vmatmul.mubr.f32.gmra.mrb[0].mxu0 %v2013
      %v2244 = vpop.f32.mrb[0].mxu0
      %v2245 = vadd.f32 0.0, %v2244
      %v2246 = vpop.f32.mrb[0].mxu0
      %2247 = vmatprep.mubr.f32.mxu0 0.0
      %2248 = vmatmul.mubr.f32.gmra.mrb[0].mxu0 %v2016
      %v2249 = vpop.f32.mrb[0].mxu0
      %v2250 = vadd.f32 0.0, %v2249
      %v2251 = vpop.f32.mrb[0].mxu0
      %2252 = vmatprep.mubr.f32.mxu0 0.0
      %2253 = vmatmul.mubr.f32.gmra.mrb[0].mxu0 %v2018
      %v2254 = vpop.f32.mrb[0].mxu0
      %v2255 = vadd.f32 0.0, %v2254
      %v2256 = vpop.f32.mrb[0].mxu0
      %2257 = vmatprep.mubr.f32.mxu0 0.0
      %2258 = vmatmul.mubr.f32.gmra.mrb[0].mxu0 %v2021
      %v2259 = vpop.f32.mrb[0].mxu0
      %v2260 = vadd.f32 0.0, %v2259
      %v2261 = vpop.f32.mrb[0].mxu0
      %2262 = vmatprep.mubr.f32.mxu0 0.0
      %2263 = vmatmul.mubr.f32.gmra.mrb[0].mxu0 %v2023
      %v2264 = vpop.f32.mrb[0].mxu0
      %v2265 = vadd.f32 0.0, %v2264
      %v2266 = vpop.f32.mrb[0].mxu0
      %2267 = vmatprep.mubr.f32.mxu0 0.0
      %2268 = vmatmul.mubr.f32.gmra.mrb[0].mxu0 %v2026
      %v2269 = vpop.f32.mrb[0].mxu0
      %v2270 = vadd.f32 0.0, %v2269
      %v2271 = vpop.f32.mrb[0].mxu0
      %2272 = vmatprep.mubr.f32.mxu0 0.0
      %2273 = vmatmul.mubr.f32.gmra.mrb[0].mxu0 %v2028
      %v2274 = vpop.f32.mrb[0].mxu0
      %v2275 = vadd.f32 0.0, %v2274
      %v2276 = vpop.f32.mrb[0].mxu0
      %2277 = vmatprep.mubr.f32.mxu0 0.0
      %2278 = vmatmul.mubr.f32.gmra.mrb[0].mxu0 %v2031
      %v2279 = vpop.f32.mrb[0].mxu0
      %v2280 = vadd.f32 0.0, %v2279
      %v2281 = vpop.f32.mrb[0].mxu0
      %2282 = vmatprep.mubr.f32.mxu0 0.0
      %2283 = vmatmul.mubr.f32.gmra.mrb[0].mxu0 %v2033
      %v2284 = vpop.f32.mrb[0].mxu0
      %v2285 = vadd.f32 0.0, %v2284
      %v2286 = vpop.f32.mrb[0].mxu0
      %2287 = vmatprep.mubr.f32.mxu0 0.0
      %2288 = vmatmul.mubr.f32.gmra.mrb[0].mxu0 %v2036
      %v2289 = vpop.f32.mrb[0].mxu0
      %v2290 = vadd.f32 0.0, %v2289
      %v2291 = vpop.f32.mrb[0].mxu0
      %2292 = vmatprep.mubr.f32.mxu0 0.0
      %2293 = vmatmul.mubr.f32.gmra.mrb[0].mxu0 %v2038
      %v2294 = vpop.f32.mrb[0].mxu0
      %v2295 = vadd.f32 0.0, %v2294
      %v2296 = vpop.f32.mrb[0].mxu0
      %2297 = vmatprep.mubr.f32.mxu0 0.0
      %2298 = vmatmul.mubr.f32.gmra.mrb[0].mxu0 %v2041
      %v2299 = vpop.f32.mrb[0].mxu0
      %v2300 = vadd.f32 0.0, %v2299
      %v2301 = vpop.f32.mrb[0].mxu0
      %2302 = vmatprep.mubr.f32.mxu0 0.0
      %2303 = vmatmul.mubr.f32.gmra.mrb[0].mxu0 %v2043
      %v2304 = vpop.f32.mrb[0].mxu0
      %v2305 = vadd.f32 0.0, %v2304
      %v2306 = vpop.f32.mrb[0].mxu0
      %2307 = vmatprep.mubr.f32.mxu0 0.0
      %2308 = vmatmul.mubr.f32.gmra.mrb[0].mxu0 %v2046
      %v2309 = vpop.f32.mrb[0].mxu0
      %v2310 = vadd.f32 0.0, %v2309
      %v2311 = vpop.f32.mrb[0].mxu0
      %2312 = vmatprep.mubr.f32.mxu0 0.0
      %2313 = vmatmul.mubr.f32.gmra.mrb[0].mxu0 %v2048
      %v2314 = vpop.f32.mrb[0].mxu0
      %v2315 = vadd.f32 0.0, %v2314
      %v2316 = vpop.f32.mrb[0].mxu0
      %2317 = vmatprep.mubr.f32.mxu0 0.0
      %2318 = vmatmul.mubr.f32.gmra.mrb[0].mxu0 %v2051
      %v2319 = vpop.f32.mrb[0].mxu0
      %v2320 = vadd.f32 0.0, %v2319
      %v2321 = vpop.f32.mrb[0].mxu0
      %2322 = vmatprep.mubr.f32.mxu0 0.0
      %2323 = vmatmul.mubr.f32.gmra.mrb[0].mxu0 %v2053
      %v2324 = vpop.f32.mrb[0].mxu0
      %v2325 = vadd.f32 0.0, %v2324
      %v2326 = vpop.f32.mrb[0].mxu0
      %2327 = vdwg.mxu0
      %v2328 = vld [vmem:[#allocation2] sm:$0xff]
      %v2329 = vld [vmem:[#allocation2 + $0x8] sm:$0xff]
      %v2330 = vld [vmem:[#allocation2 + $0x10] sm:$0xff]
      %v2331 = vld [vmem:[#allocation2 + $0x18] sm:$0xff]
      %v2332 = vld [vmem:[#allocation2 + $0x20] sm:$0xff]
      %v2333 = vld [vmem:[#allocation2 + $0x28] sm:$0xff]
      %v2334 = vld [vmem:[#allocation2 + $0x30] sm:$0xff]
      %v2335 = vld [vmem:[#allocation2 + $0x38] sm:$0xff]
      %v2336 = vld [vmem:[#allocation2 + $0x40] sm:$0xff]
      %v2337 = vld [vmem:[#allocation2 + $0x48] sm:$0xff]
      %v2338 = vld [vmem:[#allocation2 + $0x50] sm:$0xff]
      %v2339 = vld [vmem:[#allocation2 + $0x58] sm:$0xff]
      %v2340 = vld [vmem:[#allocation2 + $0x60] sm:$0xff]
      %v2341 = vld [vmem:[#allocation2 + $0x68] sm:$0xff]
      %v2342 = vld [vmem:[#allocation2 + $0x70] sm:$0xff]
      %v2343 = vld [vmem:[#allocation2 + $0x78] sm:$0xff]
      %v2344 = vld [vmem:[#allocation2 + $0x80] sm:$0xff]
      %v2345 = vld [vmem:[#allocation2 + $0x88] sm:$0xff]
      %v2346 = vld [vmem:[#allocation2 + $0x90] sm:$0xff]
      %v2347 = vld [vmem:[#allocation2 + $0x98] sm:$0xff]
      %v2348 = vld [vmem:[#allocation2 + $0xa0] sm:$0xff]
      %v2349 = vld [vmem:[#allocation2 + $0xa8] sm:$0xff]
      %v2350 = vld [vmem:[#allocation2 + $0xb0] sm:$0xff]
      %v2351 = vld [vmem:[#allocation2 + $0xb8] sm:$0xff]
      %v2352 = vld [vmem:[#allocation2 + $0xc0] sm:$0xff]
      %v2353 = vld [vmem:[#allocation2 + $0xc8] sm:$0xff]
      %v2354 = vld [vmem:[#allocation2 + $0xd0] sm:$0xff]
      %v2355 = vld [vmem:[#allocation2 + $0xd8] sm:$0xff]
      %v2356 = vld [vmem:[#allocation2 + $0xe0] sm:$0xff]
      %v2357 = vld [vmem:[#allocation2 + $0xe8] sm:$0xff]
      %v2358 = vld [vmem:[#allocation2 + $0xf0] sm:$0xff]
      %v2359 = vld [vmem:[#allocation2 + $0xf8] sm:$0xff]
      %v2360 = vadd.f32 %v2328, %v2170
      %v2361 = vadd.f32 %v2329, %v2175
      %v2362 = vadd.f32 %v2330, %v2180
      %v2363 = vadd.f32 %v2331, %v2185
      %v2364 = vadd.f32 %v2332, %v2190
      %v2365 = vadd.f32 %v2333, %v2195
      %v2366 = vadd.f32 %v2334, %v2200
      %v2367 = vadd.f32 %v2335, %v2205
      %v2368 = vadd.f32 %v2336, %v2210
      %v2369 = vadd.f32 %v2337, %v2215
      %v2370 = vadd.f32 %v2338, %v2220
      %v2371 = vadd.f32 %v2339, %v2225
      %v2372 = vadd.f32 %v2340, %v2230
      %v2373 = vadd.f32 %v2341, %v2235
      %v2374 = vadd.f32 %v2342, %v2240
      %v2375 = vadd.f32 %v2343, %v2245
      %v2376 = vadd.f32 %v2344, %v2250
      %v2377 = vadd.f32 %v2345, %v2255
      %v2378 = vadd.f32 %v2346, %v2260
      %v2379 = vadd.f32 %v2347, %v2265
      %v2380 = vadd.f32 %v2348, %v2270
      %v2381 = vadd.f32 %v2349, %v2275
      %v2382 = vadd.f32 %v2350, %v2280
      %v2383 = vadd.f32 %v2351, %v2285
      %v2384 = vadd.f32 %v2352, %v2290
      %v2385 = vadd.f32 %v2353, %v2295
      %v2386 = vadd.f32 %v2354, %v2300
      %v2387 = vadd.f32 %v2355, %v2305
      %v2388 = vadd.f32 %v2356, %v2310
      %v2389 = vadd.f32 %v2357, %v2315
      %v2390 = vadd.f32 %v2358, %v2320
      %v2391 = vadd.f32 %v2359, %v2325
      %2392 = vst [vmem:[#allocation2] sm:$0xff] %v2360
      %2393 = vst [vmem:[#allocation2 + $0x8] sm:$0xff] %v2361
      %2394 = vst [vmem:[#allocation2 + $0x10] sm:$0xff] %v2362
      %2395 = vst [vmem:[#allocation2 + $0x18] sm:$0xff] %v2363
      %2396 = vst [vmem:[#allocation2 + $0x20] sm:$0xff] %v2364
      %2397 = vst [vmem:[#allocation2 + $0x28] sm:$0xff] %v2365
      %2398 = vst [vmem:[#allocation2 + $0x30] sm:$0xff] %v2366
      %2399 = vst [vmem:[#allocation2 + $0x38] sm:$0xff] %v2367
      %2400 = vst [vmem:[#allocation2 + $0x40] sm:$0xff] %v2368
      %2401 = vst [vmem:[#allocation2 + $0x48] sm:$0xff] %v2369
      %2402 = vst [vmem:[#allocation2 + $0x50] sm:$0xff] %v2370
      %2403 = vst [vmem:[#allocation2 + $0x58] sm:$0xff] %v2371
      %2404 = vst [vmem:[#allocation2 + $0x60] sm:$0xff] %v2372
      %2405 = vst [vmem:[#allocation2 + $0x68] sm:$0xff] %v2373
      %2406 = vst [vmem:[#allocation2 + $0x70] sm:$0xff] %v2374
      %2407 = vst [vmem:[#allocation2 + $0x78] sm:$0xff] %v2375
      %2408 = vst [vmem:[#allocation2 + $0x80] sm:$0xff] %v2376
      %2409 = vst [vmem:[#allocation2 + $0x88] sm:$0xff] %v2377
      %2410 = vst [vmem:[#allocation2 + $0x90] sm:$0xff] %v2378
      %2411 = vst [vmem:[#allocation2 + $0x98] sm:$0xff] %v2379
      %2412 = vst [vmem:[#allocation2 + $0xa0] sm:$0xff] %v2380
      %2413 = vst [vmem:[#allocation2 + $0xa8] sm:$0xff] %v2381
      %2414 = vst [vmem:[#allocation2 + $0xb0] sm:$0xff] %v2382
      %2415 = vst [vmem:[#allocation2 + $0xb8] sm:$0xff] %v2383
      %2416 = vst [vmem:[#allocation2 + $0xc0] sm:$0xff] %v2384
      %2417 = vst [vmem:[#allocation2 + $0xc8] sm:$0xff] %v2385
      %2418 = vst [vmem:[#allocation2 + $0xd0] sm:$0xff] %v2386
      %2419 = vst [vmem:[#allocation2 + $0xd8] sm:$0xff] %v2387
      %2420 = vst [vmem:[#allocation2 + $0xe0] sm:$0xff] %v2388
      %2421 = vst [vmem:[#allocation2 + $0xe8] sm:$0xff] %v2389
      %2422 = vst [vmem:[#allocation2 + $0xf0] sm:$0xff] %v2390
      %2423 = vst [vmem:[#allocation2 + $0xf8] sm:$0xff] %v2391
      %v2424 = vrot.slane %v1540, 2
      %v2425 = vrot.slane %v1541, 2
      %v2426 = vsel %vm1088, %v2424, %v2425
      %v2427 = vrot.slane %v1542, 2
      %v2428 = vsel %vm1088, %v2425, %v2427
      %v2429 = vrot.slane %v1543, 2
      %v2430 = vrot.slane %v1544, 2
      %v2431 = vsel %vm1088, %v2429, %v2430
      %v2432 = vrot.slane %v1545, 2
      %v2433 = vsel %vm1088, %v2430, %v2432
      %v2434 = vrot.slane %v1546, 2
      %v2435 = vrot.slane %v1547, 2
      %v2436 = vsel %vm1088, %v2434, %v2435
      %v2437 = vrot.slane %v1548, 2
      %v2438 = vsel %vm1088, %v2435, %v2437
      %v2439 = vrot.slane %v1549, 2
      %v2440 = vrot.slane %v1550, 2
      %v2441 = vsel %vm1088, %v2439, %v2440
      %v2442 = vrot.slane %v1551, 2
      %v2443 = vsel %vm1088, %v2440, %v2442
      %v2444 = vrot.slane %v1552, 2
      %v2445 = vrot.slane %v1553, 2
      %v2446 = vsel %vm1088, %v2444, %v2445
      %v2447 = vrot.slane %v1554, 2
      %v2448 = vsel %vm1088, %v2445, %v2447
      %v2449 = vrot.slane %v1555, 2
      %v2450 = vrot.slane %v1556, 2
      %v2451 = vsel %vm1088, %v2449, %v2450
      %v2452 = vrot.slane %v1557, 2
      %v2453 = vsel %vm1088, %v2450, %v2452
      %v2454 = vrot.slane %v1558, 2
      %v2455 = vrot.slane %v1559, 2
      %v2456 = vsel %vm1088, %v2454, %v2455
      %v2457 = vrot.slane %v1560, 2
      %v2458 = vsel %vm1088, %v2455, %v2457
      %v2459 = vrot.slane %v1561, 2
      %v2460 = vrot.slane %v1562, 2
      %v2461 = vsel %vm1088, %v2459, %v2460
      %v2462 = vrot.slane %v1563, 2
      %v2463 = vsel %vm1088, %v2460, %v2462
      %v2464 = vrot.slane %v1564, 2
      %v2465 = vrot.slane %v1565, 2
      %v2466 = vsel %vm1088, %v2464, %v2465
      %v2467 = vrot.slane %v1566, 2
      %v2468 = vsel %vm1088, %v2465, %v2467
      %v2469 = vrot.slane %v1567, 2
      %v2470 = vrot.slane %v1568, 2
      %v2471 = vsel %vm1088, %v2469, %v2470
      %v2472 = vrot.slane %v1569, 2
      %v2473 = vsel %vm1088, %v2470, %v2472
      %v2474 = vrot.slane %v1570, 2
      %v2475 = vrot.slane %v1571, 2
      %v2476 = vsel %vm1088, %v2474, %v2475
      %v2477 = vrot.slane %v1572, 2
      %v2478 = vsel %vm1088, %v2475, %v2477
      %v2479 = vrot.slane %v1573, 2
      %v2480 = vrot.slane %v1574, 2
      %v2481 = vsel %vm1088, %v2479, %v2480
      %v2482 = vrot.slane %v1575, 2
      %v2483 = vsel %vm1088, %v2480, %v2482
      %v2484 = vrot.slane %v1576, 2
      %v2485 = vrot.slane %v1577, 2
      %v2486 = vsel %vm1088, %v2484, %v2485
      %v2487 = vrot.slane %v1578, 2
      %v2488 = vsel %vm1088, %v2485, %v2487
      %v2489 = vrot.slane %v1579, 2
      %v2490 = vrot.slane %v1580, 2
      %v2491 = vsel %vm1088, %v2489, %v2490
      %v2492 = vrot.slane %v1581, 2
      %v2493 = vsel %vm1088, %v2490, %v2492
      %v2494 = vrot.slane %v1582, 2
      %v2495 = vrot.slane %v1583, 2
      %v2496 = vsel %vm1088, %v2494, %v2495
      %v2497 = vrot.slane %v1584, 2
      %v2498 = vsel %vm1088, %v2495, %v2497
      %v2499 = vrot.slane %v1585, 2
      %v2500 = vrot.slane %v1586, 2
      %v2501 = vsel %vm1088, %v2499, %v2500
      %v2502 = vrot.slane %v1587, 2
      %v2503 = vsel %vm1088, %v2500, %v2502
      %s2536 = scalar_lea.vmem %s247, 640
      %v2537 = vld [vmem:[%s2536] sm:$0xff]
      %v2538 = vld [vmem:[%s2536 + $0x8] sm:$0xff]
      %v2539 = vld [vmem:[%s2536 + $0x10] sm:$0xff]
      %v2540 = vld [vmem:[%s2536 + $0x18] sm:$0xff]
      %v2541 = vld [vmem:[%s2536 + $0x20] sm:$0xff]
      %v2542 = vld [vmem:[%s2536 + $0x28] sm:$0xff]
      %v2543 = vld [vmem:[%s2536 + $0x30] sm:$0xff]
      %v2544 = vld [vmem:[%s2536 + $0x38] sm:$0xff]
      %v2545 = vld [vmem:[%s2536 + $0x40] sm:$0xff]
      %v2546 = vld [vmem:[%s2536 + $0x48] sm:$0xff]
      %v2547 = vld [vmem:[%s2536 + $0x50] sm:$0xff]
      %v2548 = vld [vmem:[%s2536 + $0x58] sm:$0xff]
      %v2549 = vld [vmem:[%s2536 + $0x60] sm:$0xff]
      %v2550 = vld [vmem:[%s2536 + $0x68] sm:$0xff]
      %v2551 = vld [vmem:[%s2536 + $0x70] sm:$0xff]
      %v2552 = vld [vmem:[%s2536 + $0x78] sm:$0xff]
      %2553 = vmatprep.subr.mxu0 0.0
      %2554 = vmatpush1.msra.mxu0 %v2537
      %2555 = vmatprep.subr.mxu0 0.0
      %2556 = vmatpush1.msra.mxu0 %v2538
      %2557 = vmatprep.subr.mxu0 0.0
      %2558 = vmatpush1.msra.mxu0 %v2539
      %2559 = vmatprep.subr.mxu0 0.0
      %2560 = vmatpush1.msra.mxu0 %v2540
      %2561 = vmatprep.subr.mxu0 0.0
      %2562 = vmatpush1.msra.mxu0 %v2541
      %2563 = vmatprep.subr.mxu0 0.0
      %2564 = vmatpush1.msra.mxu0 %v2542
      %2565 = vmatprep.subr.mxu0 0.0
      %2566 = vmatpush1.msra.mxu0 %v2543
      %2567 = vmatprep.subr.mxu0 0.0
      %2568 = vmatpush1.msra.mxu0 %v2544
      %2569 = vmatprep.subr.mxu0 0.0
      %2570 = vmatpush1.msra.mxu0 %v2545
      %2571 = vmatprep.subr.mxu0 0.0
      %2572 = vmatpush1.msra.mxu0 %v2546
      %2573 = vmatprep.subr.mxu0 0.0
      %2574 = vmatpush1.msra.mxu0 %v2547
      %2575 = vmatprep.subr.mxu0 0.0
      %2576 = vmatpush1.msra.mxu0 %v2548
      %2577 = vmatprep.subr.mxu0 0.0
      %2578 = vmatpush1.msra.mxu0 %v2549
      %2579 = vmatprep.subr.mxu0 0.0
      %2580 = vmatpush1.msra.mxu0 %v2550
      %2581 = vmatprep.subr.mxu0 0.0
      %2582 = vmatpush1.msra.mxu0 %v2551
      %2583 = vmatprep.subr.mxu0 0.0
      %2584 = vmatpush1.msra.mxu0 %v2552
      %2585 = vmatprep.subr.mxu0 0.0
      %2586 = vmatpush1.msra.mxu0 0.0
      %2587 = vmatprep.subr.mxu0 0.0
      %2588 = vmatpush1.msra.mxu0 0.0
      %2589 = vmatprep.subr.mxu0 0.0
      %2590 = vmatpush1.msra.mxu0 0.0
      %2591 = vmatprep.subr.mxu0 0.0
      %2592 = vmatpush1.msra.mxu0 0.0
      %2593 = vmatprep.subr.mxu0 0.0
      %2594 = vmatpush1.msra.mxu0 0.0
      %2595 = vmatprep.subr.mxu0 0.0
      %2596 = vmatpush1.msra.mxu0 0.0
      %2597 = vmatprep.subr.mxu0 0.0
      %2598 = vmatpush1.msra.mxu0 0.0
      %2599 = vmatprep.subr.mxu0 0.0
      %2600 = vmatpush1.msra.mxu0 0.0
      %2601 = vmatprep.subr.mxu0 0.0
      %2602 = vmatpush1.msra.mxu0 0.0
      %2603 = vmatprep.subr.mxu0 0.0
      %2604 = vmatpush1.msra.mxu0 0.0
      %2605 = vmatprep.subr.mxu0 0.0
      %2606 = vmatpush1.msra.mxu0 0.0
      %2607 = vmatprep.subr.mxu0 0.0
      %2608 = vmatpush1.msra.mxu0 0.0
      %2609 = vmatprep.subr.mxu0 0.0
      %2610 = vmatpush1.msra.mxu0 0.0
      %2611 = vmatprep.subr.mxu0 0.0
      %2612 = vmatpush1.msra.mxu0 0.0
      %2613 = vmatprep.subr.mxu0 0.0
      %2614 = vmatpush1.msra.mxu0 0.0
      %2615 = vmatprep.subr.mxu0 0.0
      %2616 = vmatpush1.msra.mxu0 0.0
      %2617 = vmatprep.mubr.f32.mxu0 0.0
      %2618 = vmatmul.mubr.f32.gmra.mrb[0].mxu0 %v2426
      %v2619 = vpop.f32.mrb[0].mxu0
      %v2620 = vadd.f32 0.0, %v2619
      %v2621 = vpop.f32.mrb[0].mxu0
      %2622 = vmatprep.mubr.f32.mxu0 0.0
      %2623 = vmatmul.mubr.f32.gmra.mrb[0].mxu0 %v2428
      %v2624 = vpop.f32.mrb[0].mxu0
      %v2625 = vadd.f32 0.0, %v2624
      %v2626 = vpop.f32.mrb[0].mxu0
      %2627 = vmatprep.mubr.f32.mxu0 0.0
      %2628 = vmatmul.mubr.f32.gmra.mrb[0].mxu0 %v2431
      %v2629 = vpop.f32.mrb[0].mxu0
      %v2630 = vadd.f32 0.0, %v2629
      %v2631 = vpop.f32.mrb[0].mxu0
      %2632 = vmatprep.mubr.f32.mxu0 0.0
      %2633 = vmatmul.mubr.f32.gmra.mrb[0].mxu0 %v2433
      %v2634 = vpop.f32.mrb[0].mxu0
      %v2635 = vadd.f32 0.0, %v2634
      %v2636 = vpop.f32.mrb[0].mxu0
      %2637 = vmatprep.mubr.f32.mxu0 0.0
      %2638 = vmatmul.mubr.f32.gmra.mrb[0].mxu0 %v2436
      %v2639 = vpop.f32.mrb[0].mxu0
      %v2640 = vadd.f32 0.0, %v2639
      %v2641 = vpop.f32.mrb[0].mxu0
      %2642 = vmatprep.mubr.f32.mxu0 0.0
      %2643 = vmatmul.mubr.f32.gmra.mrb[0].mxu0 %v2438
      %v2644 = vpop.f32.mrb[0].mxu0
      %v2645 = vadd.f32 0.0, %v2644
      %v2646 = vpop.f32.mrb[0].mxu0
      %2647 = vmatprep.mubr.f32.mxu0 0.0
      %2648 = vmatmul.mubr.f32.gmra.mrb[0].mxu0 %v2441
      %v2649 = vpop.f32.mrb[0].mxu0
      %v2650 = vadd.f32 0.0, %v2649
      %v2651 = vpop.f32.mrb[0].mxu0
      %2652 = vmatprep.mubr.f32.mxu0 0.0
      %2653 = vmatmul.mubr.f32.gmra.mrb[0].mxu0 %v2443
      %v2654 = vpop.f32.mrb[0].mxu0
      %v2655 = vadd.f32 0.0, %v2654
      %v2656 = vpop.f32.mrb[0].mxu0
      %2657 = vmatprep.mubr.f32.mxu0 0.0
      %2658 = vmatmul.mubr.f32.gmra.mrb[0].mxu0 %v2446
      %v2659 = vpop.f32.mrb[0].mxu0
      %v2660 = vadd.f32 0.0, %v2659
      %v2661 = vpop.f32.mrb[0].mxu0
      %2662 = vmatprep.mubr.f32.mxu0 0.0
      %2663 = vmatmul.mubr.f32.gmra.mrb[0].mxu0 %v2448
      %v2664 = vpop.f32.mrb[0].mxu0
      %v2665 = vadd.f32 0.0, %v2664
      %v2666 = vpop.f32.mrb[0].mxu0
      %2667 = vmatprep.mubr.f32.mxu0 0.0
      %2668 = vmatmul.mubr.f32.gmra.mrb[0].mxu0 %v2451
      %v2669 = vpop.f32.mrb[0].mxu0
      %v2670 = vadd.f32 0.0, %v2669
      %v2671 = vpop.f32.mrb[0].mxu0
      %2672 = vmatprep.mubr.f32.mxu0 0.0
      %2673 = vmatmul.mubr.f32.gmra.mrb[0].mxu0 %v2453
      %v2674 = vpop.f32.mrb[0].mxu0
      %v2675 = vadd.f32 0.0, %v2674
      %v2676 = vpop.f32.mrb[0].mxu0
      %2677 = vmatprep.mubr.f32.mxu0 0.0
      %2678 = vmatmul.mubr.f32.gmra.mrb[0].mxu0 %v2456
      %v2679 = vpop.f32.mrb[0].mxu0
      %v2680 = vadd.f32 0.0, %v2679
      %v2681 = vpop.f32.mrb[0].mxu0
      %2682 = vmatprep.mubr.f32.mxu0 0.0
      %2683 = vmatmul.mubr.f32.gmra.mrb[0].mxu0 %v2458
      %v2684 = vpop.f32.mrb[0].mxu0
      %v2685 = vadd.f32 0.0, %v2684
      %v2686 = vpop.f32.mrb[0].mxu0
      %2687 = vmatprep.mubr.f32.mxu0 0.0
      %2688 = vmatmul.mubr.f32.gmra.mrb[0].mxu0 %v2461
      %v2689 = vpop.f32.mrb[0].mxu0
      %v2690 = vadd.f32 0.0, %v2689
      %v2691 = vpop.f32.mrb[0].mxu0
      %2692 = vmatprep.mubr.f32.mxu0 0.0
      %2693 = vmatmul.mubr.f32.gmra.mrb[0].mxu0 %v2463
      %v2694 = vpop.f32.mrb[0].mxu0
      %v2695 = vadd.f32 0.0, %v2694
      %v2696 = vpop.f32.mrb[0].mxu0
      %2697 = vmatprep.mubr.f32.mxu0 0.0
      %2698 = vmatmul.mubr.f32.gmra.mrb[0].mxu0 %v2466
      %v2699 = vpop.f32.mrb[0].mxu0
      %v2700 = vadd.f32 0.0, %v2699
      %v2701 = vpop.f32.mrb[0].mxu0
      %2702 = vmatprep.mubr.f32.mxu0 0.0
      %2703 = vmatmul.mubr.f32.gmra.mrb[0].mxu0 %v2468
      %v2704 = vpop.f32.mrb[0].mxu0
      %v2705 = vadd.f32 0.0, %v2704
      %v2706 = vpop.f32.mrb[0].mxu0
      %2707 = vmatprep.mubr.f32.mxu0 0.0
      %2708 = vmatmul.mubr.f32.gmra.mrb[0].mxu0 %v2471
      %v2709 = vpop.f32.mrb[0].mxu0
      %v2710 = vadd.f32 0.0, %v2709
      %v2711 = vpop.f32.mrb[0].mxu0
      %2712 = vmatprep.mubr.f32.mxu0 0.0
      %2713 = vmatmul.mubr.f32.gmra.mrb[0].mxu0 %v2473
      %v2714 = vpop.f32.mrb[0].mxu0
      %v2715 = vadd.f32 0.0, %v2714
      %v2716 = vpop.f32.mrb[0].mxu0
      %2717 = vmatprep.mubr.f32.mxu0 0.0
      %2718 = vmatmul.mubr.f32.gmra.mrb[0].mxu0 %v2476
      %v2719 = vpop.f32.mrb[0].mxu0
      %v2720 = vadd.f32 0.0, %v2719
      %v2721 = vpop.f32.mrb[0].mxu0
      %2722 = vmatprep.mubr.f32.mxu0 0.0
      %2723 = vmatmul.mubr.f32.gmra.mrb[0].mxu0 %v2478
      %v2724 = vpop.f32.mrb[0].mxu0
      %v2725 = vadd.f32 0.0, %v2724
      %v2726 = vpop.f32.mrb[0].mxu0
      %2727 = vmatprep.mubr.f32.mxu0 0.0
      %2728 = vmatmul.mubr.f32.gmra.mrb[0].mxu0 %v2481
      %v2729 = vpop.f32.mrb[0].mxu0
      %v2730 = vadd.f32 0.0, %v2729
      %v2731 = vpop.f32.mrb[0].mxu0
      %2732 = vmatprep.mubr.f32.mxu0 0.0
      %2733 = vmatmul.mubr.f32.gmra.mrb[0].mxu0 %v2483
      %v2734 = vpop.f32.mrb[0].mxu0
      %v2735 = vadd.f32 0.0, %v2734
      %v2736 = vpop.f32.mrb[0].mxu0
      %2737 = vmatprep.mubr.f32.mxu0 0.0
      %2738 = vmatmul.mubr.f32.gmra.mrb[0].mxu0 %v2486
      %v2739 = vpop.f32.mrb[0].mxu0
      %v2740 = vadd.f32 0.0, %v2739
      %v2741 = vpop.f32.mrb[0].mxu0
      %2742 = vmatprep.mubr.f32.mxu0 0.0
      %2743 = vmatmul.mubr.f32.gmra.mrb[0].mxu0 %v2488
      %v2744 = vpop.f32.mrb[0].mxu0
      %v2745 = vadd.f32 0.0, %v2744
      %v2746 = vpop.f32.mrb[0].mxu0
      %2747 = vmatprep.mubr.f32.mxu0 0.0
      %2748 = vmatmul.mubr.f32.gmra.mrb[0].mxu0 %v2491
      %v2749 = vpop.f32.mrb[0].mxu0
      %v2750 = vadd.f32 0.0, %v2749
      %v2751 = vpop.f32.mrb[0].mxu0
      %2752 = vmatprep.mubr.f32.mxu0 0.0
      %2753 = vmatmul.mubr.f32.gmra.mrb[0].mxu0 %v2493
      %v2754 = vpop.f32.mrb[0].mxu0
      %v2755 = vadd.f32 0.0, %v2754
      %v2756 = vpop.f32.mrb[0].mxu0
      %2757 = vmatprep.mubr.f32.mxu0 0.0
      %2758 = vmatmul.mubr.f32.gmra.mrb[0].mxu0 %v2496
      %v2759 = vpop.f32.mrb[0].mxu0
      %v2760 = vadd.f32 0.0, %v2759
      %v2761 = vpop.f32.mrb[0].mxu0
      %2762 = vmatprep.mubr.f32.mxu0 0.0
      %2763 = vmatmul.mubr.f32.gmra.mrb[0].mxu0 %v2498
      %v2764 = vpop.f32.mrb[0].mxu0
      %v2765 = vadd.f32 0.0, %v2764
      %v2766 = vpop.f32.mrb[0].mxu0
      %2767 = vmatprep.mubr.f32.mxu0 0.0
      %2768 = vmatmul.mubr.f32.gmra.mrb[0].mxu0 %v2501
      %v2769 = vpop.f32.mrb[0].mxu0
      %v2770 = vadd.f32 0.0, %v2769
      %v2771 = vpop.f32.mrb[0].mxu0
      %2772 = vmatprep.mubr.f32.mxu0 0.0
      %2773 = vmatmul.mubr.f32.gmra.mrb[0].mxu0 %v2503
      %v2774 = vpop.f32.mrb[0].mxu0
      %v2775 = vadd.f32 0.0, %v2774
      %v2776 = vpop.f32.mrb[0].mxu0
      %2777 = vdwg.mxu0
      %v2778 = vld [vmem:[#allocation2] sm:$0xff]
      %v2779 = vld [vmem:[#allocation2 + $0x8] sm:$0xff]
      %v2780 = vld [vmem:[#allocation2 + $0x10] sm:$0xff]
      %v2781 = vld [vmem:[#allocation2 + $0x18] sm:$0xff]
      %v2782 = vld [vmem:[#allocation2 + $0x20] sm:$0xff]
      %v2783 = vld [vmem:[#allocation2 + $0x28] sm:$0xff]
      %v2784 = vld [vmem:[#allocation2 + $0x30] sm:$0xff]
      %v2785 = vld [vmem:[#allocation2 + $0x38] sm:$0xff]
      %v2786 = vld [vmem:[#allocation2 + $0x40] sm:$0xff]
      %v2787 = vld [vmem:[#allocation2 + $0x48] sm:$0xff]
      %v2788 = vld [vmem:[#allocation2 + $0x50] sm:$0xff]
      %v2789 = vld [vmem:[#allocation2 + $0x58] sm:$0xff]
      %v2790 = vld [vmem:[#allocation2 + $0x60] sm:$0xff]
      %v2791 = vld [vmem:[#allocation2 + $0x68] sm:$0xff]
      %v2792 = vld [vmem:[#allocation2 + $0x70] sm:$0xff]
      %v2793 = vld [vmem:[#allocation2 + $0x78] sm:$0xff]
      %v2794 = vld [vmem:[#allocation2 + $0x80] sm:$0xff]
      %v2795 = vld [vmem:[#allocation2 + $0x88] sm:$0xff]
      %v2796 = vld [vmem:[#allocation2 + $0x90] sm:$0xff]
      %v2797 = vld [vmem:[#allocation2 + $0x98] sm:$0xff]
      %v2798 = vld [vmem:[#allocation2 + $0xa0] sm:$0xff]
      %v2799 = vld [vmem:[#allocation2 + $0xa8] sm:$0xff]
      %v2800 = vld [vmem:[#allocation2 + $0xb0] sm:$0xff]
      %v2801 = vld [vmem:[#allocation2 + $0xb8] sm:$0xff]
      %v2802 = vld [vmem:[#allocation2 + $0xc0] sm:$0xff]
      %v2803 = vld [vmem:[#allocation2 + $0xc8] sm:$0xff]
      %v2804 = vld [vmem:[#allocation2 + $0xd0] sm:$0xff]
      %v2805 = vld [vmem:[#allocation2 + $0xd8] sm:$0xff]
      %v2806 = vld [vmem:[#allocation2 + $0xe0] sm:$0xff]
      %v2807 = vld [vmem:[#allocation2 + $0xe8] sm:$0xff]
      %v2808 = vld [vmem:[#allocation2 + $0xf0] sm:$0xff]
      %v2809 = vld [vmem:[#allocation2 + $0xf8] sm:$0xff]
      %v2810 = vadd.f32 %v2778, %v2620
      %v2811 = vadd.f32 %v2779, %v2625
      %v2812 = vadd.f32 %v2780, %v2630
      %v2813 = vadd.f32 %v2781, %v2635
      %v2814 = vadd.f32 %v2782, %v2640
      %v2815 = vadd.f32 %v2783, %v2645
      %v2816 = vadd.f32 %v2784, %v2650
      %v2817 = vadd.f32 %v2785, %v2655
      %v2818 = vadd.f32 %v2786, %v2660
      %v2819 = vadd.f32 %v2787, %v2665
      %v2820 = vadd.f32 %v2788, %v2670
      %v2821 = vadd.f32 %v2789, %v2675
      %v2822 = vadd.f32 %v2790, %v2680
      %v2823 = vadd.f32 %v2791, %v2685
      %v2824 = vadd.f32 %v2792, %v2690
      %v2825 = vadd.f32 %v2793, %v2695
      %v2826 = vadd.f32 %v2794, %v2700
      %v2827 = vadd.f32 %v2795, %v2705
      %v2828 = vadd.f32 %v2796, %v2710
      %v2829 = vadd.f32 %v2797, %v2715
      %v2830 = vadd.f32 %v2798, %v2720
      %v2831 = vadd.f32 %v2799, %v2725
      %v2832 = vadd.f32 %v2800, %v2730
      %v2833 = vadd.f32 %v2801, %v2735
      %v2834 = vadd.f32 %v2802, %v2740
      %v2835 = vadd.f32 %v2803, %v2745
      %v2836 = vadd.f32 %v2804, %v2750
      %v2837 = vadd.f32 %v2805, %v2755
      %v2838 = vadd.f32 %v2806, %v2760
      %v2839 = vadd.f32 %v2807, %v2765
      %v2840 = vadd.f32 %v2808, %v2770
      %v2841 = vadd.f32 %v2809, %v2775
      %2842 = vst [vmem:[#allocation2] sm:$0xff] %v2810
      %2843 = vst [vmem:[#allocation2 + $0x8] sm:$0xff] %v2811
      %2844 = vst [vmem:[#allocation2 + $0x10] sm:$0xff] %v2812
      %2845 = vst [vmem:[#allocation2 + $0x18] sm:$0xff] %v2813
      %2846 = vst [vmem:[#allocation2 + $0x20] sm:$0xff] %v2814
      %2847 = vst [vmem:[#allocation2 + $0x28] sm:$0xff] %v2815
      %2848 = vst [vmem:[#allocation2 + $0x30] sm:$0xff] %v2816
      %2849 = vst [vmem:[#allocation2 + $0x38] sm:$0xff] %v2817
      %2850 = vst [vmem:[#allocation2 + $0x40] sm:$0xff] %v2818
      %2851 = vst [vmem:[#allocation2 + $0x48] sm:$0xff] %v2819
      %2852 = vst [vmem:[#allocation2 + $0x50] sm:$0xff] %v2820
      %2853 = vst [vmem:[#allocation2 + $0x58] sm:$0xff] %v2821
      %2854 = vst [vmem:[#allocation2 + $0x60] sm:$0xff] %v2822
      %2855 = vst [vmem:[#allocation2 + $0x68] sm:$0xff] %v2823
      %2856 = vst [vmem:[#allocation2 + $0x70] sm:$0xff] %v2824
      %2857 = vst [vmem:[#allocation2 + $0x78] sm:$0xff] %v2825
      %2858 = vst [vmem:[#allocation2 + $0x80] sm:$0xff] %v2826
      %2859 = vst [vmem:[#allocation2 + $0x88] sm:$0xff] %v2827
      %2860 = vst [vmem:[#allocation2 + $0x90] sm:$0xff] %v2828
      %2861 = vst [vmem:[#allocation2 + $0x98] sm:$0xff] %v2829
      %2862 = vst [vmem:[#allocation2 + $0xa0] sm:$0xff] %v2830
      %2863 = vst [vmem:[#allocation2 + $0xa8] sm:$0xff] %v2831
      %2864 = vst [vmem:[#allocation2 + $0xb0] sm:$0xff] %v2832
      %2865 = vst [vmem:[#allocation2 + $0xb8] sm:$0xff] %v2833
      %2866 = vst [vmem:[#allocation2 + $0xc0] sm:$0xff] %v2834
      %2867 = vst [vmem:[#allocation2 + $0xc8] sm:$0xff] %v2835
      %2868 = vst [vmem:[#allocation2 + $0xd0] sm:$0xff] %v2836
      %2869 = vst [vmem:[#allocation2 + $0xd8] sm:$0xff] %v2837
      %2870 = vst [vmem:[#allocation2 + $0xe0] sm:$0xff] %v2838
      %2871 = vst [vmem:[#allocation2 + $0xe8] sm:$0xff] %v2839
      %2872 = vst [vmem:[#allocation2 + $0xf0] sm:$0xff] %v2840
      %2873 = vst [vmem:[#allocation2 + $0xf8] sm:$0xff] %v2841
      %s2874 = scalar_lea.vmem %s243, 48
      %v2875 = vld [vmem:[%s2874] sm:$0xff]
      %v2876 = vld [vmem:[%s2874 + $0x8] sm:$0xff]
      %v2877 = vld [vmem:[%s2874 + $0x10] sm:$0x3]
      %v2878 = vld [vmem:[%s2874 + $0x18] sm:$0xff]
      %v2879 = vld [vmem:[%s2874 + $0x20] sm:$0xff]
      %v2880 = vld [vmem:[%s2874 + $0x28] sm:$0x3]
      %v2881 = vld [vmem:[%s2874 + $0x30] sm:$0xff]
      %v2882 = vld [vmem:[%s2874 + $0x38] sm:$0xff]
      %v2883 = vld [vmem:[%s2874 + $0x40] sm:$0x3]
      %v2884 = vld [vmem:[%s2874 + $0x48] sm:$0xff]
      %v2885 = vld [vmem:[%s2874 + $0x50] sm:$0xff]
      %v2886 = vld [vmem:[%s2874 + $0x58] sm:$0x3]
      %v2887 = vld [vmem:[%s2874 + $0x60] sm:$0xff]
      %v2888 = vld [vmem:[%s2874 + $0x68] sm:$0xff]
      %v2889 = vld [vmem:[%s2874 + $0x70] sm:$0x3]
      %v2890 = vld [vmem:[%s2874 + $0x78] sm:$0xff]
      %v2891 = vld [vmem:[%s2874 + $0x80] sm:$0xff]
      %v2892 = vld [vmem:[%s2874 + $0x88] sm:$0x3]
      %v2893 = vld [vmem:[%s2874 + $0x90] sm:$0xff]
      %v2894 = vld [vmem:[%s2874 + $0x98] sm:$0xff]
      %v2895 = vld [vmem:[%s2874 + $0xa0] sm:$0x3]
      %v2896 = vld [vmem:[%s2874 + $0xa8] sm:$0xff]
      %v2897 = vld [vmem:[%s2874 + $0xb0] sm:$0xff]
      %v2898 = vld [vmem:[%s2874 + $0xb8] sm:$0x3]
      %v2899 = vld [vmem:[%s2874 + $0xc0] sm:$0xff]
      %v2900 = vld [vmem:[%s2874 + $0xc8] sm:$0xff]
      %v2901 = vld [vmem:[%s2874 + $0xd0] sm:$0x3]
      %v2902 = vld [vmem:[%s2874 + $0xd8] sm:$0xff]
      %v2903 = vld [vmem:[%s2874 + $0xe0] sm:$0xff]
      %v2904 = vld [vmem:[%s2874 + $0xe8] sm:$0x3]
      %v2905 = vld [vmem:[%s2874 + $0xf0] sm:$0xff]
      %v2906 = vld [vmem:[%s2874 + $0xf8] sm:$0xff]
      %v2907 = vld [vmem:[%s2874 + $0x100] sm:$0x3]
      %v2908 = vld [vmem:[%s2874 + $0x108] sm:$0xff]
      %v2909 = vld [vmem:[%s2874 + $0x110] sm:$0xff]
      %v2910 = vld [vmem:[%s2874 + $0x118] sm:$0x3]
      %v2911 = vld [vmem:[%s2874 + $0x120] sm:$0xff]
      %v2912 = vld [vmem:[%s2874 + $0x128] sm:$0xff]
      %v2913 = vld [vmem:[%s2874 + $0x130] sm:$0x3]
      %v2914 = vld [vmem:[%s2874 + $0x138] sm:$0xff]
      %v2915 = vld [vmem:[%s2874 + $0x140] sm:$0xff]
      %v2916 = vld [vmem:[%s2874 + $0x148] sm:$0x3]
      %v2917 = vld [vmem:[%s2874 + $0x150] sm:$0xff]
      %v2918 = vld [vmem:[%s2874 + $0x158] sm:$0xff]
      %v2919 = vld [vmem:[%s2874 + $0x160] sm:$0x3]
      %v2920 = vld [vmem:[%s2874 + $0x168] sm:$0xff]
      %v2921 = vld [vmem:[%s2874 + $0x170] sm:$0xff]
      %v2922 = vld [vmem:[%s2874 + $0x178] sm:$0x3]
      %s2923 = scalar_lea.vmem %s247, 768
      %v2924 = vld [vmem:[%s2923] sm:$0xff]
      %v2925 = vld [vmem:[%s2923 + $0x8] sm:$0xff]
      %v2926 = vld [vmem:[%s2923 + $0x10] sm:$0xff]
      %v2927 = vld [vmem:[%s2923 + $0x18] sm:$0xff]
      %v2928 = vld [vmem:[%s2923 + $0x20] sm:$0xff]
      %v2929 = vld [vmem:[%s2923 + $0x28] sm:$0xff]
      %v2930 = vld [vmem:[%s2923 + $0x30] sm:$0xff]
      %v2931 = vld [vmem:[%s2923 + $0x38] sm:$0xff]
      %v2932 = vld [vmem:[%s2923 + $0x40] sm:$0xff]
      %v2933 = vld [vmem:[%s2923 + $0x48] sm:$0xff]
      %v2934 = vld [vmem:[%s2923 + $0x50] sm:$0xff]
      %v2935 = vld [vmem:[%s2923 + $0x58] sm:$0xff]
      %v2936 = vld [vmem:[%s2923 + $0x60] sm:$0xff]
      %v2937 = vld [vmem:[%s2923 + $0x68] sm:$0xff]
      %v2938 = vld [vmem:[%s2923 + $0x70] sm:$0xff]
      %v2939 = vld [vmem:[%s2923 + $0x78] sm:$0xff]
      %2940 = vmatprep.subr.mxu0 0.0
      %2941 = vmatpush1.msra.mxu0 %v2924
      %2942 = vmatprep.subr.mxu0 0.0
      %2943 = vmatpush1.msra.mxu0 %v2925
      %2944 = vmatprep.subr.mxu0 0.0
      %2945 = vmatpush1.msra.mxu0 %v2926
      %2946 = vmatprep.subr.mxu0 0.0
      %2947 = vmatpush1.msra.mxu0 %v2927
      %2948 = vmatprep.subr.mxu0 0.0
      %2949 = vmatpush1.msra.mxu0 %v2928
      %2950 = vmatprep.subr.mxu0 0.0
      %2951 = vmatpush1.msra.mxu0 %v2929
      %2952 = vmatprep.subr.mxu0 0.0
      %2953 = vmatpush1.msra.mxu0 %v2930
      %2954 = vmatprep.subr.mxu0 0.0
      %2955 = vmatpush1.msra.mxu0 %v2931
      %2956 = vmatprep.subr.mxu0 0.0
      %2957 = vmatpush1.msra.mxu0 %v2932
      %2958 = vmatprep.subr.mxu0 0.0
      %2959 = vmatpush1.msra.mxu0 %v2933
      %2960 = vmatprep.subr.mxu0 0.0
      %2961 = vmatpush1.msra.mxu0 %v2934
      %2962 = vmatprep.subr.mxu0 0.0
      %2963 = vmatpush1.msra.mxu0 %v2935
      %2964 = vmatprep.subr.mxu0 0.0
      %2965 = vmatpush1.msra.mxu0 %v2936
      %2966 = vmatprep.subr.mxu0 0.0
      %2967 = vmatpush1.msra.mxu0 %v2937
      %2968 = vmatprep.subr.mxu0 0.0
      %2969 = vmatpush1.msra.mxu0 %v2938
      %2970 = vmatprep.subr.mxu0 0.0
      %2971 = vmatpush1.msra.mxu0 %v2939
      %2972 = vmatprep.subr.mxu0 0.0
      %2973 = vmatpush1.msra.mxu0 0.0
      %2974 = vmatprep.subr.mxu0 0.0
      %2975 = vmatpush1.msra.mxu0 0.0
      %2976 = vmatprep.subr.mxu0 0.0
      %2977 = vmatpush1.msra.mxu0 0.0
      %2978 = vmatprep.subr.mxu0 0.0
      %2979 = vmatpush1.msra.mxu0 0.0
      %2980 = vmatprep.subr.mxu0 0.0
      %2981 = vmatpush1.msra.mxu0 0.0
      %2982 = vmatprep.subr.mxu0 0.0
      %2983 = vmatpush1.msra.mxu0 0.0
      %2984 = vmatprep.subr.mxu0 0.0
      %2985 = vmatpush1.msra.mxu0 0.0
      %2986 = vmatprep.subr.mxu0 0.0
      %2987 = vmatpush1.msra.mxu0 0.0
      %2988 = vmatprep.subr.mxu0 0.0
      %2989 = vmatpush1.msra.mxu0 0.0
      %2990 = vmatprep.subr.mxu0 0.0
      %2991 = vmatpush1.msra.mxu0 0.0
      %2992 = vmatprep.subr.mxu0 0.0
      %2993 = vmatpush1.msra.mxu0 0.0
      %2994 = vmatprep.subr.mxu0 0.0
      %2995 = vmatpush1.msra.mxu0 0.0
      %2996 = vmatprep.subr.mxu0 0.0
      %2997 = vmatpush1.msra.mxu0 0.0
      %2998 = vmatprep.subr.mxu0 0.0
      %2999 = vmatpush1.msra.mxu0 0.0
      %3000 = vmatprep.subr.mxu0 0.0
      %3001 = vmatpush1.msra.mxu0 0.0
      %3002 = vmatprep.subr.mxu0 0.0
      %3003 = vmatpush1.msra.mxu0 0.0
      %3004 = vmatprep.mubr.f32.mxu0 0.0
      %3005 = vmatmul.mubr.f32.gmra.mrb[0].mxu0 %v2875
      %v3006 = vpop.f32.mrb[0].mxu0
      %v3007 = vadd.f32 0.0, %v3006
      %v3008 = vpop.f32.mrb[0].mxu0
      %3009 = vmatprep.mubr.f32.mxu0 0.0
      %3010 = vmatmul.mubr.f32.gmra.mrb[0].mxu0 %v2876
      %v3011 = vpop.f32.mrb[0].mxu0
      %v3012 = vadd.f32 0.0, %v3011
      %v3013 = vpop.f32.mrb[0].mxu0
      %3014 = vmatprep.mubr.f32.mxu0 0.0
      %3015 = vmatmul.mubr.f32.gmra.mrb[0].mxu0 %v2878
      %v3016 = vpop.f32.mrb[0].mxu0
      %v3017 = vadd.f32 0.0, %v3016
      %v3018 = vpop.f32.mrb[0].mxu0
      %3019 = vmatprep.mubr.f32.mxu0 0.0
      %3020 = vmatmul.mubr.f32.gmra.mrb[0].mxu0 %v2879
      %v3021 = vpop.f32.mrb[0].mxu0
      %v3022 = vadd.f32 0.0, %v3021
      %v3023 = vpop.f32.mrb[0].mxu0
      %3024 = vmatprep.mubr.f32.mxu0 0.0
      %3025 = vmatmul.mubr.f32.gmra.mrb[0].mxu0 %v2881
      %v3026 = vpop.f32.mrb[0].mxu0
      %v3027 = vadd.f32 0.0, %v3026
      %v3028 = vpop.f32.mrb[0].mxu0
      %3029 = vmatprep.mubr.f32.mxu0 0.0
      %3030 = vmatmul.mubr.f32.gmra.mrb[0].mxu0 %v2882
      %v3031 = vpop.f32.mrb[0].mxu0
      %v3032 = vadd.f32 0.0, %v3031
      %v3033 = vpop.f32.mrb[0].mxu0
      %3034 = vmatprep.mubr.f32.mxu0 0.0
      %3035 = vmatmul.mubr.f32.gmra.mrb[0].mxu0 %v2884
      %v3036 = vpop.f32.mrb[0].mxu0
      %v3037 = vadd.f32 0.0, %v3036
      %v3038 = vpop.f32.mrb[0].mxu0
      %3039 = vmatprep.mubr.f32.mxu0 0.0
      %3040 = vmatmul.mubr.f32.gmra.mrb[0].mxu0 %v2885
      %v3041 = vpop.f32.mrb[0].mxu0
      %v3042 = vadd.f32 0.0, %v3041
      %v3043 = vpop.f32.mrb[0].mxu0
      %3044 = vmatprep.mubr.f32.mxu0 0.0
      %3045 = vmatmul.mubr.f32.gmra.mrb[0].mxu0 %v2887
      %v3046 = vpop.f32.mrb[0].mxu0
      %v3047 = vadd.f32 0.0, %v3046
      %v3048 = vpop.f32.mrb[0].mxu0
      %3049 = vmatprep.mubr.f32.mxu0 0.0
      %3050 = vmatmul.mubr.f32.gmra.mrb[0].mxu0 %v2888
      %v3051 = vpop.f32.mrb[0].mxu0
      %v3052 = vadd.f32 0.0, %v3051
      %v3053 = vpop.f32.mrb[0].mxu0
      %3054 = vmatprep.mubr.f32.mxu0 0.0
      %3055 = vmatmul.mubr.f32.gmra.mrb[0].mxu0 %v2890
      %v3056 = vpop.f32.mrb[0].mxu0
      %v3057 = vadd.f32 0.0, %v3056
      %v3058 = vpop.f32.mrb[0].mxu0
      %3059 = vmatprep.mubr.f32.mxu0 0.0
      %3060 = vmatmul.mubr.f32.gmra.mrb[0].mxu0 %v2891
      %v3061 = vpop.f32.mrb[0].mxu0
      %v3062 = vadd.f32 0.0, %v3061
      %v3063 = vpop.f32.mrb[0].mxu0
      %3064 = vmatprep.mubr.f32.mxu0 0.0
      %3065 = vmatmul.mubr.f32.gmra.mrb[0].mxu0 %v2893
      %v3066 = vpop.f32.mrb[0].mxu0
      %v3067 = vadd.f32 0.0, %v3066
      %v3068 = vpop.f32.mrb[0].mxu0
      %3069 = vmatprep.mubr.f32.mxu0 0.0
      %3070 = vmatmul.mubr.f32.gmra.mrb[0].mxu0 %v2894
      %v3071 = vpop.f32.mrb[0].mxu0
      %v3072 = vadd.f32 0.0, %v3071
      %v3073 = vpop.f32.mrb[0].mxu0
      %3074 = vmatprep.mubr.f32.mxu0 0.0
      %3075 = vmatmul.mubr.f32.gmra.mrb[0].mxu0 %v2896
      %v3076 = vpop.f32.mrb[0].mxu0
      %v3077 = vadd.f32 0.0, %v3076
      %v3078 = vpop.f32.mrb[0].mxu0
      %3079 = vmatprep.mubr.f32.mxu0 0.0
      %3080 = vmatmul.mubr.f32.gmra.mrb[0].mxu0 %v2897
      %v3081 = vpop.f32.mrb[0].mxu0
      %v3082 = vadd.f32 0.0, %v3081
      %v3083 = vpop.f32.mrb[0].mxu0
      %3084 = vmatprep.mubr.f32.mxu0 0.0
      %3085 = vmatmul.mubr.f32.gmra.mrb[0].mxu0 %v2899
      %v3086 = vpop.f32.mrb[0].mxu0
      %v3087 = vadd.f32 0.0, %v3086
      %v3088 = vpop.f32.mrb[0].mxu0
      %3089 = vmatprep.mubr.f32.mxu0 0.0
      %3090 = vmatmul.mubr.f32.gmra.mrb[0].mxu0 %v2900
      %v3091 = vpop.f32.mrb[0].mxu0
      %v3092 = vadd.f32 0.0, %v3091
      %v3093 = vpop.f32.mrb[0].mxu0
      %3094 = vmatprep.mubr.f32.mxu0 0.0
      %3095 = vmatmul.mubr.f32.gmra.mrb[0].mxu0 %v2902
      %v3096 = vpop.f32.mrb[0].mxu0
      %v3097 = vadd.f32 0.0, %v3096
      %v3098 = vpop.f32.mrb[0].mxu0
      %3099 = vmatprep.mubr.f32.mxu0 0.0
      %3100 = vmatmul.mubr.f32.gmra.mrb[0].mxu0 %v2903
      %v3101 = vpop.f32.mrb[0].mxu0
      %v3102 = vadd.f32 0.0, %v3101
      %v3103 = vpop.f32.mrb[0].mxu0
      %3104 = vmatprep.mubr.f32.mxu0 0.0
      %3105 = vmatmul.mubr.f32.gmra.mrb[0].mxu0 %v2905
      %v3106 = vpop.f32.mrb[0].mxu0
      %v3107 = vadd.f32 0.0, %v3106
      %v3108 = vpop.f32.mrb[0].mxu0
      %3109 = vmatprep.mubr.f32.mxu0 0.0
      %3110 = vmatmul.mubr.f32.gmra.mrb[0].mxu0 %v2906
      %v3111 = vpop.f32.mrb[0].mxu0
      %v3112 = vadd.f32 0.0, %v3111
      %v3113 = vpop.f32.mrb[0].mxu0
      %3114 = vmatprep.mubr.f32.mxu0 0.0
      %3115 = vmatmul.mubr.f32.gmra.mrb[0].mxu0 %v2908
      %v3116 = vpop.f32.mrb[0].mxu0
      %v3117 = vadd.f32 0.0, %v3116
      %v3118 = vpop.f32.mrb[0].mxu0
      %3119 = vmatprep.mubr.f32.mxu0 0.0
      %3120 = vmatmul.mubr.f32.gmra.mrb[0].mxu0 %v2909
      %v3121 = vpop.f32.mrb[0].mxu0
      %v3122 = vadd.f32 0.0, %v3121
      %v3123 = vpop.f32.mrb[0].mxu0
      %3124 = vmatprep.mubr.f32.mxu0 0.0
      %3125 = vmatmul.mubr.f32.gmra.mrb[0].mxu0 %v2911
      %v3126 = vpop.f32.mrb[0].mxu0
      %v3127 = vadd.f32 0.0, %v3126
      %v3128 = vpop.f32.mrb[0].mxu0
      %3129 = vmatprep.mubr.f32.mxu0 0.0
      %3130 = vmatmul.mubr.f32.gmra.mrb[0].mxu0 %v2912
      %v3131 = vpop.f32.mrb[0].mxu0
      %v3132 = vadd.f32 0.0, %v3131
      %v3133 = vpop.f32.mrb[0].mxu0
      %3134 = vmatprep.mubr.f32.mxu0 0.0
      %3135 = vmatmul.mubr.f32.gmra.mrb[0].mxu0 %v2914
      %v3136 = vpop.f32.mrb[0].mxu0
      %v3137 = vadd.f32 0.0, %v3136
      %v3138 = vpop.f32.mrb[0].mxu0
      %3139 = vmatprep.mubr.f32.mxu0 0.0
      %3140 = vmatmul.mubr.f32.gmra.mrb[0].mxu0 %v2915
      %v3141 = vpop.f32.mrb[0].mxu0
      %v3142 = vadd.f32 0.0, %v3141
      %v3143 = vpop.f32.mrb[0].mxu0
      %3144 = vmatprep.mubr.f32.mxu0 0.0
      %3145 = vmatmul.mubr.f32.gmra.mrb[0].mxu0 %v2917
      %v3146 = vpop.f32.mrb[0].mxu0
      %v3147 = vadd.f32 0.0, %v3146
      %v3148 = vpop.f32.mrb[0].mxu0
      %3149 = vmatprep.mubr.f32.mxu0 0.0
      %3150 = vmatmul.mubr.f32.gmra.mrb[0].mxu0 %v2918
      %v3151 = vpop.f32.mrb[0].mxu0
      %v3152 = vadd.f32 0.0, %v3151
      %v3153 = vpop.f32.mrb[0].mxu0
      %3154 = vmatprep.mubr.f32.mxu0 0.0
      %3155 = vmatmul.mubr.f32.gmra.mrb[0].mxu0 %v2920
      %v3156 = vpop.f32.mrb[0].mxu0
      %v3157 = vadd.f32 0.0, %v3156
      %v3158 = vpop.f32.mrb[0].mxu0
      %3159 = vmatprep.mubr.f32.mxu0 0.0
      %3160 = vmatmul.mubr.f32.gmra.mrb[0].mxu0 %v2921
      %v3161 = vpop.f32.mrb[0].mxu0
      %v3162 = vadd.f32 0.0, %v3161
      %v3163 = vpop.f32.mrb[0].mxu0
      %3164 = vdwg.mxu0
      %v3165 = vld [vmem:[#allocation2] sm:$0xff]
      %v3166 = vld [vmem:[#allocation2 + $0x8] sm:$0xff]
      %v3167 = vld [vmem:[#allocation2 + $0x10] sm:$0xff]
      %v3168 = vld [vmem:[#allocation2 + $0x18] sm:$0xff]
      %v3169 = vld [vmem:[#allocation2 + $0x20] sm:$0xff]
      %v3170 = vld [vmem:[#allocation2 + $0x28] sm:$0xff]
      %v3171 = vld [vmem:[#allocation2 + $0x30] sm:$0xff]
      %v3172 = vld [vmem:[#allocation2 + $0x38] sm:$0xff]
      %v3173 = vld [vmem:[#allocation2 + $0x40] sm:$0xff]
      %v3174 = vld [vmem:[#allocation2 + $0x48] sm:$0xff]
      %v3175 = vld [vmem:[#allocation2 + $0x50] sm:$0xff]
      %v3176 = vld [vmem:[#allocation2 + $0x58] sm:$0xff]
      %v3177 = vld [vmem:[#allocation2 + $0x60] sm:$0xff]
      %v3178 = vld [vmem:[#allocation2 + $0x68] sm:$0xff]
      %v3179 = vld [vmem:[#allocation2 + $0x70] sm:$0xff]
      %v3180 = vld [vmem:[#allocation2 + $0x78] sm:$0xff]
      %v3181 = vld [vmem:[#allocation2 + $0x80] sm:$0xff]
      %v3182 = vld [vmem:[#allocation2 + $0x88] sm:$0xff]
      %v3183 = vld [vmem:[#allocation2 + $0x90] sm:$0xff]
      %v3184 = vld [vmem:[#allocation2 + $0x98] sm:$0xff]
      %v3185 = vld [vmem:[#allocation2 + $0xa0] sm:$0xff]
      %v3186 = vld [vmem:[#allocation2 + $0xa8] sm:$0xff]
      %v3187 = vld [vmem:[#allocation2 + $0xb0] sm:$0xff]
      %v3188 = vld [vmem:[#allocation2 + $0xb8] sm:$0xff]
      %v3189 = vld [vmem:[#allocation2 + $0xc0] sm:$0xff]
      %v3190 = vld [vmem:[#allocation2 + $0xc8] sm:$0xff]
      %v3191 = vld [vmem:[#allocation2 + $0xd0] sm:$0xff]
      %v3192 = vld [vmem:[#allocation2 + $0xd8] sm:$0xff]
      %v3193 = vld [vmem:[#allocation2 + $0xe0] sm:$0xff]
      %v3194 = vld [vmem:[#allocation2 + $0xe8] sm:$0xff]
      %v3195 = vld [vmem:[#allocation2 + $0xf0] sm:$0xff]
      %v3196 = vld [vmem:[#allocation2 + $0xf8] sm:$0xff]
      %v3197 = vadd.f32 %v3165, %v3007
      %v3198 = vadd.f32 %v3166, %v3012
      %v3199 = vadd.f32 %v3167, %v3017
      %v3200 = vadd.f32 %v3168, %v3022
      %v3201 = vadd.f32 %v3169, %v3027
      %v3202 = vadd.f32 %v3170, %v3032
      %v3203 = vadd.f32 %v3171, %v3037
      %v3204 = vadd.f32 %v3172, %v3042
      %v3205 = vadd.f32 %v3173, %v3047
      %v3206 = vadd.f32 %v3174, %v3052
      %v3207 = vadd.f32 %v3175, %v3057
      %v3208 = vadd.f32 %v3176, %v3062
      %v3209 = vadd.f32 %v3177, %v3067
      %v3210 = vadd.f32 %v3178, %v3072
      %v3211 = vadd.f32 %v3179, %v3077
      %v3212 = vadd.f32 %v3180, %v3082
      %v3213 = vadd.f32 %v3181, %v3087
      %v3214 = vadd.f32 %v3182, %v3092
      %v3215 = vadd.f32 %v3183, %v3097
      %v3216 = vadd.f32 %v3184, %v3102
      %v3217 = vadd.f32 %v3185, %v3107
      %v3218 = vadd.f32 %v3186, %v3112
      %v3219 = vadd.f32 %v3187, %v3117
      %v3220 = vadd.f32 %v3188, %v3122
      %v3221 = vadd.f32 %v3189, %v3127
      %v3222 = vadd.f32 %v3190, %v3132
      %v3223 = vadd.f32 %v3191, %v3137
      %v3224 = vadd.f32 %v3192, %v3142
      %v3225 = vadd.f32 %v3193, %v3147
      %v3226 = vadd.f32 %v3194, %v3152
      %v3227 = vadd.f32 %v3195, %v3157
      %v3228 = vadd.f32 %v3196, %v3162
      %3229 = vst [vmem:[#allocation2] sm:$0xff] %v3197
      %3230 = vst [vmem:[#allocation2 + $0x8] sm:$0xff] %v3198
      %3231 = vst [vmem:[#allocation2 + $0x10] sm:$0xff] %v3199
      %3232 = vst [vmem:[#allocation2 + $0x18] sm:$0xff] %v3200
      %3233 = vst [vmem:[#allocation2 + $0x20] sm:$0xff] %v3201
      %3234 = vst [vmem:[#allocation2 + $0x28] sm:$0xff] %v3202
      %3235 = vst [vmem:[#allocation2 + $0x30] sm:$0xff] %v3203
      %3236 = vst [vmem:[#allocation2 + $0x38] sm:$0xff] %v3204
      %3237 = vst [vmem:[#allocation2 + $0x40] sm:$0xff] %v3205
      %3238 = vst [vmem:[#allocation2 + $0x48] sm:$0xff] %v3206
      %3239 = vst [vmem:[#allocation2 + $0x50] sm:$0xff] %v3207
      %3240 = vst [vmem:[#allocation2 + $0x58] sm:$0xff] %v3208
      %3241 = vst [vmem:[#allocation2 + $0x60] sm:$0xff] %v3209
      %3242 = vst [vmem:[#allocation2 + $0x68] sm:$0xff] %v3210
      %3243 = vst [vmem:[#allocation2 + $0x70] sm:$0xff] %v3211
      %3244 = vst [vmem:[#allocation2 + $0x78] sm:$0xff] %v3212
      %3245 = vst [vmem:[#allocation2 + $0x80] sm:$0xff] %v3213
      %3246 = vst [vmem:[#allocation2 + $0x88] sm:$0xff] %v3214
      %3247 = vst [vmem:[#allocation2 + $0x90] sm:$0xff] %v3215
      %3248 = vst [vmem:[#allocation2 + $0x98] sm:$0xff] %v3216
      %3249 = vst [vmem:[#allocation2 + $0xa0] sm:$0xff] %v3217
      %3250 = vst [vmem:[#allocation2 + $0xa8] sm:$0xff] %v3218
      %3251 = vst [vmem:[#allocation2 + $0xb0] sm:$0xff] %v3219
      %3252 = vst [vmem:[#allocation2 + $0xb8] sm:$0xff] %v3220
      %3253 = vst [vmem:[#allocation2 + $0xc0] sm:$0xff] %v3221
      %3254 = vst [vmem:[#allocation2 + $0xc8] sm:$0xff] %v3222
      %3255 = vst [vmem:[#allocation2 + $0xd0] sm:$0xff] %v3223
      %3256 = vst [vmem:[#allocation2 + $0xd8] sm:$0xff] %v3224
      %3257 = vst [vmem:[#allocation2 + $0xe0] sm:$0xff] %v3225
      %3258 = vst [vmem:[#allocation2 + $0xe8] sm:$0xff] %v3226
      %3259 = vst [vmem:[#allocation2 + $0xf0] sm:$0xff] %v3227
      %3260 = vst [vmem:[#allocation2 + $0xf8] sm:$0xff] %v3228
      %v3309 = vrot.slane %v2875, 1
      %v3310 = vrot.slane %v2876, 1
      %v3311 = vsel %vm637, %v3309, %v3310
      %v3312 = vrot.slane %v2877, 1
      %v3313 = vsel %vm637, %v3310, %v3312
      %v3314 = vrot.slane %v2878, 1
      %v3315 = vrot.slane %v2879, 1
      %v3316 = vsel %vm637, %v3314, %v3315
      %v3317 = vrot.slane %v2880, 1
      %v3318 = vsel %vm637, %v3315, %v3317
      %v3319 = vrot.slane %v2881, 1
      %v3320 = vrot.slane %v2882, 1
      %v3321 = vsel %vm637, %v3319, %v3320
      %v3322 = vrot.slane %v2883, 1
      %v3323 = vsel %vm637, %v3320, %v3322
      %v3324 = vrot.slane %v2884, 1
      %v3325 = vrot.slane %v2885, 1
      %v3326 = vsel %vm637, %v3324, %v3325
      %v3327 = vrot.slane %v2886, 1
      %v3328 = vsel %vm637, %v3325, %v3327
      %v3329 = vrot.slane %v2887, 1
      %v3330 = vrot.slane %v2888, 1
      %v3331 = vsel %vm637, %v3329, %v3330
      %v3332 = vrot.slane %v2889, 1
      %v3333 = vsel %vm637, %v3330, %v3332
      %v3334 = vrot.slane %v2890, 1
      %v3335 = vrot.slane %v2891, 1
      %v3336 = vsel %vm637, %v3334, %v3335
      %v3337 = vrot.slane %v2892, 1
      %v3338 = vsel %vm637, %v3335, %v3337
      %v3339 = vrot.slane %v2893, 1
      %v3340 = vrot.slane %v2894, 1
      %v3341 = vsel %vm637, %v3339, %v3340
      %v3342 = vrot.slane %v2895, 1
      %v3343 = vsel %vm637, %v3340, %v3342
      %v3344 = vrot.slane %v2896, 1
      %v3345 = vrot.slane %v2897, 1
      %v3346 = vsel %vm637, %v3344, %v3345
      %v3347 = vrot.slane %v2898, 1
      %v3348 = vsel %vm637, %v3345, %v3347
      %v3349 = vrot.slane %v2899, 1
      %v3350 = vrot.slane %v2900, 1
      %v3351 = vsel %vm637, %v3349, %v3350
      %v3352 = vrot.slane %v2901, 1
      %v3353 = vsel %vm637, %v3350, %v3352
      %v3354 = vrot.slane %v2902, 1
      %v3355 = vrot.slane %v2903, 1
      %v3356 = vsel %vm637, %v3354, %v3355
      %v3357 = vrot.slane %v2904, 1
      %v3358 = vsel %vm637, %v3355, %v3357
      %v3359 = vrot.slane %v2905, 1
      %v3360 = vrot.slane %v2906, 1
      %v3361 = vsel %vm637, %v3359, %v3360
      %v3362 = vrot.slane %v2907, 1
      %v3363 = vsel %vm637, %v3360, %v3362
      %v3364 = vrot.slane %v2908, 1
      %v3365 = vrot.slane %v2909, 1
      %v3366 = vsel %vm637, %v3364, %v3365
      %v3367 = vrot.slane %v2910, 1
      %v3368 = vsel %vm637, %v3365, %v3367
      %v3369 = vrot.slane %v2911, 1
      %v3370 = vrot.slane %v2912, 1
      %v3371 = vsel %vm637, %v3369, %v3370
      %v3372 = vrot.slane %v2913, 1
      %v3373 = vsel %vm637, %v3370, %v3372
      %v3374 = vrot.slane %v2914, 1
      %v3375 = vrot.slane %v2915, 1
      %v3376 = vsel %vm637, %v3374, %v3375
      %v3377 = vrot.slane %v2916, 1
      %v3378 = vsel %vm637, %v3375, %v3377
      %v3379 = vrot.slane %v2917, 1
      %v3380 = vrot.slane %v2918, 1
      %v3381 = vsel %vm637, %v3379, %v3380
      %v3382 = vrot.slane %v2919, 1
      %v3383 = vsel %vm637, %v3380, %v3382
      %v3384 = vrot.slane %v2920, 1
      %v3385 = vrot.slane %v2921, 1
      %v3386 = vsel %vm637, %v3384, %v3385
      %v3387 = vrot.slane %v2922, 1
      %v3388 = vsel %vm637, %v3385, %v3387
      %s3421 = scalar_lea.vmem %s247, 896
      %v3422 = vld [vmem:[%s3421] sm:$0xff]
      %v3423 = vld [vmem:[%s3421 + $0x8] sm:$0xff]
      %v3424 = vld [vmem:[%s3421 + $0x10] sm:$0xff]
      %v3425 = vld [vmem:[%s3421 + $0x18] sm:$0xff]
      %v3426 = vld [vmem:[%s3421 + $0x20] sm:$0xff]
      %v3427 = vld [vmem:[%s3421 + $0x28] sm:$0xff]
      %v3428 = vld [vmem:[%s3421 + $0x30] sm:$0xff]
      %v3429 = vld [vmem:[%s3421 + $0x38] sm:$0xff]
      %v3430 = vld [vmem:[%s3421 + $0x40] sm:$0xff]
      %v3431 = vld [vmem:[%s3421 + $0x48] sm:$0xff]
      %v3432 = vld [vmem:[%s3421 + $0x50] sm:$0xff]
      %v3433 = vld [vmem:[%s3421 + $0x58] sm:$0xff]
      %v3434 = vld [vmem:[%s3421 + $0x60] sm:$0xff]
      %v3435 = vld [vmem:[%s3421 + $0x68] sm:$0xff]
      %v3436 = vld [vmem:[%s3421 + $0x70] sm:$0xff]
      %v3437 = vld [vmem:[%s3421 + $0x78] sm:$0xff]
      %3438 = vmatprep.subr.mxu0 0.0
      %3439 = vmatpush1.msra.mxu0 %v3422
      %3440 = vmatprep.subr.mxu0 0.0
      %3441 = vmatpush1.msra.mxu0 %v3423
      %3442 = vmatprep.subr.mxu0 0.0
      %3443 = vmatpush1.msra.mxu0 %v3424
      %3444 = vmatprep.subr.mxu0 0.0
      %3445 = vmatpush1.msra.mxu0 %v3425
      %3446 = vmatprep.subr.mxu0 0.0
      %3447 = vmatpush1.msra.mxu0 %v3426
      %3448 = vmatprep.subr.mxu0 0.0
      %3449 = vmatpush1.msra.mxu0 %v3427
      %3450 = vmatprep.subr.mxu0 0.0
      %3451 = vmatpush1.msra.mxu0 %v3428
      %3452 = vmatprep.subr.mxu0 0.0
      %3453 = vmatpush1.msra.mxu0 %v3429
      %3454 = vmatprep.subr.mxu0 0.0
      %3455 = vmatpush1.msra.mxu0 %v3430
      %3456 = vmatprep.subr.mxu0 0.0
      %3457 = vmatpush1.msra.mxu0 %v3431
      %3458 = vmatprep.subr.mxu0 0.0
      %3459 = vmatpush1.msra.mxu0 %v3432
      %3460 = vmatprep.subr.mxu0 0.0
      %3461 = vmatpush1.msra.mxu0 %v3433
      %3462 = vmatprep.subr.mxu0 0.0
      %3463 = vmatpush1.msra.mxu0 %v3434
      %3464 = vmatprep.subr.mxu0 0.0
      %3465 = vmatpush1.msra.mxu0 %v3435
      %3466 = vmatprep.subr.mxu0 0.0
      %3467 = vmatpush1.msra.mxu0 %v3436
      %3468 = vmatprep.subr.mxu0 0.0
      %3469 = vmatpush1.msra.mxu0 %v3437
      %3470 = vmatprep.subr.mxu0 0.0
      %3471 = vmatpush1.msra.mxu0 0.0
      %3472 = vmatprep.subr.mxu0 0.0
      %3473 = vmatpush1.msra.mxu0 0.0
      %3474 = vmatprep.subr.mxu0 0.0
      %3475 = vmatpush1.msra.mxu0 0.0
      %3476 = vmatprep.subr.mxu0 0.0
      %3477 = vmatpush1.msra.mxu0 0.0
      %3478 = vmatprep.subr.mxu0 0.0
      %3479 = vmatpush1.msra.mxu0 0.0
      %3480 = vmatprep.subr.mxu0 0.0
      %3481 = vmatpush1.msra.mxu0 0.0
      %3482 = vmatprep.subr.mxu0 0.0
      %3483 = vmatpush1.msra.mxu0 0.0
      %3484 = vmatprep.subr.mxu0 0.0
      %3485 = vmatpush1.msra.mxu0 0.0
      %3486 = vmatprep.subr.mxu0 0.0
      %3487 = vmatpush1.msra.mxu0 0.0
      %3488 = vmatprep.subr.mxu0 0.0
      %3489 = vmatpush1.msra.mxu0 0.0
      %3490 = vmatprep.subr.mxu0 0.0
      %3491 = vmatpush1.msra.mxu0 0.0
      %3492 = vmatprep.subr.mxu0 0.0
      %3493 = vmatpush1.msra.mxu0 0.0
      %3494 = vmatprep.subr.mxu0 0.0
      %3495 = vmatpush1.msra.mxu0 0.0
      %3496 = vmatprep.subr.mxu0 0.0
      %3497 = vmatpush1.msra.mxu0 0.0
      %3498 = vmatprep.subr.mxu0 0.0
      %3499 = vmatpush1.msra.mxu0 0.0
      %3500 = vmatprep.subr.mxu0 0.0
      %3501 = vmatpush1.msra.mxu0 0.0
      %3502 = vmatprep.mubr.f32.mxu0 0.0
      %3503 = vmatmul.mubr.f32.gmra.mrb[0].mxu0 %v3311
      %v3504 = vpop.f32.mrb[0].mxu0
      %v3505 = vadd.f32 0.0, %v3504
      %v3506 = vpop.f32.mrb[0].mxu0
      %3507 = vmatprep.mubr.f32.mxu0 0.0
      %3508 = vmatmul.mubr.f32.gmra.mrb[0].mxu0 %v3313
      %v3509 = vpop.f32.mrb[0].mxu0
      %v3510 = vadd.f32 0.0, %v3509
      %v3511 = vpop.f32.mrb[0].mxu0
      %3512 = vmatprep.mubr.f32.mxu0 0.0
      %3513 = vmatmul.mubr.f32.gmra.mrb[0].mxu0 %v3316
      %v3514 = vpop.f32.mrb[0].mxu0
      %v3515 = vadd.f32 0.0, %v3514
      %v3516 = vpop.f32.mrb[0].mxu0
      %3517 = vmatprep.mubr.f32.mxu0 0.0
      %3518 = vmatmul.mubr.f32.gmra.mrb[0].mxu0 %v3318
      %v3519 = vpop.f32.mrb[0].mxu0
      %v3520 = vadd.f32 0.0, %v3519
      %v3521 = vpop.f32.mrb[0].mxu0
      %3522 = vmatprep.mubr.f32.mxu0 0.0
      %3523 = vmatmul.mubr.f32.gmra.mrb[0].mxu0 %v3321
      %v3524 = vpop.f32.mrb[0].mxu0
      %v3525 = vadd.f32 0.0, %v3524
      %v3526 = vpop.f32.mrb[0].mxu0
      %3527 = vmatprep.mubr.f32.mxu0 0.0
      %3528 = vmatmul.mubr.f32.gmra.mrb[0].mxu0 %v3323
      %v3529 = vpop.f32.mrb[0].mxu0
      %v3530 = vadd.f32 0.0, %v3529
      %v3531 = vpop.f32.mrb[0].mxu0
      %3532 = vmatprep.mubr.f32.mxu0 0.0
      %3533 = vmatmul.mubr.f32.gmra.mrb[0].mxu0 %v3326
      %v3534 = vpop.f32.mrb[0].mxu0
      %v3535 = vadd.f32 0.0, %v3534
      %v3536 = vpop.f32.mrb[0].mxu0
      %3537 = vmatprep.mubr.f32.mxu0 0.0
      %3538 = vmatmul.mubr.f32.gmra.mrb[0].mxu0 %v3328
      %v3539 = vpop.f32.mrb[0].mxu0
      %v3540 = vadd.f32 0.0, %v3539
      %v3541 = vpop.f32.mrb[0].mxu0
      %3542 = vmatprep.mubr.f32.mxu0 0.0
      %3543 = vmatmul.mubr.f32.gmra.mrb[0].mxu0 %v3331
      %v3544 = vpop.f32.mrb[0].mxu0
      %v3545 = vadd.f32 0.0, %v3544
      %v3546 = vpop.f32.mrb[0].mxu0
      %3547 = vmatprep.mubr.f32.mxu0 0.0
      %3548 = vmatmul.mubr.f32.gmra.mrb[0].mxu0 %v3333
      %v3549 = vpop.f32.mrb[0].mxu0
      %v3550 = vadd.f32 0.0, %v3549
      %v3551 = vpop.f32.mrb[0].mxu0
      %3552 = vmatprep.mubr.f32.mxu0 0.0
      %3553 = vmatmul.mubr.f32.gmra.mrb[0].mxu0 %v3336
      %v3554 = vpop.f32.mrb[0].mxu0
      %v3555 = vadd.f32 0.0, %v3554
      %v3556 = vpop.f32.mrb[0].mxu0
      %3557 = vmatprep.mubr.f32.mxu0 0.0
      %3558 = vmatmul.mubr.f32.gmra.mrb[0].mxu0 %v3338
      %v3559 = vpop.f32.mrb[0].mxu0
      %v3560 = vadd.f32 0.0, %v3559
      %v3561 = vpop.f32.mrb[0].mxu0
      %3562 = vmatprep.mubr.f32.mxu0 0.0
      %3563 = vmatmul.mubr.f32.gmra.mrb[0].mxu0 %v3341
      %v3564 = vpop.f32.mrb[0].mxu0
      %v3565 = vadd.f32 0.0, %v3564
      %v3566 = vpop.f32.mrb[0].mxu0
      %3567 = vmatprep.mubr.f32.mxu0 0.0
      %3568 = vmatmul.mubr.f32.gmra.mrb[0].mxu0 %v3343
      %v3569 = vpop.f32.mrb[0].mxu0
      %v3570 = vadd.f32 0.0, %v3569
      %v3571 = vpop.f32.mrb[0].mxu0
      %3572 = vmatprep.mubr.f32.mxu0 0.0
      %3573 = vmatmul.mubr.f32.gmra.mrb[0].mxu0 %v3346
      %v3574 = vpop.f32.mrb[0].mxu0
      %v3575 = vadd.f32 0.0, %v3574
      %v3576 = vpop.f32.mrb[0].mxu0
      %3577 = vmatprep.mubr.f32.mxu0 0.0
      %3578 = vmatmul.mubr.f32.gmra.mrb[0].mxu0 %v3348
      %v3579 = vpop.f32.mrb[0].mxu0
      %v3580 = vadd.f32 0.0, %v3579
      %v3581 = vpop.f32.mrb[0].mxu0
      %3582 = vmatprep.mubr.f32.mxu0 0.0
      %3583 = vmatmul.mubr.f32.gmra.mrb[0].mxu0 %v3351
      %v3584 = vpop.f32.mrb[0].mxu0
      %v3585 = vadd.f32 0.0, %v3584
      %v3586 = vpop.f32.mrb[0].mxu0
      %3587 = vmatprep.mubr.f32.mxu0 0.0
      %3588 = vmatmul.mubr.f32.gmra.mrb[0].mxu0 %v3353
      %v3589 = vpop.f32.mrb[0].mxu0
      %v3590 = vadd.f32 0.0, %v3589
      %v3591 = vpop.f32.mrb[0].mxu0
      %3592 = vmatprep.mubr.f32.mxu0 0.0
      %3593 = vmatmul.mubr.f32.gmra.mrb[0].mxu0 %v3356
      %v3594 = vpop.f32.mrb[0].mxu0
      %v3595 = vadd.f32 0.0, %v3594
      %v3596 = vpop.f32.mrb[0].mxu0
      %3597 = vmatprep.mubr.f32.mxu0 0.0
      %3598 = vmatmul.mubr.f32.gmra.mrb[0].mxu0 %v3358
      %v3599 = vpop.f32.mrb[0].mxu0
      %v3600 = vadd.f32 0.0, %v3599
      %v3601 = vpop.f32.mrb[0].mxu0
      %3602 = vmatprep.mubr.f32.mxu0 0.0
      %3603 = vmatmul.mubr.f32.gmra.mrb[0].mxu0 %v3361
      %v3604 = vpop.f32.mrb[0].mxu0
      %v3605 = vadd.f32 0.0, %v3604
      %v3606 = vpop.f32.mrb[0].mxu0
      %3607 = vmatprep.mubr.f32.mxu0 0.0
      %3608 = vmatmul.mubr.f32.gmra.mrb[0].mxu0 %v3363
      %v3609 = vpop.f32.mrb[0].mxu0
      %v3610 = vadd.f32 0.0, %v3609
      %v3611 = vpop.f32.mrb[0].mxu0
      %3612 = vmatprep.mubr.f32.mxu0 0.0
      %3613 = vmatmul.mubr.f32.gmra.mrb[0].mxu0 %v3366
      %v3614 = vpop.f32.mrb[0].mxu0
      %v3615 = vadd.f32 0.0, %v3614
      %v3616 = vpop.f32.mrb[0].mxu0
      %3617 = vmatprep.mubr.f32.mxu0 0.0
      %3618 = vmatmul.mubr.f32.gmra.mrb[0].mxu0 %v3368
      %v3619 = vpop.f32.mrb[0].mxu0
      %v3620 = vadd.f32 0.0, %v3619
      %v3621 = vpop.f32.mrb[0].mxu0
      %3622 = vmatprep.mubr.f32.mxu0 0.0
      %3623 = vmatmul.mubr.f32.gmra.mrb[0].mxu0 %v3371
      %v3624 = vpop.f32.mrb[0].mxu0
      %v3625 = vadd.f32 0.0, %v3624
      %v3626 = vpop.f32.mrb[0].mxu0
      %3627 = vmatprep.mubr.f32.mxu0 0.0
      %3628 = vmatmul.mubr.f32.gmra.mrb[0].mxu0 %v3373
      %v3629 = vpop.f32.mrb[0].mxu0
      %v3630 = vadd.f32 0.0, %v3629
      %v3631 = vpop.f32.mrb[0].mxu0
      %3632 = vmatprep.mubr.f32.mxu0 0.0
      %3633 = vmatmul.mubr.f32.gmra.mrb[0].mxu0 %v3376
      %v3634 = vpop.f32.mrb[0].mxu0
      %v3635 = vadd.f32 0.0, %v3634
      %v3636 = vpop.f32.mrb[0].mxu0
      %3637 = vmatprep.mubr.f32.mxu0 0.0
      %3638 = vmatmul.mubr.f32.gmra.mrb[0].mxu0 %v3378
      %v3639 = vpop.f32.mrb[0].mxu0
      %v3640 = vadd.f32 0.0, %v3639
      %v3641 = vpop.f32.mrb[0].mxu0
      %3642 = vmatprep.mubr.f32.mxu0 0.0
      %3643 = vmatmul.mubr.f32.gmra.mrb[0].mxu0 %v3381
      %v3644 = vpop.f32.mrb[0].mxu0
      %v3645 = vadd.f32 0.0, %v3644
      %v3646 = vpop.f32.mrb[0].mxu0
      %3647 = vmatprep.mubr.f32.mxu0 0.0
      %3648 = vmatmul.mubr.f32.gmra.mrb[0].mxu0 %v3383
      %v3649 = vpop.f32.mrb[0].mxu0
      %v3650 = vadd.f32 0.0, %v3649
      %v3651 = vpop.f32.mrb[0].mxu0
      %3652 = vmatprep.mubr.f32.mxu0 0.0
      %3653 = vmatmul.mubr.f32.gmra.mrb[0].mxu0 %v3386
      %v3654 = vpop.f32.mrb[0].mxu0
      %v3655 = vadd.f32 0.0, %v3654
      %v3656 = vpop.f32.mrb[0].mxu0
      %3657 = vmatprep.mubr.f32.mxu0 0.0
      %3658 = vmatmul.mubr.f32.gmra.mrb[0].mxu0 %v3388
      %v3659 = vpop.f32.mrb[0].mxu0
      %v3660 = vadd.f32 0.0, %v3659
      %v3661 = vpop.f32.mrb[0].mxu0
      %3662 = vdwg.mxu0
      %v3663 = vld [vmem:[#allocation2] sm:$0xff]
      %v3664 = vld [vmem:[#allocation2 + $0x8] sm:$0xff]
      %v3665 = vld [vmem:[#allocation2 + $0x10] sm:$0xff]
      %v3666 = vld [vmem:[#allocation2 + $0x18] sm:$0xff]
      %v3667 = vld [vmem:[#allocation2 + $0x20] sm:$0xff]
      %v3668 = vld [vmem:[#allocation2 + $0x28] sm:$0xff]
      %v3669 = vld [vmem:[#allocation2 + $0x30] sm:$0xff]
      %v3670 = vld [vmem:[#allocation2 + $0x38] sm:$0xff]
      %v3671 = vld [vmem:[#allocation2 + $0x40] sm:$0xff]
      %v3672 = vld [vmem:[#allocation2 + $0x48] sm:$0xff]
      %v3673 = vld [vmem:[#allocation2 + $0x50] sm:$0xff]
      %v3674 = vld [vmem:[#allocation2 + $0x58] sm:$0xff]
      %v3675 = vld [vmem:[#allocation2 + $0x60] sm:$0xff]
      %v3676 = vld [vmem:[#allocation2 + $0x68] sm:$0xff]
      %v3677 = vld [vmem:[#allocation2 + $0x70] sm:$0xff]
      %v3678 = vld [vmem:[#allocation2 + $0x78] sm:$0xff]
      %v3679 = vld [vmem:[#allocation2 + $0x80] sm:$0xff]
      %v3680 = vld [vmem:[#allocation2 + $0x88] sm:$0xff]
      %v3681 = vld [vmem:[#allocation2 + $0x90] sm:$0xff]
      %v3682 = vld [vmem:[#allocation2 + $0x98] sm:$0xff]
      %v3683 = vld [vmem:[#allocation2 + $0xa0] sm:$0xff]
      %v3684 = vld [vmem:[#allocation2 + $0xa8] sm:$0xff]
      %v3685 = vld [vmem:[#allocation2 + $0xb0] sm:$0xff]
      %v3686 = vld [vmem:[#allocation2 + $0xb8] sm:$0xff]
      %v3687 = vld [vmem:[#allocation2 + $0xc0] sm:$0xff]
      %v3688 = vld [vmem:[#allocation2 + $0xc8] sm:$0xff]
      %v3689 = vld [vmem:[#allocation2 + $0xd0] sm:$0xff]
      %v3690 = vld [vmem:[#allocation2 + $0xd8] sm:$0xff]
      %v3691 = vld [vmem:[#allocation2 + $0xe0] sm:$0xff]
      %v3692 = vld [vmem:[#allocation2 + $0xe8] sm:$0xff]
      %v3693 = vld [vmem:[#allocation2 + $0xf0] sm:$0xff]
      %v3694 = vld [vmem:[#allocation2 + $0xf8] sm:$0xff]
      %v3695 = vadd.f32 %v3663, %v3505
      %v3696 = vadd.f32 %v3664, %v3510
      %v3697 = vadd.f32 %v3665, %v3515
      %v3698 = vadd.f32 %v3666, %v3520
      %v3699 = vadd.f32 %v3667, %v3525
      %v3700 = vadd.f32 %v3668, %v3530
      %v3701 = vadd.f32 %v3669, %v3535
      %v3702 = vadd.f32 %v3670, %v3540
      %v3703 = vadd.f32 %v3671, %v3545
      %v3704 = vadd.f32 %v3672, %v3550
      %v3705 = vadd.f32 %v3673, %v3555
      %v3706 = vadd.f32 %v3674, %v3560
      %v3707 = vadd.f32 %v3675, %v3565
      %v3708 = vadd.f32 %v3676, %v3570
      %v3709 = vadd.f32 %v3677, %v3575
      %v3710 = vadd.f32 %v3678, %v3580
      %v3711 = vadd.f32 %v3679, %v3585
      %v3712 = vadd.f32 %v3680, %v3590
      %v3713 = vadd.f32 %v3681, %v3595
      %v3714 = vadd.f32 %v3682, %v3600
      %v3715 = vadd.f32 %v3683, %v3605
      %v3716 = vadd.f32 %v3684, %v3610
      %v3717 = vadd.f32 %v3685, %v3615
      %v3718 = vadd.f32 %v3686, %v3620
      %v3719 = vadd.f32 %v3687, %v3625
      %v3720 = vadd.f32 %v3688, %v3630
      %v3721 = vadd.f32 %v3689, %v3635
      %v3722 = vadd.f32 %v3690, %v3640
      %v3723 = vadd.f32 %v3691, %v3645
      %v3724 = vadd.f32 %v3692, %v3650
      %v3725 = vadd.f32 %v3693, %v3655
      %v3726 = vadd.f32 %v3694, %v3660
      %3727 = vst [vmem:[#allocation2] sm:$0xff] %v3695
      %3728 = vst [vmem:[#allocation2 + $0x8] sm:$0xff] %v3696
      %3729 = vst [vmem:[#allocation2 + $0x10] sm:$0xff] %v3697
      %3730 = vst [vmem:[#allocation2 + $0x18] sm:$0xff] %v3698
      %3731 = vst [vmem:[#allocation2 + $0x20] sm:$0xff] %v3699
      %3732 = vst [vmem:[#allocation2 + $0x28] sm:$0xff] %v3700
      %3733 = vst [vmem:[#allocation2 + $0x30] sm:$0xff] %v3701
      %3734 = vst [vmem:[#allocation2 + $0x38] sm:$0xff] %v3702
      %3735 = vst [vmem:[#allocation2 + $0x40] sm:$0xff] %v3703
      %3736 = vst [vmem:[#allocation2 + $0x48] sm:$0xff] %v3704
      %3737 = vst [vmem:[#allocation2 + $0x50] sm:$0xff] %v3705
      %3738 = vst [vmem:[#allocation2 + $0x58] sm:$0xff] %v3706
      %3739 = vst [vmem:[#allocation2 + $0x60] sm:$0xff] %v3707
      %3740 = vst [vmem:[#allocation2 + $0x68] sm:$0xff] %v3708
      %3741 = vst [vmem:[#allocation2 + $0x70] sm:$0xff] %v3709
      %3742 = vst [vmem:[#allocation2 + $0x78] sm:$0xff] %v3710
      %3743 = vst [vmem:[#allocation2 + $0x80] sm:$0xff] %v3711
      %3744 = vst [vmem:[#allocation2 + $0x88] sm:$0xff] %v3712
      %3745 = vst [vmem:[#allocation2 + $0x90] sm:$0xff] %v3713
      %3746 = vst [vmem:[#allocation2 + $0x98] sm:$0xff] %v3714
      %3747 = vst [vmem:[#allocation2 + $0xa0] sm:$0xff] %v3715
      %3748 = vst [vmem:[#allocation2 + $0xa8] sm:$0xff] %v3716
      %3749 = vst [vmem:[#allocation2 + $0xb0] sm:$0xff] %v3717
      %3750 = vst [vmem:[#allocation2 + $0xb8] sm:$0xff] %v3718
      %3751 = vst [vmem:[#allocation2 + $0xc0] sm:$0xff] %v3719
      %3752 = vst [vmem:[#allocation2 + $0xc8] sm:$0xff] %v3720
      %3753 = vst [vmem:[#allocation2 + $0xd0] sm:$0xff] %v3721
      %3754 = vst [vmem:[#allocation2 + $0xd8] sm:$0xff] %v3722
      %3755 = vst [vmem:[#allocation2 + $0xe0] sm:$0xff] %v3723
      %3756 = vst [vmem:[#allocation2 + $0xe8] sm:$0xff] %v3724
      %3757 = vst [vmem:[#allocation2 + $0xf0] sm:$0xff] %v3725
      %3758 = vst [vmem:[#allocation2 + $0xf8] sm:$0xff] %v3726
      %v3759 = vrot.slane %v2875, 2
      %v3760 = vrot.slane %v2876, 2
      %v3761 = vsel %vm1088, %v3759, %v3760
      %v3762 = vrot.slane %v2877, 2
      %v3763 = vsel %vm1088, %v3760, %v3762
      %v3764 = vrot.slane %v2878, 2
      %v3765 = vrot.slane %v2879, 2
      %v3766 = vsel %vm1088, %v3764, %v3765
      %v3767 = vrot.slane %v2880, 2
      %v3768 = vsel %vm1088, %v3765, %v3767
      %v3769 = vrot.slane %v2881, 2
      %v3770 = vrot.slane %v2882, 2
      %v3771 = vsel %vm1088, %v3769, %v3770
      %v3772 = vrot.slane %v2883, 2
      %v3773 = vsel %vm1088, %v3770, %v3772
      %v3774 = vrot.slane %v2884, 2
      %v3775 = vrot.slane %v2885, 2
      %v3776 = vsel %vm1088, %v3774, %v3775
      %v3777 = vrot.slane %v2886, 2
      %v3778 = vsel %vm1088, %v3775, %v3777
      %v3779 = vrot.slane %v2887, 2
      %v3780 = vrot.slane %v2888, 2
      %v3781 = vsel %vm1088, %v3779, %v3780
      %v3782 = vrot.slane %v2889, 2
      %v3783 = vsel %vm1088, %v3780, %v3782
      %v3784 = vrot.slane %v2890, 2
      %v3785 = vrot.slane %v2891, 2
      %v3786 = vsel %vm1088, %v3784, %v3785
      %v3787 = vrot.slane %v2892, 2
      %v3788 = vsel %vm1088, %v3785, %v3787
      %v3789 = vrot.slane %v2893, 2
      %v3790 = vrot.slane %v2894, 2
      %v3791 = vsel %vm1088, %v3789, %v3790
      %v3792 = vrot.slane %v2895, 2
      %v3793 = vsel %vm1088, %v3790, %v3792
      %v3794 = vrot.slane %v2896, 2
      %v3795 = vrot.slane %v2897, 2
      %v3796 = vsel %vm1088, %v3794, %v3795
      %v3797 = vrot.slane %v2898, 2
      %v3798 = vsel %vm1088, %v3795, %v3797
      %v3799 = vrot.slane %v2899, 2
      %v3800 = vrot.slane %v2900, 2
      %v3801 = vsel %vm1088, %v3799, %v3800
      %v3802 = vrot.slane %v2901, 2
      %v3803 = vsel %vm1088, %v3800, %v3802
      %v3804 = vrot.slane %v2902, 2
      %v3805 = vrot.slane %v2903, 2
      %v3806 = vsel %vm1088, %v3804, %v3805
      %v3807 = vrot.slane %v2904, 2
      %v3808 = vsel %vm1088, %v3805, %v3807
      %v3809 = vrot.slane %v2905, 2
      %v3810 = vrot.slane %v2906, 2
      %v3811 = vsel %vm1088, %v3809, %v3810
      %v3812 = vrot.slane %v2907, 2
      %v3813 = vsel %vm1088, %v3810, %v3812
      %v3814 = vrot.slane %v2908, 2
      %v3815 = vrot.slane %v2909, 2
      %v3816 = vsel %vm1088, %v3814, %v3815
      %v3817 = vrot.slane %v2910, 2
      %v3818 = vsel %vm1088, %v3815, %v3817
      %v3819 = vrot.slane %v2911, 2
      %v3820 = vrot.slane %v2912, 2
      %v3821 = vsel %vm1088, %v3819, %v3820
      %v3822 = vrot.slane %v2913, 2
      %v3823 = vsel %vm1088, %v3820, %v3822
      %v3824 = vrot.slane %v2914, 2
      %v3825 = vrot.slane %v2915, 2
      %v3826 = vsel %vm1088, %v3824, %v3825
      %v3827 = vrot.slane %v2916, 2
      %v3828 = vsel %vm1088, %v3825, %v3827
      %v3829 = vrot.slane %v2917, 2
      %v3830 = vrot.slane %v2918, 2
      %v3831 = vsel %vm1088, %v3829, %v3830
      %v3832 = vrot.slane %v2919, 2
      %v3833 = vsel %vm1088, %v3830, %v3832
      %v3834 = vrot.slane %v2920, 2
      %v3835 = vrot.slane %v2921, 2
      %v3836 = vsel %vm1088, %v3834, %v3835
      %v3837 = vrot.slane %v2922, 2
      %v3838 = vsel %vm1088, %v3835, %v3837
      %s3871 = scalar_lea.vmem %s247, 1024
      %v3872 = vld [vmem:[%s3871] sm:$0xff]
      %v3873 = vld [vmem:[%s3871 + $0x8] sm:$0xff]
      %v3874 = vld [vmem:[%s3871 + $0x10] sm:$0xff]
      %v3875 = vld [vmem:[%s3871 + $0x18] sm:$0xff]
      %v3876 = vld [vmem:[%s3871 + $0x20] sm:$0xff]
      %v3877 = vld [vmem:[%s3871 + $0x28] sm:$0xff]
      %v3878 = vld [vmem:[%s3871 + $0x30] sm:$0xff]
      %v3879 = vld [vmem:[%s3871 + $0x38] sm:$0xff]
      %v3880 = vld [vmem:[%s3871 + $0x40] sm:$0xff]
      %v3881 = vld [vmem:[%s3871 + $0x48] sm:$0xff]
      %v3882 = vld [vmem:[%s3871 + $0x50] sm:$0xff]
      %v3883 = vld [vmem:[%s3871 + $0x58] sm:$0xff]
      %v3884 = vld [vmem:[%s3871 + $0x60] sm:$0xff]
      %v3885 = vld [vmem:[%s3871 + $0x68] sm:$0xff]
      %v3886 = vld [vmem:[%s3871 + $0x70] sm:$0xff]
      %v3887 = vld [vmem:[%s3871 + $0x78] sm:$0xff]
      %3888 = vmatprep.subr.mxu0 0.0
      %3889 = vmatpush1.msra.mxu0 %v3872
      %3890 = vmatprep.subr.mxu0 0.0
      %3891 = vmatpush1.msra.mxu0 %v3873
      %3892 = vmatprep.subr.mxu0 0.0
      %3893 = vmatpush1.msra.mxu0 %v3874
      %3894 = vmatprep.subr.mxu0 0.0
      %3895 = vmatpush1.msra.mxu0 %v3875
      %3896 = vmatprep.subr.mxu0 0.0
      %3897 = vmatpush1.msra.mxu0 %v3876
      %3898 = vmatprep.subr.mxu0 0.0
      %3899 = vmatpush1.msra.mxu0 %v3877
      %3900 = vmatprep.subr.mxu0 0.0
      %3901 = vmatpush1.msra.mxu0 %v3878
      %3902 = vmatprep.subr.mxu0 0.0
      %3903 = vmatpush1.msra.mxu0 %v3879
      %3904 = vmatprep.subr.mxu0 0.0
      %3905 = vmatpush1.msra.mxu0 %v3880
      %3906 = vmatprep.subr.mxu0 0.0
      %3907 = vmatpush1.msra.mxu0 %v3881
      %3908 = vmatprep.subr.mxu0 0.0
      %3909 = vmatpush1.msra.mxu0 %v3882
      %3910 = vmatprep.subr.mxu0 0.0
      %3911 = vmatpush1.msra.mxu0 %v3883
      %3912 = vmatprep.subr.mxu0 0.0
      %3913 = vmatpush1.msra.mxu0 %v3884
      %3914 = vmatprep.subr.mxu0 0.0
      %3915 = vmatpush1.msra.mxu0 %v3885
      %3916 = vmatprep.subr.mxu0 0.0
      %3917 = vmatpush1.msra.mxu0 %v3886
      %3918 = vmatprep.subr.mxu0 0.0
      %3919 = vmatpush1.msra.mxu0 %v3887
      %3920 = vmatprep.subr.mxu0 0.0
      %3921 = vmatpush1.msra.mxu0 0.0
      %3922 = vmatprep.subr.mxu0 0.0
      %3923 = vmatpush1.msra.mxu0 0.0
      %3924 = vmatprep.subr.mxu0 0.0
      %3925 = vmatpush1.msra.mxu0 0.0
      %3926 = vmatprep.subr.mxu0 0.0
      %3927 = vmatpush1.msra.mxu0 0.0
      %3928 = vmatprep.subr.mxu0 0.0
      %3929 = vmatpush1.msra.mxu0 0.0
      %3930 = vmatprep.subr.mxu0 0.0
      %3931 = vmatpush1.msra.mxu0 0.0
      %3932 = vmatprep.subr.mxu0 0.0
      %3933 = vmatpush1.msra.mxu0 0.0
      %3934 = vmatprep.subr.mxu0 0.0
      %3935 = vmatpush1.msra.mxu0 0.0
      %3936 = vmatprep.subr.mxu0 0.0
      %3937 = vmatpush1.msra.mxu0 0.0
      %3938 = vmatprep.subr.mxu0 0.0
      %3939 = vmatpush1.msra.mxu0 0.0
      %3940 = vmatprep.subr.mxu0 0.0
      %3941 = vmatpush1.msra.mxu0 0.0
      %3942 = vmatprep.subr.mxu0 0.0
      %3943 = vmatpush1.msra.mxu0 0.0
      %3944 = vmatprep.subr.mxu0 0.0
      %3945 = vmatpush1.msra.mxu0 0.0
      %3946 = vmatprep.subr.mxu0 0.0
      %3947 = vmatpush1.msra.mxu0 0.0
      %3948 = vmatprep.subr.mxu0 0.0
      %3949 = vmatpush1.msra.mxu0 0.0
      %3950 = vmatprep.subr.mxu0 0.0
      %3951 = vmatpush1.msra.mxu0 0.0
      %3952 = vmatprep.mubr.f32.mxu0 0.0
      %3953 = vmatmul.mubr.f32.gmra.mrb[0].mxu0 %v3761
      %v3954 = vpop.f32.mrb[0].mxu0
      %v3955 = vadd.f32 0.0, %v3954
      %v3956 = vpop.f32.mrb[0].mxu0
      %3957 = vmatprep.mubr.f32.mxu0 0.0
      %3958 = vmatmul.mubr.f32.gmra.mrb[0].mxu0 %v3763
      %v3959 = vpop.f32.mrb[0].mxu0
      %v3960 = vadd.f32 0.0, %v3959
      %v3961 = vpop.f32.mrb[0].mxu0
      %3962 = vmatprep.mubr.f32.mxu0 0.0
      %3963 = vmatmul.mubr.f32.gmra.mrb[0].mxu0 %v3766
      %v3964 = vpop.f32.mrb[0].mxu0
      %v3965 = vadd.f32 0.0, %v3964
      %v3966 = vpop.f32.mrb[0].mxu0
      %3967 = vmatprep.mubr.f32.mxu0 0.0
      %3968 = vmatmul.mubr.f32.gmra.mrb[0].mxu0 %v3768
      %v3969 = vpop.f32.mrb[0].mxu0
      %v3970 = vadd.f32 0.0, %v3969
      %v3971 = vpop.f32.mrb[0].mxu0
      %3972 = vmatprep.mubr.f32.mxu0 0.0
      %3973 = vmatmul.mubr.f32.gmra.mrb[0].mxu0 %v3771
      %v3974 = vpop.f32.mrb[0].mxu0
      %v3975 = vadd.f32 0.0, %v3974
      %v3976 = vpop.f32.mrb[0].mxu0
      %3977 = vmatprep.mubr.f32.mxu0 0.0
      %3978 = vmatmul.mubr.f32.gmra.mrb[0].mxu0 %v3773
      %v3979 = vpop.f32.mrb[0].mxu0
      %v3980 = vadd.f32 0.0, %v3979
      %v3981 = vpop.f32.mrb[0].mxu0
      %3982 = vmatprep.mubr.f32.mxu0 0.0
      %3983 = vmatmul.mubr.f32.gmra.mrb[0].mxu0 %v3776
      %v3984 = vpop.f32.mrb[0].mxu0
      %v3985 = vadd.f32 0.0, %v3984
      %v3986 = vpop.f32.mrb[0].mxu0
      %3987 = vmatprep.mubr.f32.mxu0 0.0
      %3988 = vmatmul.mubr.f32.gmra.mrb[0].mxu0 %v3778
      %v3989 = vpop.f32.mrb[0].mxu0
      %v3990 = vadd.f32 0.0, %v3989
      %v3991 = vpop.f32.mrb[0].mxu0
      %3992 = vmatprep.mubr.f32.mxu0 0.0
      %3993 = vmatmul.mubr.f32.gmra.mrb[0].mxu0 %v3781
      %v3994 = vpop.f32.mrb[0].mxu0
      %v3995 = vadd.f32 0.0, %v3994
      %v3996 = vpop.f32.mrb[0].mxu0
      %3997 = vmatprep.mubr.f32.mxu0 0.0
      %3998 = vmatmul.mubr.f32.gmra.mrb[0].mxu0 %v3783
      %v3999 = vpop.f32.mrb[0].mxu0
      %v4000 = vadd.f32 0.0, %v3999
      %v4001 = vpop.f32.mrb[0].mxu0
      %4002 = vmatprep.mubr.f32.mxu0 0.0
      %4003 = vmatmul.mubr.f32.gmra.mrb[0].mxu0 %v3786
      %v4004 = vpop.f32.mrb[0].mxu0
      %v4005 = vadd.f32 0.0, %v4004
      %v4006 = vpop.f32.mrb[0].mxu0
      %4007 = vmatprep.mubr.f32.mxu0 0.0
      %4008 = vmatmul.mubr.f32.gmra.mrb[0].mxu0 %v3788
      %v4009 = vpop.f32.mrb[0].mxu0
      %v4010 = vadd.f32 0.0, %v4009
      %v4011 = vpop.f32.mrb[0].mxu0
      %4012 = vmatprep.mubr.f32.mxu0 0.0
      %4013 = vmatmul.mubr.f32.gmra.mrb[0].mxu0 %v3791
      %v4014 = vpop.f32.mrb[0].mxu0
      %v4015 = vadd.f32 0.0, %v4014
      %v4016 = vpop.f32.mrb[0].mxu0
      %4017 = vmatprep.mubr.f32.mxu0 0.0
      %4018 = vmatmul.mubr.f32.gmra.mrb[0].mxu0 %v3793
      %v4019 = vpop.f32.mrb[0].mxu0
      %v4020 = vadd.f32 0.0, %v4019
      %v4021 = vpop.f32.mrb[0].mxu0
      %4022 = vmatprep.mubr.f32.mxu0 0.0
      %4023 = vmatmul.mubr.f32.gmra.mrb[0].mxu0 %v3796
      %v4024 = vpop.f32.mrb[0].mxu0
      %v4025 = vadd.f32 0.0, %v4024
      %v4026 = vpop.f32.mrb[0].mxu0
      %4027 = vmatprep.mubr.f32.mxu0 0.0
      %4028 = vmatmul.mubr.f32.gmra.mrb[0].mxu0 %v3798
      %v4029 = vpop.f32.mrb[0].mxu0
      %v4030 = vadd.f32 0.0, %v4029
      %v4031 = vpop.f32.mrb[0].mxu0
      %4032 = vmatprep.mubr.f32.mxu0 0.0
      %4033 = vmatmul.mubr.f32.gmra.mrb[0].mxu0 %v3801
      %v4034 = vpop.f32.mrb[0].mxu0
      %v4035 = vadd.f32 0.0, %v4034
      %v4036 = vpop.f32.mrb[0].mxu0
      %4037 = vmatprep.mubr.f32.mxu0 0.0
      %4038 = vmatmul.mubr.f32.gmra.mrb[0].mxu0 %v3803
      %v4039 = vpop.f32.mrb[0].mxu0
      %v4040 = vadd.f32 0.0, %v4039
      %v4041 = vpop.f32.mrb[0].mxu0
      %4042 = vmatprep.mubr.f32.mxu0 0.0
      %4043 = vmatmul.mubr.f32.gmra.mrb[0].mxu0 %v3806
      %v4044 = vpop.f32.mrb[0].mxu0
      %v4045 = vadd.f32 0.0, %v4044
      %v4046 = vpop.f32.mrb[0].mxu0
      %4047 = vmatprep.mubr.f32.mxu0 0.0
      %4048 = vmatmul.mubr.f32.gmra.mrb[0].mxu0 %v3808
      %v4049 = vpop.f32.mrb[0].mxu0
      %v4050 = vadd.f32 0.0, %v4049
      %v4051 = vpop.f32.mrb[0].mxu0
      %4052 = vmatprep.mubr.f32.mxu0 0.0
      %4053 = vmatmul.mubr.f32.gmra.mrb[0].mxu0 %v3811
      %v4054 = vpop.f32.mrb[0].mxu0
      %v4055 = vadd.f32 0.0, %v4054
      %v4056 = vpop.f32.mrb[0].mxu0
      %4057 = vmatprep.mubr.f32.mxu0 0.0
      %4058 = vmatmul.mubr.f32.gmra.mrb[0].mxu0 %v3813
      %v4059 = vpop.f32.mrb[0].mxu0
      %v4060 = vadd.f32 0.0, %v4059
      %v4061 = vpop.f32.mrb[0].mxu0
      %4062 = vmatprep.mubr.f32.mxu0 0.0
      %4063 = vmatmul.mubr.f32.gmra.mrb[0].mxu0 %v3816
      %v4064 = vpop.f32.mrb[0].mxu0
      %v4065 = vadd.f32 0.0, %v4064
      %v4066 = vpop.f32.mrb[0].mxu0
      %4067 = vmatprep.mubr.f32.mxu0 0.0
      %4068 = vmatmul.mubr.f32.gmra.mrb[0].mxu0 %v3818
      %v4069 = vpop.f32.mrb[0].mxu0
      %v4070 = vadd.f32 0.0, %v4069
      %v4071 = vpop.f32.mrb[0].mxu0
      %4072 = vmatprep.mubr.f32.mxu0 0.0
      %4073 = vmatmul.mubr.f32.gmra.mrb[0].mxu0 %v3821
      %v4074 = vpop.f32.mrb[0].mxu0
      %v4075 = vadd.f32 0.0, %v4074
      %v4076 = vpop.f32.mrb[0].mxu0
      %4077 = vmatprep.mubr.f32.mxu0 0.0
      %4078 = vmatmul.mubr.f32.gmra.mrb[0].mxu0 %v3823
      %v4079 = vpop.f32.mrb[0].mxu0
      %v4080 = vadd.f32 0.0, %v4079
      %v4081 = vpop.f32.mrb[0].mxu0
      %4082 = vmatprep.mubr.f32.mxu0 0.0
      %4083 = vmatmul.mubr.f32.gmra.mrb[0].mxu0 %v3826
      %v4084 = vpop.f32.mrb[0].mxu0
      %v4085 = vadd.f32 0.0, %v4084
      %v4086 = vpop.f32.mrb[0].mxu0
      %4087 = vmatprep.mubr.f32.mxu0 0.0
      %4088 = vmatmul.mubr.f32.gmra.mrb[0].mxu0 %v3828
      %v4089 = vpop.f32.mrb[0].mxu0
      %v4090 = vadd.f32 0.0, %v4089
      %v4091 = vpop.f32.mrb[0].mxu0
      %4092 = vmatprep.mubr.f32.mxu0 0.0
      %4093 = vmatmul.mubr.f32.gmra.mrb[0].mxu0 %v3831
      %v4094 = vpop.f32.mrb[0].mxu0
      %v4095 = vadd.f32 0.0, %v4094
      %v4096 = vpop.f32.mrb[0].mxu0
      %4097 = vmatprep.mubr.f32.mxu0 0.0
      %4098 = vmatmul.mubr.f32.gmra.mrb[0].mxu0 %v3833
      %v4099 = vpop.f32.mrb[0].mxu0
      %v4100 = vadd.f32 0.0, %v4099
      %v4101 = vpop.f32.mrb[0].mxu0
      %4102 = vmatprep.mubr.f32.mxu0 0.0
      %4103 = vmatmul.mubr.f32.gmra.mrb[0].mxu0 %v3836
      %v4104 = vpop.f32.mrb[0].mxu0
      %v4105 = vadd.f32 0.0, %v4104
      %v4106 = vpop.f32.mrb[0].mxu0
      %4107 = vmatprep.mubr.f32.mxu0 0.0
      %4108 = vmatmul.mubr.f32.gmra.mrb[0].mxu0 %v3838
      %v4109 = vpop.f32.mrb[0].mxu0
      %v4110 = vadd.f32 0.0, %v4109
      %v4111 = vpop.f32.mrb[0].mxu0
      %4112 = vdwg.mxu0
      %v4113 = vld [vmem:[#allocation2] sm:$0xff]
      %v4114 = vld [vmem:[#allocation2 + $0x8] sm:$0xff]
      %v4115 = vld [vmem:[#allocation2 + $0x10] sm:$0xff]
      %v4116 = vld [vmem:[#allocation2 + $0x18] sm:$0xff]
      %v4117 = vld [vmem:[#allocation2 + $0x20] sm:$0xff]
      %v4118 = vld [vmem:[#allocation2 + $0x28] sm:$0xff]
      %v4119 = vld [vmem:[#allocation2 + $0x30] sm:$0xff]
      %v4120 = vld [vmem:[#allocation2 + $0x38] sm:$0xff]
      %v4121 = vld [vmem:[#allocation2 + $0x40] sm:$0xff]
      %v4122 = vld [vmem:[#allocation2 + $0x48] sm:$0xff]
      %v4123 = vld [vmem:[#allocation2 + $0x50] sm:$0xff]
      %v4124 = vld [vmem:[#allocation2 + $0x58] sm:$0xff]
      %v4125 = vld [vmem:[#allocation2 + $0x60] sm:$0xff]
      %v4126 = vld [vmem:[#allocation2 + $0x68] sm:$0xff]
      %v4127 = vld [vmem:[#allocation2 + $0x70] sm:$0xff]
      %v4128 = vld [vmem:[#allocation2 + $0x78] sm:$0xff]
      %v4129 = vld [vmem:[#allocation2 + $0x80] sm:$0xff]
      %v4130 = vld [vmem:[#allocation2 + $0x88] sm:$0xff]
      %v4131 = vld [vmem:[#allocation2 + $0x90] sm:$0xff]
      %v4132 = vld [vmem:[#allocation2 + $0x98] sm:$0xff]
      %v4133 = vld [vmem:[#allocation2 + $0xa0] sm:$0xff]
      %v4134 = vld [vmem:[#allocation2 + $0xa8] sm:$0xff]
      %v4135 = vld [vmem:[#allocation2 + $0xb0] sm:$0xff]
      %v4136 = vld [vmem:[#allocation2 + $0xb8] sm:$0xff]
      %v4137 = vld [vmem:[#allocation2 + $0xc0] sm:$0xff]
      %v4138 = vld [vmem:[#allocation2 + $0xc8] sm:$0xff]
      %v4139 = vld [vmem:[#allocation2 + $0xd0] sm:$0xff]
      %v4140 = vld [vmem:[#allocation2 + $0xd8] sm:$0xff]
      %v4141 = vld [vmem:[#allocation2 + $0xe0] sm:$0xff]
      %v4142 = vld [vmem:[#allocation2 + $0xe8] sm:$0xff]
      %v4143 = vld [vmem:[#allocation2 + $0xf0] sm:$0xff]
      %v4144 = vld [vmem:[#allocation2 + $0xf8] sm:$0xff]
      %v4145 = vadd.f32 %v4113, %v3955
      %v4146 = vadd.f32 %v4114, %v3960
      %v4147 = vadd.f32 %v4115, %v3965
      %v4148 = vadd.f32 %v4116, %v3970
      %v4149 = vadd.f32 %v4117, %v3975
      %v4150 = vadd.f32 %v4118, %v3980
      %v4151 = vadd.f32 %v4119, %v3985
      %v4152 = vadd.f32 %v4120, %v3990
      %v4153 = vadd.f32 %v4121, %v3995
      %v4154 = vadd.f32 %v4122, %v4000
      %v4155 = vadd.f32 %v4123, %v4005
      %v4156 = vadd.f32 %v4124, %v4010
      %v4157 = vadd.f32 %v4125, %v4015
      %v4158 = vadd.f32 %v4126, %v4020
      %v4159 = vadd.f32 %v4127, %v4025
      %v4160 = vadd.f32 %v4128, %v4030
      %v4161 = vadd.f32 %v4129, %v4035
      %v4162 = vadd.f32 %v4130, %v4040
      %v4163 = vadd.f32 %v4131, %v4045
      %v4164 = vadd.f32 %v4132, %v4050
      %v4165 = vadd.f32 %v4133, %v4055
      %v4166 = vadd.f32 %v4134, %v4060
      %v4167 = vadd.f32 %v4135, %v4065
      %v4168 = vadd.f32 %v4136, %v4070
      %v4169 = vadd.f32 %v4137, %v4075
      %v4170 = vadd.f32 %v4138, %v4080
      %v4171 = vadd.f32 %v4139, %v4085
      %v4172 = vadd.f32 %v4140, %v4090
      %v4173 = vadd.f32 %v4141, %v4095
      %v4174 = vadd.f32 %v4142, %v4100
      %v4175 = vadd.f32 %v4143, %v4105
      %v4176 = vadd.f32 %v4144, %v4110
      %4177 = vst [vmem:[#allocation2] sm:$0xff] %v4145
      %4178 = vst [vmem:[#allocation2 + $0x8] sm:$0xff] %v4146
      %4179 = vst [vmem:[#allocation2 + $0x10] sm:$0xff] %v4147
      %4180 = vst [vmem:[#allocation2 + $0x18] sm:$0xff] %v4148
      %4181 = vst [vmem:[#allocation2 + $0x20] sm:$0xff] %v4149
      %4182 = vst [vmem:[#allocation2 + $0x28] sm:$0xff] %v4150
      %4183 = vst [vmem:[#allocation2 + $0x30] sm:$0xff] %v4151
      %4184 = vst [vmem:[#allocation2 + $0x38] sm:$0xff] %v4152
      %4185 = vst [vmem:[#allocation2 + $0x40] sm:$0xff] %v4153
      %4186 = vst [vmem:[#allocation2 + $0x48] sm:$0xff] %v4154
      %4187 = vst [vmem:[#allocation2 + $0x50] sm:$0xff] %v4155
      %4188 = vst [vmem:[#allocation2 + $0x58] sm:$0xff] %v4156
      %4189 = vst [vmem:[#allocation2 + $0x60] sm:$0xff] %v4157
      %4190 = vst [vmem:[#allocation2 + $0x68] sm:$0xff] %v4158
      %4191 = vst [vmem:[#allocation2 + $0x70] sm:$0xff] %v4159
      %4192 = vst [vmem:[#allocation2 + $0x78] sm:$0xff] %v4160
      %4193 = vst [vmem:[#allocation2 + $0x80] sm:$0xff] %v4161
      %4194 = vst [vmem:[#allocation2 + $0x88] sm:$0xff] %v4162
      %4195 = vst [vmem:[#allocation2 + $0x90] sm:$0xff] %v4163
      %4196 = vst [vmem:[#allocation2 + $0x98] sm:$0xff] %v4164
      %4197 = vst [vmem:[#allocation2 + $0xa0] sm:$0xff] %v4165
      %4198 = vst [vmem:[#allocation2 + $0xa8] sm:$0xff] %v4166
      %4199 = vst [vmem:[#allocation2 + $0xb0] sm:$0xff] %v4167
      %4200 = vst [vmem:[#allocation2 + $0xb8] sm:$0xff] %v4168
      %4201 = vst [vmem:[#allocation2 + $0xc0] sm:$0xff] %v4169
      %4202 = vst [vmem:[#allocation2 + $0xc8] sm:$0xff] %v4170
      %4203 = vst [vmem:[#allocation2 + $0xd0] sm:$0xff] %v4171
      %4204 = vst [vmem:[#allocation2 + $0xd8] sm:$0xff] %v4172
      %4205 = vst [vmem:[#allocation2 + $0xe0] sm:$0xff] %v4173
      %4206 = vst [vmem:[#allocation2 + $0xe8] sm:$0xff] %v4174
      %4207 = vst [vmem:[#allocation2 + $0xf0] sm:$0xff] %v4175
      %4208 = vst [vmem:[#allocation2 + $0xf8] sm:$0xff] %v4176
      %v4209 = vld [vmem:[#allocation2] sm:$0xff]
      %v4210 = vld [vmem:[#allocation2 + $0x8] sm:$0xff]
      %v4211 = vld [vmem:[#allocation2 + $0x10] sm:$0xff]
      %v4212 = vld [vmem:[#allocation2 + $0x18] sm:$0xff]
      %v4213 = vld [vmem:[#allocation2 + $0x20] sm:$0xff]
      %v4214 = vld [vmem:[#allocation2 + $0x28] sm:$0xff]
      %v4215 = vld [vmem:[#allocation2 + $0x30] sm:$0xff]
      %v4216 = vld [vmem:[#allocation2 + $0x38] sm:$0xff]
      %v4217 = vld [vmem:[#allocation2 + $0x40] sm:$0xff]
      %v4218 = vld [vmem:[#allocation2 + $0x48] sm:$0xff]
      %v4219 = vld [vmem:[#allocation2 + $0x50] sm:$0xff]
      %v4220 = vld [vmem:[#allocation2 + $0x58] sm:$0xff]
      %v4221 = vld [vmem:[#allocation2 + $0x60] sm:$0xff]
      %v4222 = vld [vmem:[#allocation2 + $0x68] sm:$0xff]
      %v4223 = vld [vmem:[#allocation2 + $0x70] sm:$0xff]
      %v4224 = vld [vmem:[#allocation2 + $0x78] sm:$0xff]
      %v4225 = vld [vmem:[#allocation2 + $0x80] sm:$0xff]
      %v4226 = vld [vmem:[#allocation2 + $0x88] sm:$0xff]
      %v4227 = vld [vmem:[#allocation2 + $0x90] sm:$0xff]
      %v4228 = vld [vmem:[#allocation2 + $0x98] sm:$0xff]
      %v4229 = vld [vmem:[#allocation2 + $0xa0] sm:$0xff]
      %v4230 = vld [vmem:[#allocation2 + $0xa8] sm:$0xff]
      %v4231 = vld [vmem:[#allocation2 + $0xb0] sm:$0xff]
      %v4232 = vld [vmem:[#allocation2 + $0xb8] sm:$0xff]
      %v4233 = vld [vmem:[#allocation2 + $0xc0] sm:$0xff]
      %v4234 = vld [vmem:[#allocation2 + $0xc8] sm:$0xff]
      %v4235 = vld [vmem:[#allocation2 + $0xd0] sm:$0xff]
      %v4236 = vld [vmem:[#allocation2 + $0xd8] sm:$0xff]
      %v4237 = vld [vmem:[#allocation2 + $0xe0] sm:$0xff]
      %v4238 = vld [vmem:[#allocation2 + $0xe8] sm:$0xff]
      %v4239 = vld [vmem:[#allocation2 + $0xf0] sm:$0xff]
      %v4240 = vld [vmem:[#allocation2 + $0xf8] sm:$0xff]
      %4241 = vst [vmem:[%s255] sm:$0xff] %v4209
      %4242 = vst [vmem:[%s255 + $0x8] sm:$0xff] %v4210
      %4243 = vst [vmem:[%s255 + $0x10] sm:$0xff] %v4211
      %4244 = vst [vmem:[%s255 + $0x18] sm:$0xff] %v4212
      %4245 = vst [vmem:[%s255 + $0x20] sm:$0xff] %v4213
      %4246 = vst [vmem:[%s255 + $0x28] sm:$0xff] %v4214
      %4247 = vst [vmem:[%s255 + $0x30] sm:$0xff] %v4215
      %4248 = vst [vmem:[%s255 + $0x38] sm:$0xff] %v4216
      %4249 = vst [vmem:[%s255 + $0x40] sm:$0xff] %v4217
      %4250 = vst [vmem:[%s255 + $0x48] sm:$0xff] %v4218
      %4251 = vst [vmem:[%s255 + $0x50] sm:$0xff] %v4219
      %4252 = vst [vmem:[%s255 + $0x58] sm:$0xff] %v4220
      %4253 = vst [vmem:[%s255 + $0x60] sm:$0xff] %v4221
      %4254 = vst [vmem:[%s255 + $0x68] sm:$0xff] %v4222
      %4255 = vst [vmem:[%s255 + $0x70] sm:$0xff] %v4223
      %4256 = vst [vmem:[%s255 + $0x78] sm:$0xff] %v4224
      %4257 = vst [vmem:[%s255 + $0x80] sm:$0xff] %v4225
      %4258 = vst [vmem:[%s255 + $0x88] sm:$0xff] %v4226
      %4259 = vst [vmem:[%s255 + $0x90] sm:$0xff] %v4227
      %4260 = vst [vmem:[%s255 + $0x98] sm:$0xff] %v4228
      %4261 = vst [vmem:[%s255 + $0xa0] sm:$0xff] %v4229
      %4262 = vst [vmem:[%s255 + $0xa8] sm:$0xff] %v4230
      %4263 = vst [vmem:[%s255 + $0xb0] sm:$0xff] %v4231
      %4264 = vst [vmem:[%s255 + $0xb8] sm:$0xff] %v4232
      %4265 = vst [vmem:[%s255 + $0xc0] sm:$0xff] %v4233
      %4266 = vst [vmem:[%s255 + $0xc8] sm:$0xff] %v4234
      %4267 = vst [vmem:[%s255 + $0xd0] sm:$0xff] %v4235
      %4268 = vst [vmem:[%s255 + $0xd8] sm:$0xff] %v4236
      %4269 = vst [vmem:[%s255 + $0xe0] sm:$0xff] %v4237
      %4270 = vst [vmem:[%s255 + $0xe8] sm:$0xff] %v4238
      %4271 = vst [vmem:[%s255 + $0xf0] sm:$0xff] %v4239
      %4272 = vst [vmem:[%s255 + $0xf8] sm:$0xff] %v4240
      %v4273 = vadd.f32 %v4209, %v4210
      %v4274 = vadd.f32 %v4273, %v4211
      %v4275 = vadd.f32 %v4274, %v4212
      %v4276 = vadd.f32 %v4275, %v4213
      %v4277 = vadd.f32 %v4276, %v4214
      %v4278 = vadd.f32 %v4277, %v4215
      %v4279 = vadd.f32 %v4278, %v4216
      %v4280 = vadd.f32 %v4279, %v4217
      %v4281 = vadd.f32 %v4280, %v4218
      %v4282 = vadd.f32 %v4281, %v4219
      %v4283 = vadd.f32 %v4282, %v4220
      %v4284 = vadd.f32 %v4283, %v4221
      %v4285 = vadd.f32 %v4284, %v4222
      %v4286 = vadd.f32 %v4285, %v4223
      %v4287 = vadd.f32 %v4286, %v4224
      %v4288 = vadd.f32 %v4287, %v4225
      %v4289 = vadd.f32 %v4288, %v4226
      %v4290 = vadd.f32 %v4289, %v4227
      %v4291 = vadd.f32 %v4290, %v4228
      %v4292 = vadd.f32 %v4291, %v4229
      %v4293 = vadd.f32 %v4292, %v4230
      %v4294 = vadd.f32 %v4293, %v4231
      %v4295 = vadd.f32 %v4294, %v4232
      %v4296 = vadd.f32 %v4295, %v4233
      %v4297 = vadd.f32 %v4296, %v4234
      %v4298 = vadd.f32 %v4297, %v4235
      %v4299 = vadd.f32 %v4298, %v4236
      %v4300 = vadd.f32 %v4299, %v4237
      %v4301 = vadd.f32 %v4300, %v4238
      %v4302 = vadd.f32 %v4301, %v4239
      %v4303 = vadd.f32 %v4302, %v4240
      %v4304 = vrot.slane %v4303, 4
      %v4305 = vadd.f32 %v4303, %v4304
      %v4306 = vrot.slane %v4305, 2
      %v4307 = vadd.f32 %v4305, %v4306
      %v4308 = vrot.slane %v4307, 1
      %v4309 = vadd.f32 %v4307, %v4308
      %4310 = vst [vmem:[%s261] sm:$0x1] %v4309
      %v4311 = vmul.f32 %v4209, %v4209
      %v4312 = vmul.f32 %v4210, %v4210
      %v4313 = vmul.f32 %v4211, %v4211
      %v4314 = vmul.f32 %v4212, %v4212
      %v4315 = vmul.f32 %v4213, %v4213
      %v4316 = vmul.f32 %v4214, %v4214
      %v4317 = vmul.f32 %v4215, %v4215
      %v4318 = vmul.f32 %v4216, %v4216
      %v4319 = vmul.f32 %v4217, %v4217
      %v4320 = vmul.f32 %v4218, %v4218
      %v4321 = vmul.f32 %v4219, %v4219
      %v4322 = vmul.f32 %v4220, %v4220
      %v4323 = vmul.f32 %v4221, %v4221
      %v4324 = vmul.f32 %v4222, %v4222
      %v4325 = vmul.f32 %v4223, %v4223
      %v4326 = vmul.f32 %v4224, %v4224
      %v4327 = vmul.f32 %v4225, %v4225
      %v4328 = vmul.f32 %v4226, %v4226
      %v4329 = vmul.f32 %v4227, %v4227
      %v4330 = vmul.f32 %v4228, %v4228
      %v4331 = vmul.f32 %v4229, %v4229
      %v4332 = vmul.f32 %v4230, %v4230
      %v4333 = vmul.f32 %v4231, %v4231
      %v4334 = vmul.f32 %v4232, %v4232
      %v4335 = vmul.f32 %v4233, %v4233
      %v4336 = vmul.f32 %v4234, %v4234
      %v4337 = vmul.f32 %v4235, %v4235
      %v4338 = vmul.f32 %v4236, %v4236
      %v4339 = vmul.f32 %v4237, %v4237
      %v4340 = vmul.f32 %v4238, %v4238
      %v4341 = vmul.f32 %v4239, %v4239
      %v4342 = vmul.f32 %v4240, %v4240
      %v4343 = vadd.f32 %v4311, %v4312
      %v4344 = vadd.f32 %v4343, %v4313
      %v4345 = vadd.f32 %v4344, %v4314
      %v4346 = vadd.f32 %v4345, %v4315
      %v4347 = vadd.f32 %v4346, %v4316
      %v4348 = vadd.f32 %v4347, %v4317
      %v4349 = vadd.f32 %v4348, %v4318
      %v4350 = vadd.f32 %v4349, %v4319
      %v4351 = vadd.f32 %v4350, %v4320
      %v4352 = vadd.f32 %v4351, %v4321
      %v4353 = vadd.f32 %v4352, %v4322
      %v4354 = vadd.f32 %v4353, %v4323
      %v4355 = vadd.f32 %v4354, %v4324
      %v4356 = vadd.f32 %v4355, %v4325
      %v4357 = vadd.f32 %v4356, %v4326
      %v4358 = vadd.f32 %v4357, %v4327
      %v4359 = vadd.f32 %v4358, %v4328
      %v4360 = vadd.f32 %v4359, %v4329
      %v4361 = vadd.f32 %v4360, %v4330
      %v4362 = vadd.f32 %v4361, %v4331
      %v4363 = vadd.f32 %v4362, %v4332
      %v4364 = vadd.f32 %v4363, %v4333
      %v4365 = vadd.f32 %v4364, %v4334
      %v4366 = vadd.f32 %v4365, %v4335
      %v4367 = vadd.f32 %v4366, %v4336
      %v4368 = vadd.f32 %v4367, %v4337
      %v4369 = vadd.f32 %v4368, %v4338
      %v4370 = vadd.f32 %v4369, %v4339
      %v4371 = vadd.f32 %v4370, %v4340
      %v4372 = vadd.f32 %v4371, %v4341
      %v4373 = vadd.f32 %v4372, %v4342
      %v4374 = vrot.slane %v4373, 4
      %v4375 = vadd.f32 %v4373, %v4374
      %v4376 = vrot.slane %v4375, 2
      %v4377 = vadd.f32 %v4375, %v4376
      %v4378 = vrot.slane %v4377, 1
      %v4379 = vadd.f32 %v4377, %v4378
      %4380 = vst [vmem:[%s267] sm:$0x1] %v4379
      %p4381 = scmp.lt.s32.totalorder %s20, 1
      %s4382 = scalar_select %p4381, %s20, 1
      %p4383 = scmp.lt.s32.totalorder %s21, 0
      %s4384 = scalar_select %p4383, %s21, 0
      %s4385 = smul.addr %s4382, 32
      %s4386 = sadd.s32 %s4384, %s4385
      %s4387 = smul.addr %s4386, 8
      %s4388 = scalar_lea.vmem %s2, %s4387
      %p4389 = scmp.lt.s32.totalorder %s20, 1
      %s4390 = scalar_select %p4389, %s20, 1
      %p4391 = scmp.lt.s32.totalorder %s21, 0
      %s4392 = scalar_select %p4391, %s21, 0
      %s4393 = sadd.s32 %s4392, %s4390
      %s4394 = scalar_lea.vmem %s3, %s4393
      %p4395 = scmp.lt.s32.totalorder %s20, 1
      %s4396 = scalar_select %p4395, %s20, 1
      %p4397 = scmp.lt.s32.totalorder %s21, 0
      %s4398 = scalar_select %p4397, %s21, 0
      %s4399 = sadd.s32 %s4398, %s4396
      %s4400 = scalar_lea.vmem %s4, %s4399
      // Predicated region
      $region29: #{conv_batch_norm.2} parent=27 // pred_check
        %p4401 = pneg %p100
      $region30: #{conv_batch_norm.2} parent=27 // pred_check_branch
        %4403 = sbr.rel (%p4401) target = $region32
      $region31: #{conv_batch_norm.2} parent=27 // pred_region
        _
      $region32: #{conv_batch_norm.2} parent=27 // pred_fallthru
        _
      // Predicated region
      $region33: #{conv_batch_norm.2} parent=27 // pred_check
        %p4404 = pneg %p128
      $region34: #{conv_batch_norm.2} parent=27 // pred_check_branch
        %4406 = sbr.rel (%p4404) target = $region36
      $region35: #{conv_batch_norm.2} parent=27 // pred_region
        _
      $region36: #{conv_batch_norm.2} parent=27 // pred_fallthru
        _
      // Predicated region
      $region37: #{conv_batch_norm.2} parent=27 // pred_check
        %p4407 = pneg %p156
      $region38: #{conv_batch_norm.2} parent=27 // pred_check_branch
        %4409 = sbr.rel (%p4407) target = $region40
      $region39: #{conv_batch_norm.2} parent=27 // pred_region
        _
      $region40: #{conv_batch_norm.2} parent=27 // pred_fallthru
        _
    $region28: #{conv_batch_norm.2} parent=5 // pred_fallthru
      _
    %p4410 = scmp.le.s32.totalorder 2, %s11
    // Predicated region
    $region41: #{conv_batch_norm.2} parent=5 // pred_check
      %p4411 = pneg %p4410
    $region42: #{conv_batch_norm.2} parent=5 // pred_check_branch
      %4413 = sbr.rel (%p4411) target = $region44
    $region43: #{conv_batch_norm.2} parent=5 // pred_region
      %s4414 = ssub.s32 %s11, 2
      // Predicated region
      $region45: #{conv_batch_norm.2} parent=43 // pred_check
        %p4415 = pneg %p106
      $region46: #{conv_batch_norm.2} parent=43 // pred_check_branch
        %4417 = sbr.rel (%p4415) target = $region48
      $region47: #{conv_batch_norm.2} parent=43 // pred_region
        %p4418 = scmp.lt.s32.totalorder %s22, 1
        %s4419 = scalar_select %p4418, %s22, 1
        %p4420 = scmp.lt.s32.totalorder %s23, 0
        %s4421 = scalar_select %p4420, %s23, 0
        %s4422 = smul.addr %s4419, 32
        %s4423 = sadd.s32 %s4421, %s4422
        %s4424 = smul.addr %s4423, 8
        %s4425 = scalar_lea.vmem %s2, %s4424
      $region48: #{conv_batch_norm.2} parent=43 // pred_fallthru
        _
      // Predicated region
      $region49: #{conv_batch_norm.2} parent=43 // pred_check
        %p4426 = pneg %p134
      $region50: #{conv_batch_norm.2} parent=43 // pred_check_branch
        %4428 = sbr.rel (%p4426) target = $region52
      $region51: #{conv_batch_norm.2} parent=43 // pred_region
        %p4429 = scmp.lt.s32.totalorder %s22, 1
        %s4430 = scalar_select %p4429, %s22, 1
        %p4431 = scmp.lt.s32.totalorder %s23, 0
        %s4432 = scalar_select %p4431, %s23, 0
        %s4433 = sadd.s32 %s4432, %s4430
        %s4434 = scalar_lea.vmem %s3, %s4433
      $region52: #{conv_batch_norm.2} parent=43 // pred_fallthru
        _
      // Predicated region
      $region53: #{conv_batch_norm.2} parent=43 // pred_check
        %p4435 = pneg %p162
      $region54: #{conv_batch_norm.2} parent=43 // pred_check_branch
        %4437 = sbr.rel (%p4435) target = $region56
      $region55: #{conv_batch_norm.2} parent=43 // pred_region
        %p4438 = scmp.lt.s32.totalorder %s22, 1
        %s4439 = scalar_select %p4438, %s22, 1
        %p4440 = scmp.lt.s32.totalorder %s23, 0
        %s4441 = scalar_select %p4440, %s23, 0
        %s4442 = sadd.s32 %s4441, %s4439
        %s4443 = scalar_lea.vmem %s4, %s4442
      $region56: #{conv_batch_norm.2} parent=43 // pred_fallthru
        _
    $region44: #{conv_batch_norm.2} parent=5 // pred_fallthru
      _
  $region6: #{conv_batch_norm.2} parent=0 // loop_footer
    %s15 = sadd.s32 1, %s11
  $region7: #{conv_batch_norm.2} parent=0 // loop_footer_branch
    %10 = sbr.rel target = $region3
  $region8: #{conv_batch_norm.2} parent=0 // loop_exit
    _

</llo_original>
